<compile_context>
chip_gen: v7x
topology: tpu7x:2x2x1
jax: 0.10.0
libtpu: 0.0.40
codegen_flags: <defaults>
</compile_context>

<pallas_src>
import functools

import jax
import jax.numpy as jnp
from jax import lax
from jax.experimental import pallas as pl
from jax.experimental.pallas import tpu as pltpu

EPS = 1e-5
LANE = 128


def _round_up(c, m=LANE):
    return ((c + m - 1) // m) * m


def _conv3x3_kernel(*refs, inv_count, pre_bn):
    """One grid step = one batch image.

    Optionally applies the previous layer's BatchNorm (scale/shift derived
    in-kernel from per-tile sum/sumsq partials) + ReLU to the input, then does
    a 3x3 'SAME' (zero halo) bias-free convolution as 9 bf16 MXU matmuls with
    f32 accumulation, and emits the raw conv tile plus this tile's per-channel
    (sum, sumsq) partials for the *next* BatchNorm.
    """
    if pre_bn:
        x_ref, w_ref, stats_ref, g_ref, b_ref, y_ref, so_ref, xpad_ref = refs
    else:
        x_ref, w_ref, y_ref, so_ref, xpad_ref = refs

    _, H, W, Cin = x_ref.shape
    Cout = y_ref.shape[3]

    xv = x_ref[0].astype(jnp.float32)                        # (H, W, Cin)
    if pre_bn:
        tot = jnp.sum(stats_ref[...], axis=0)                # (2, Cin)
        mean = tot[0:1] * inv_count                          # (1, Cin)
        var = tot[1:2] * inv_count - mean * mean             # E[x^2] - mean^2
        scale = g_ref[...] * lax.rsqrt(var + EPS)            # (1, Cin)
        shift = b_ref[...] - mean * scale
        xv = jnp.maximum(xv * scale + shift, 0.0)            # fused BN + ReLU

    # Per-tile zero halo: write the interior once, zero only the 1-px ring.
    xpad_ref[1:H + 1, 1:W + 1, :] = xv
    zrow = jnp.zeros((1, W + 2, Cin), jnp.float32)
    xpad_ref[0:1, :, :] = zrow
    xpad_ref[H + 1:H + 2, :, :] = zrow
    zcol = jnp.zeros((H, 1, Cin), jnp.float32)
    xpad_ref[1:H + 1, 0:1, :] = zcol
    xpad_ref[1:H + 1, W + 1:W + 2, :] = zcol

    # 3x3 conv = 9 shifted (H*W, Cin) x (Cin, Cout) matmuls, bf16 operands,
    # f32 accumulation on the MXU.
    acc = jnp.zeros((H * W, Cout), jnp.float32)
    for dy in range(3):
        for dx in range(3):
            patch = xpad_ref[dy:dy + H, dx:dx + W, :].reshape(H * W, Cin)
            acc = acc + jnp.dot(patch.astype(jnp.bfloat16), w_ref[dy, dx],
                                preferred_element_type=jnp.float32)

    y_ref[0] = acc.reshape(H, W, Cout).astype(y_ref.dtype)
    so_ref[0, 0:1, :] = jnp.sum(acc, axis=0, keepdims=True)          # sum
    so_ref[0, 1:2, :] = jnp.sum(acc * acc, axis=0, keepdims=True)    # sumsq


def _bn_relu_kernel(x_ref, stats_ref, g_ref, b_ref, o_ref, *, inv_count):
    """Final BatchNorm + ReLU: reduce the per-tile partials, fused scale/shift."""
    tot = jnp.sum(stats_ref[...], axis=0)                    # (2, C)
    mean = tot[0:1] * inv_count
    var = tot[1:2] * inv_count - mean * mean
    scale = g_ref[...] * lax.rsqrt(var + EPS)
    shift = b_ref[...] - mean * scale
    o_ref[0] = jnp.maximum(x_ref[0].astype(jnp.float32) * scale + shift, 0.0)


def double_conv_pallas(x_nchw, params):
    """x_nchw: (N, Cin, H, W) float32 -> (N, Cout, H, W) float32."""
    w1, b1, g1, be1, w2, b2, g2, be2 = params
    del b1, b2   # conv biases are exactly cancelled by training-mode BatchNorm

    N, Cin, H, W = x_nchw.shape
    Cout = w1.shape[-1]
    Ci = _round_up(Cin)
    Co = _round_up(Cout)
    inv_count = 1.0 / float(N * H * W)

    # Lane-dense, channels-last layout; bf16 MXU operands / activations.
    x = jnp.transpose(x_nchw, (0, 2, 3, 1)).astype(jnp.bfloat16)      # NHWC
    x = jnp.pad(x, ((0, 0), (0, 0), (0, 0), (0, Ci - Cin)))
    w1p = jnp.pad(w1, ((0, 0), (0, 0), (0, Ci - Cin), (0, Co - Cout))
                  ).astype(jnp.bfloat16)
    w2p = jnp.pad(w2, ((0, 0), (0, 0), (0, Co - Cout), (0, Co - Cout))
                  ).astype(jnp.bfloat16)
    # gamma/beta padded with ZEROS -> padded channels stay exactly zero.
    g1p = jnp.pad(g1, (0, Co - Cout)).reshape(1, Co).astype(jnp.float32)
    be1p = jnp.pad(be1, (0, Co - Cout)).reshape(1, Co).astype(jnp.float32)
    g2p = jnp.pad(g2, (0, Co - Cout)).reshape(1, Co).astype(jnp.float32)
    be2p = jnp.pad(be2, (0, Co - Cout)).reshape(1, Co).astype(jnp.float32)

    cparams = pltpu.CompilerParams(
        dimension_semantics=("parallel",),       # shard batch over TCs (v7x)
        vmem_limit_bytes=32 * 1024 * 1024,       # tiles are tiny; safe on v5e/v6e/v7x
    )

    def act_spec(c):
        return pl.BlockSpec((1, H, W, c), lambda n: (n, 0, 0, 0))

    def w_spec(ci, co):
        return pl.BlockSpec((3, 3, ci, co), lambda n: (0, 0, 0, 0))

    def stats_in_spec(c):
        return pl.BlockSpec((N, 2, c), lambda n: (0, 0, 0))

    def vec_spec(c):
        return pl.BlockSpec((1, c), lambda n: (0, 0))

    def stats_out_spec(c):
        return pl.BlockSpec((1, 2, c), lambda n: (n, 0, 0))

    # ---- pass 1: conv1 (raw) + per-tile sum/sumsq for BN1 -------------------
    y1, st1 = pl.pallas_call(
        functools.partial(_conv3x3_kernel, inv_count=inv_count, pre_bn=False),
        grid=(N,),
        in_specs=[act_spec(Ci), w_spec(Ci, Co)],
        out_specs=[act_spec(Co), stats_out_spec(Co)],
        out_shape=[jax.ShapeDtypeStruct((N, H, W, Co), jnp.bfloat16),
                   jax.ShapeDtypeStruct((N, 2, Co), jnp.float32)],
        scratch_shapes=[pltpu.VMEM((H + 2, W + 2, Ci), jnp.float32)],
        compiler_params=cparams,
    )(x, w1p)

    # ---- pass 2: BN1 + ReLU (from st1) + conv2 (raw) + stats for BN2 --------
    y2, st2 = pl.pallas_call(
        functools.partial(_conv3x3_kernel, inv_count=inv_count, pre_bn=True),
        grid=(N,),
        in_specs=[act_spec(Co), w_spec(Co, Co), stats_in_spec(Co),
                  vec_spec(Co), vec_spec(Co)],
        out_specs=[act_spec(Co), stats_out_spec(Co)],
        out_shape=[jax.ShapeDtypeStruct((N, H, W, Co), jnp.bfloat16),
                   jax.ShapeDtypeStruct((N, 2, Co), jnp.float32)],
        scratch_shapes=[pltpu.VMEM((H + 2, W + 2, Co), jnp.float32)],
        compiler_params=cparams,
    )(y1, w2p, st1, g1p, be1p)

    # ---- pass 3: BN2 + ReLU --------------------------------------------------
    out = pl.pallas_call(
        functools.partial(_bn_relu_kernel, inv_count=inv_count),
        grid=(N,),
        in_specs=[act_spec(Co), stats_in_spec(Co), vec_spec(Co), vec_spec(Co)],
        out_specs=act_spec(Co),
        out_shape=jax.ShapeDtypeStruct((N, H, W, Co), jnp.float32),
        compiler_params=cparams,
    )(y2, st2, g2p, be2p)

    return jnp.transpose(out[..., :Cout], (0, 3, 1, 2))               # NCHW


def double_conv_reference(x_nchw, params):
    """Pure-JAX f32 reference (lax.conv, WITH conv biases), for verification."""
    w1, b1, g1, be1, w2, b2, g2, be2 = params
    x = jnp.transpose(x_nchw, (0, 2, 3, 1)).astype(jnp.float32)

    def conv_bn_relu(x, w, b, g, be):
        y = lax.conv_general_dilated(
            x, w, window_strides=(1, 1), padding='SAME',
            dimension_numbers=('NHWC', 'HWIO', 'NHWC')) + b
        mean = jnp.mean(y, axis=(0, 1, 2), keepdims=True)
        var = jnp.mean((y - mean) ** 2, axis=(0, 1, 2), keepdims=True)
        return jnp.maximum((y - mean) * lax.rsqrt(var + EPS) * g + be, 0.0)

    y = conv_bn_relu(x, w1, b1, g1, be1)
    y = conv_bn_relu(y, w2, b2, g2, be2)
    return jnp.transpose(y, (0, 3, 1, 2))


def init_params(key, in_ch, out_ch):
    """Deterministic synthetic params. Conv weights HWIO; non-trivial BN affine."""
    k1, k2, k3, k4, k5, k6, k7, k8 = jax.random.split(key, 8)
    s1 = 1.0 / (in_ch * 9) ** 0.5
    s2 = 1.0 / (out_ch * 9) ** 0.5
    w1 = jax.random.uniform(k1, (3, 3, in_ch, out_ch), jnp.float32, -s1, s1)
    b1 = jax.random.uniform(k2, (out_ch,), jnp.float32, -s1, s1)
    w2 = jax.random.uniform(k3, (3, 3, out_ch, out_ch), jnp.float32, -s2, s2)
    b2 = jax.random.uniform(k4, (out_ch,), jnp.float32, -s2, s2)
    g1 = jax.random.uniform(k5, (out_ch,), jnp.float32, 0.5, 1.5)
    be1 = jax.random.uniform(k6, (out_ch,), jnp.float32, -0.5, 0.5)
    g2 = jax.random.uniform(k7, (out_ch,), jnp.float32, 0.5, 1.5)
    be2 = jax.random.uniform(k8, (out_ch,), jnp.float32, -0.5, 0.5)
    return (w1, b1, g1, be1, w2, b2, g2, be2)


if __name__ == "__main__":
    key = jax.random.PRNGKey(0)
    kx, kp = jax.random.split(key)

    N, in_ch, out_ch, H, W = 2, 4, 8, 16, 16
    x = jax.random.normal(kx, (N, in_ch, H, W), jnp.float32)
    params = init_params(kp, in_ch, out_ch)

    out = jax.block_until_ready(double_conv_pallas(x, params))
    ref = jax.block_until_ready(double_conv_reference(x, params))

    assert out.shape == (N, out_ch, H, W)
    # Kernel uses bf16 MXU operands and bf16 inter-pass activations (f32
    # accumulation/stats) vs a pure-f32 reference -> ~1e-2-level agreement.
    assert jnp.allclose(out, ref, atol=5e-2, rtol=5e-2), "mismatch vs reference"
    print("KERNEL_OK")
</pallas_src>

<mosaic_0001>
module attributes {stable_mosaic.version = 11 : i64} {
  func.func @_conv3x3_kernel(%arg0: i32, %arg1: memref<1x16x16x128xbf16, #tpu.memory_space<vmem>>, %arg2: memref<3x3x128x128xbf16, #tpu.memory_space<vmem>>, %arg3: memref<1x16x16x128xbf16, #tpu.memory_space<vmem>>, %arg4: memref<1x2x128xf32, #tpu.memory_space<vmem>>, %arg5: memref<18x18x128xf32, #tpu.memory_space<vmem>>) attributes {dimension_semantics = [#tpu.dimension_semantics<parallel>], iteration_bounds = array<i64: 2>, scalar_prefetch = 0 : i64, scratch_operands = 1 : i64, tpu.core_type = #tpu.core_type<tc>, window_params = [{transform_indices = @transform_0, window_bounds = array<i64: 1, 16, 16, 128>}, {pipeline_mode = #tpu.pipeline_mode<synchronous>, transform_indices = @transform_1, window_bounds = array<i64: 3, 3, 128, 128>}, {transform_indices = @transform_2, window_bounds = array<i64: 1, 16, 16, 128>}, {transform_indices = @transform_3, window_bounds = array<i64: 1, 2, 128>}]} {
    %c0 = arith.constant 0 : index
    %c0_0 = arith.constant 0 : index
    %c0_1 = arith.constant 0 : index
    %c0_2 = arith.constant 0 : index
    %0 = vector.load %arg1[%c0, %c0_0, %c0_1, %c0_2] : memref<1x16x16x128xbf16, #tpu.memory_space<vmem>>, vector<1x16x16x128xbf16>
    %1 = vector.shape_cast %0 : vector<1x16x16x128xbf16> to vector<16x16x128xbf16>
    %2 = arith.extf %1 : vector<16x16x128xbf16> to vector<16x16x128xf32>
    %c1 = arith.constant 1 : index
    %c1_3 = arith.constant 1 : index
    %c0_4 = arith.constant 0 : index
    %3 = vector.load %arg5[%c1, %c1_3, %c0_4] : memref<18x18x128xf32, #tpu.memory_space<vmem>>, vector<16x16x128xf32>
    tpu.vector_store %arg5[%c1, %c1_3, %c0_4], %2 {strides = array<i32>} : memref<18x18x128xf32, #tpu.memory_space<vmem>>, vector<16x16x128xf32>,
    %cst = arith.constant 0.000000e+00 : f32
    %4 = vector.broadcast %cst : f32 to vector<1x18x128xf32>
    %c0_5 = arith.constant 0 : index
    %c0_6 = arith.constant 0 : index
    %c0_7 = arith.constant 0 : index
    %5 = vector.load %arg5[%c0_5, %c0_6, %c0_7] : memref<18x18x128xf32, #tpu.memory_space<vmem>>, vector<1x18x128xf32>
    tpu.vector_store %arg5[%c0_5, %c0_6, %c0_7], %4 {strides = array<i32>} : memref<18x18x128xf32, #tpu.memory_space<vmem>>, vector<1x18x128xf32>,
    %c17 = arith.constant 17 : index
    %c0_8 = arith.constant 0 : index
    %c0_9 = arith.constant 0 : index
    %6 = vector.load %arg5[%c17, %c0_8, %c0_9] : memref<18x18x128xf32, #tpu.memory_space<vmem>>, vector<1x18x128xf32>
    tpu.vector_store %arg5[%c17, %c0_8, %c0_9], %4 {strides = array<i32>} : memref<18x18x128xf32, #tpu.memory_space<vmem>>, vector<1x18x128xf32>,
    %cst_10 = arith.constant 0.000000e+00 : f32
    %7 = vector.broadcast %cst_10 : f32 to vector<16x1x128xf32>
    %c1_11 = arith.constant 1 : index
    %c0_12 = arith.constant 0 : index
    %c0_13 = arith.constant 0 : index
    %8 = vector.load %arg5[%c1_11, %c0_12, %c0_13] : memref<18x18x128xf32, #tpu.memory_space<vmem>>, vector<16x1x128xf32>
    tpu.vector_store %arg5[%c1_11, %c0_12, %c0_13], %7 {strides = array<i32>} : memref<18x18x128xf32, #tpu.memory_space<vmem>>, vector<16x1x128xf32>,
    %c1_14 = arith.constant 1 : index
    %c17_15 = arith.constant 17 : index
    %c0_16 = arith.constant 0 : index
    %9 = vector.load %arg5[%c1_14, %c17_15, %c0_16] : memref<18x18x128xf32, #tpu.memory_space<vmem>>, vector<16x1x128xf32>
    tpu.vector_store %arg5[%c1_14, %c17_15, %c0_16], %7 {strides = array<i32>} : memref<18x18x128xf32, #tpu.memory_space<vmem>>, vector<16x1x128xf32>,
    %cst_17 = arith.constant 0.000000e+00 : f32
    %10 = vector.broadcast %cst_17 : f32 to vector<256x128xf32>
    %c0_18 = arith.constant 0 : index
    %c0_19 = arith.constant 0 : index
    %c0_20 = arith.constant 0 : index
    %11 = vector.load %arg5[%c0_18, %c0_19, %c0_20] : memref<18x18x128xf32, #tpu.memory_space<vmem>>, vector<16x16x128xf32>
    %12 = vector.shape_cast %11 : vector<16x16x128xf32> to vector<256x128xf32>
    %13 = arith.truncf %12 : vector<256x128xf32> to vector<256x128xbf16>
    %c0_21 = arith.constant 0 : index
    %c0_22 = arith.constant 0 : index
    %c0_23 = arith.constant 0 : index
    %c0_24 = arith.constant 0 : index
    %14 = vector.load %arg2[%c0_21, %c0_22, %c0_23, %c0_24] : memref<3x3x128x128xbf16, #tpu.memory_space<vmem>>, vector<1x1x128x128xbf16>
    %15 = vector.shape_cast %14 : vector<1x1x128x128xbf16> to vector<128x128xbf16>
    %cst_25 = arith.constant dense<0.000000e+00> : vector<256x128xf32>
    %16 = tpu.matmul %13, %15, %cst_25 {dimension_numbers = #tpu.dot_dimension_numbers<[1], [0], [0], [1], [0, 0, 1, 1], [], []>} : vector<256x128xbf16>, vector<128x128xbf16>, vector<256x128xf32> -> vector<256x128xf32>
    %17 = arith.addf %10, %16 : vector<256x128xf32>
    %c0_26 = arith.constant 0 : index
    %c1_27 = arith.constant 1 : index
    %c0_28 = arith.constant 0 : index
    %18 = vector.load %arg5[%c0_26, %c1_27, %c0_28] : memref<18x18x128xf32, #tpu.memory_space<vmem>>, vector<16x16x128xf32>
    %19 = vector.shape_cast %18 : vector<16x16x128xf32> to vector<256x128xf32>
    %20 = arith.truncf %19 : vector<256x128xf32> to vector<256x128xbf16>
    %c0_29 = arith.constant 0 : index
    %c1_30 = arith.constant 1 : index
    %c0_31 = arith.constant 0 : index
    %c0_32 = arith.constant 0 : index
    %21 = vector.load %arg2[%c0_29, %c1_30, %c0_31, %c0_32] : memref<3x3x128x128xbf16, #tpu.memory_space<vmem>>, vector<1x1x128x128xbf16>
    %22 = vector.shape_cast %21 : vector<1x1x128x128xbf16> to vector<128x128xbf16>
    %cst_33 = arith.constant dense<0.000000e+00> : vector<256x128xf32>
    %23 = tpu.matmul %20, %22, %cst_33 {dimension_numbers = #tpu.dot_dimension_numbers<[1], [0], [0], [1], [0, 0, 1, 1], [], []>} : vector<256x128xbf16>, vector<128x128xbf16>, vector<256x128xf32> -> vector<256x128xf32>
    %24 = arith.addf %17, %23 : vector<256x128xf32>
    %c0_34 = arith.constant 0 : index
    %c2 = arith.constant 2 : index
    %c0_35 = arith.constant 0 : index
    %25 = vector.load %arg5[%c0_34, %c2, %c0_35] : memref<18x18x128xf32, #tpu.memory_space<vmem>>, vector<16x16x128xf32>
    %26 = vector.shape_cast %25 : vector<16x16x128xf32> to vector<256x128xf32>
    %27 = arith.truncf %26 : vector<256x128xf32> to vector<256x128xbf16>
    %c0_36 = arith.constant 0 : index
    %c2_37 = arith.constant 2 : index
    %c0_38 = arith.constant 0 : index
    %c0_39 = arith.constant 0 : index
    %28 = vector.load %arg2[%c0_36, %c2_37, %c0_38, %c0_39] : memref<3x3x128x128xbf16, #tpu.memory_space<vmem>>, vector<1x1x128x128xbf16>
    %29 = vector.shape_cast %28 : vector<1x1x128x128xbf16> to vector<128x128xbf16>
    %cst_40 = arith.constant dense<0.000000e+00> : vector<256x128xf32>
    %30 = tpu.matmul %27, %29, %cst_40 {dimension_numbers = #tpu.dot_dimension_numbers<[1], [0], [0], [1], [0, 0, 1, 1], [], []>} : vector<256x128xbf16>, vector<128x128xbf16>, vector<256x128xf32> -> vector<256x128xf32>
    %31 = arith.addf %24, %30 : vector<256x128xf32>
    %c1_41 = arith.constant 1 : index
    %c0_42 = arith.constant 0 : index
    %c0_43 = arith.constant 0 : index
    %32 = vector.load %arg5[%c1_41, %c0_42, %c0_43] : memref<18x18x128xf32, #tpu.memory_space<vmem>>, vector<16x16x128xf32>
    %33 = vector.shape_cast %32 : vector<16x16x128xf32> to vector<256x128xf32>
    %34 = arith.truncf %33 : vector<256x128xf32> to vector<256x128xbf16>
    %c1_44 = arith.constant 1 : index
    %c0_45 = arith.constant 0 : index
    %c0_46 = arith.constant 0 : index
    %c0_47 = arith.constant 0 : index
    %35 = vector.load %arg2[%c1_44, %c0_45, %c0_46, %c0_47] : memref<3x3x128x128xbf16, #tpu.memory_space<vmem>>, vector<1x1x128x128xbf16>
    %36 = vector.shape_cast %35 : vector<1x1x128x128xbf16> to vector<128x128xbf16>
    %cst_48 = arith.constant dense<0.000000e+00> : vector<256x128xf32>
    %37 = tpu.matmul %34, %36, %cst_48 {dimension_numbers = #tpu.dot_dimension_numbers<[1], [0], [0], [1], [0, 0, 1, 1], [], []>} : vector<256x128xbf16>, vector<128x128xbf16>, vector<256x128xf32> -> vector<256x128xf32>
    %38 = arith.addf %31, %37 : vector<256x128xf32>
    %c1_49 = arith.constant 1 : index
    %c1_50 = arith.constant 1 : index
    %c0_51 = arith.constant 0 : index
    %39 = vector.load %arg5[%c1_49, %c1_50, %c0_51] : memref<18x18x128xf32, #tpu.memory_space<vmem>>, vector<16x16x128xf32>
    %40 = vector.shape_cast %39 : vector<16x16x128xf32> to vector<256x128xf32>
    %41 = arith.truncf %40 : vector<256x128xf32> to vector<256x128xbf16>
    %c1_52 = arith.constant 1 : index
    %c1_53 = arith.constant 1 : index
    %c0_54 = arith.constant 0 : index
    %c0_55 = arith.constant 0 : index
    %42 = vector.load %arg2[%c1_52, %c1_53, %c0_54, %c0_55] : memref<3x3x128x128xbf16, #tpu.memory_space<vmem>>, vector<1x1x128x128xbf16>
    %43 = vector.shape_cast %42 : vector<1x1x128x128xbf16> to vector<128x128xbf16>
    %cst_56 = arith.constant dense<0.000000e+00> : vector<256x128xf32>
    %44 = tpu.matmul %41, %43, %cst_56 {dimension_numbers = #tpu.dot_dimension_numbers<[1], [0], [0], [1], [0, 0, 1, 1], [], []>} : vector<256x128xbf16>, vector<128x128xbf16>, vector<256x128xf32> -> vector<256x128xf32>
    %45 = arith.addf %38, %44 : vector<256x128xf32>
    %c1_57 = arith.constant 1 : index
    %c2_58 = arith.constant 2 : index
    %c0_59 = arith.constant 0 : index
    %46 = vector.load %arg5[%c1_57, %c2_58, %c0_59] : memref<18x18x128xf32, #tpu.memory_space<vmem>>, vector<16x16x128xf32>
    %47 = vector.shape_cast %46 : vector<16x16x128xf32> to vector<256x128xf32>
    %48 = arith.truncf %47 : vector<256x128xf32> to vector<256x128xbf16>
    %c1_60 = arith.constant 1 : index
    %c2_61 = arith.constant 2 : index
    %c0_62 = arith.constant 0 : index
    %c0_63 = arith.constant 0 : index
    %49 = vector.load %arg2[%c1_60, %c2_61, %c0_62, %c0_63] : memref<3x3x128x128xbf16, #tpu.memory_space<vmem>>, vector<1x1x128x128xbf16>
    %50 = vector.shape_cast %49 : vector<1x1x128x128xbf16> to vector<128x128xbf16>
    %cst_64 = arith.constant dense<0.000000e+00> : vector<256x128xf32>
    %51 = tpu.matmul %48, %50, %cst_64 {dimension_numbers = #tpu.dot_dimension_numbers<[1], [0], [0], [1], [0, 0, 1, 1], [], []>} : vector<256x128xbf16>, vector<128x128xbf16>, vector<256x128xf32> -> vector<256x128xf32>
    %52 = arith.addf %45, %51 : vector<256x128xf32>
    %c2_65 = arith.constant 2 : index
    %c0_66 = arith.constant 0 : index
    %c0_67 = arith.constant 0 : index
    %53 = vector.load %arg5[%c2_65, %c0_66, %c0_67] : memref<18x18x128xf32, #tpu.memory_space<vmem>>, vector<16x16x128xf32>
    %54 = vector.shape_cast %53 : vector<16x16x128xf32> to vector<256x128xf32>
    %55 = arith.truncf %54 : vector<256x128xf32> to vector<256x128xbf16>
    %c2_68 = arith.constant 2 : index
    %c0_69 = arith.constant 0 : index
    %c0_70 = arith.constant 0 : index
    %c0_71 = arith.constant 0 : index
    %56 = vector.load %arg2[%c2_68, %c0_69, %c0_70, %c0_71] : memref<3x3x128x128xbf16, #tpu.memory_space<vmem>>, vector<1x1x128x128xbf16>
    %57 = vector.shape_cast %56 : vector<1x1x128x128xbf16> to vector<128x128xbf16>
    %cst_72 = arith.constant dense<0.000000e+00> : vector<256x128xf32>
    %58 = tpu.matmul %55, %57, %cst_72 {dimension_numbers = #tpu.dot_dimension_numbers<[1], [0], [0], [1], [0, 0, 1, 1], [], []>} : vector<256x128xbf16>, vector<128x128xbf16>, vector<256x128xf32> -> vector<256x128xf32>
    %59 = arith.addf %52, %58 : vector<256x128xf32>
    %c2_73 = arith.constant 2 : index
    %c1_74 = arith.constant 1 : index
    %c0_75 = arith.constant 0 : index
    %60 = vector.load %arg5[%c2_73, %c1_74, %c0_75] : memref<18x18x128xf32, #tpu.memory_space<vmem>>, vector<16x16x128xf32>
    %61 = vector.shape_cast %60 : vector<16x16x128xf32> to vector<256x128xf32>
    %62 = arith.truncf %61 : vector<256x128xf32> to vector<256x128xbf16>
    %c2_76 = arith.constant 2 : index
    %c1_77 = arith.constant 1 : index
    %c0_78 = arith.constant 0 : index
    %c0_79 = arith.constant 0 : index
    %63 = vector.load %arg2[%c2_76, %c1_77, %c0_78, %c0_79] : memref<3x3x128x128xbf16, #tpu.memory_space<vmem>>, vector<1x1x128x128xbf16>
    %64 = vector.shape_cast %63 : vector<1x1x128x128xbf16> to vector<128x128xbf16>
    %cst_80 = arith.constant dense<0.000000e+00> : vector<256x128xf32>
    %65 = tpu.matmul %62, %64, %cst_80 {dimension_numbers = #tpu.dot_dimension_numbers<[1], [0], [0], [1], [0, 0, 1, 1], [], []>} : vector<256x128xbf16>, vector<128x128xbf16>, vector<256x128xf32> -> vector<256x128xf32>
    %66 = arith.addf %59, %65 : vector<256x128xf32>
    %c2_81 = arith.constant 2 : index
    %c2_82 = arith.constant 2 : index
    %c0_83 = arith.constant 0 : index
    %67 = vector.load %arg5[%c2_81, %c2_82, %c0_83] : memref<18x18x128xf32, #tpu.memory_space<vmem>>, vector<16x16x128xf32>
    %68 = vector.shape_cast %67 : vector<16x16x128xf32> to vector<256x128xf32>
    %69 = arith.truncf %68 : vector<256x128xf32> to vector<256x128xbf16>
    %c2_84 = arith.constant 2 : index
    %c2_85 = arith.constant 2 : index
    %c0_86 = arith.constant 0 : index
    %c0_87 = arith.constant 0 : index
    %70 = vector.load %arg2[%c2_84, %c2_85, %c0_86, %c0_87] : memref<3x3x128x128xbf16, #tpu.memory_space<vmem>>, vector<1x1x128x128xbf16>
    %71 = vector.shape_cast %70 : vector<1x1x128x128xbf16> to vector<128x128xbf16>
    %cst_88 = arith.constant dense<0.000000e+00> : vector<256x128xf32>
    %72 = tpu.matmul %69, %71, %cst_88 {dimension_numbers = #tpu.dot_dimension_numbers<[1], [0], [0], [1], [0, 0, 1, 1], [], []>} : vector<256x128xbf16>, vector<128x128xbf16>, vector<256x128xf32> -> vector<256x128xf32>
    %73 = arith.addf %66, %72 : vector<256x128xf32>
    %74 = vector.shape_cast %73 : vector<256x128xf32> to vector<16x16x128xf32>
    %75 = arith.truncf %74 : vector<16x16x128xf32> to vector<16x16x128xbf16>
    %c0_89 = arith.constant 0 : index
    %c0_90 = arith.constant 0 : index
    %c0_91 = arith.constant 0 : index
    %c0_92 = arith.constant 0 : index
    %76 = vector.load %arg3[%c0_89, %c0_90, %c0_91, %c0_92] : memref<1x16x16x128xbf16, #tpu.memory_space<vmem>>, vector<1x16x16x128xbf16>
    %77 = vector.shape_cast %76 : vector<1x16x16x128xbf16> to vector<16x16x128xbf16>
    %78 = vector.shape_cast %75 : vector<16x16x128xbf16> to vector<1x16x16x128xbf16>
    tpu.vector_store %arg3[%c0_89, %c0_90, %c0_91, %c0_92], %78 {strides = array<i32>} : memref<1x16x16x128xbf16, #tpu.memory_space<vmem>>, vector<1x16x16x128xbf16>,
    %cst_93 = arith.constant dense<0.000000e+00> : vector<128xf32>
    %79 = vector.multi_reduction <add>, %73, %cst_93 [0] : vector<256x128xf32> to vector<128xf32>
    %80 = vector.shape_cast %79 : vector<128xf32> to vector<1x128xf32>
    %c0_94 = arith.constant 0 : index
    %c0_95 = arith.constant 0 : index
    %c0_96 = arith.constant 0 : index
    %81 = vector.load %arg4[%c0_94, %c0_95, %c0_96] : memref<1x2x128xf32, #tpu.memory_space<vmem>>, vector<1x1x128xf32>
    %82 = vector.shape_cast %81 : vector<1x1x128xf32> to vector<1x128xf32>
    %83 = vector.shape_cast %80 : vector<1x128xf32> to vector<1x1x128xf32>
    tpu.vector_store %arg4[%c0_94, %c0_95, %c0_96], %83 {strides = array<i32>} : memref<1x2x128xf32, #tpu.memory_space<vmem>>, vector<1x1x128xf32>,
    %84 = arith.mulf %73, %73 : vector<256x128xf32>
    %cst_97 = arith.constant dense<0.000000e+00> : vector<128xf32>
    %85 = vector.multi_reduction <add>, %84, %cst_97 [0] : vector<256x128xf32> to vector<128xf32>
    %86 = vector.shape_cast %85 : vector<128xf32> to vector<1x128xf32>
    %c0_98 = arith.constant 0 : index
    %c1_99 = arith.constant 1 : index
    %c0_100 = arith.constant 0 : index
    %87 = vector.load %arg4[%c0_98, %c1_99, %c0_100] : memref<1x2x128xf32, #tpu.memory_space<vmem>>, vector<1x1x128xf32>
    %88 = vector.shape_cast %87 : vector<1x1x128xf32> to vector<1x128xf32>
    %89 = vector.shape_cast %86 : vector<1x128xf32> to vector<1x1x128xf32>
    tpu.vector_store %arg4[%c0_98, %c1_99, %c0_100], %89 {strides = array<i32>} : memref<1x2x128xf32, #tpu.memory_space<vmem>>, vector<1x1x128xf32>,
    return
  }
  func.func @transform_0(%arg0: i32) -> (i32, i32, i32, i32) {
    %c0_i32 = arith.constant 0 : i32
    %c0_i32_0 = arith.constant 0 : i32
    %c0_i32_1 = arith.constant 0 : i32
    %c0_i32_2 = arith.constant 0 : i32
    return %arg0, %c0_i32, %c0_i32_0, %c0_i32_1 : i32, i32, i32, i32
  }
  func.func @transform_1(%arg0: i32) -> (i32, i32, i32, i32) {
    %c0_i32 = arith.constant 0 : i32
    %c0_i32_0 = arith.constant 0 : i32
    %c0_i32_1 = arith.constant 0 : i32
    %c0_i32_2 = arith.constant 0 : i32
    %c0_i32_3 = arith.constant 0 : i32
    return %c0_i32, %c0_i32_0, %c0_i32_1, %c0_i32_2 : i32, i32, i32, i32
  }
  func.func @transform_2(%arg0: i32) -> (i32, i32, i32, i32) {
    %c0_i32 = arith.constant 0 : i32
    %c0_i32_0 = arith.constant 0 : i32
    %c0_i32_1 = arith.constant 0 : i32
    %c0_i32_2 = arith.constant 0 : i32
    return %arg0, %c0_i32, %c0_i32_0, %c0_i32_1 : i32, i32, i32, i32
  }
  func.func @transform_3(%arg0: i32) -> (i32, i32, i32) {
    %c0_i32 = arith.constant 0 : i32
    %c0_i32_0 = arith.constant 0 : i32
    %c0_i32_1 = arith.constant 0 : i32
    return %arg0, %c0_i32, %c0_i32_0 : i32, i32, i32
  }
}

</mosaic_0001>

<llo_original>
// kernel: tpu_custom_call.1
$region0: #{tpu_custom_call.1}
  #allocation0 [shape = 'u32[]', space=smem, size = 0x4, offset = 0x4, fixed_abs, tag = 'smem constant byte address 0x4 - core index']
  #allocation1 [shape = 'u32[144,128]{1,0:T(1,128)}', space=vmem, size = 0x12000, scoped, tag = 'internal scratch']
  #allocation2 [shape = 'f32[18,18,128]{2,1,0:T(8,128)}', space=vmem, size = 0x36000, scoped, tag = 'scratch operand']
  %s0 = inlined_call_operand.hbm [shape: bf16[2,16,16,128], index: 0, kind: input, shape index: {}]
  %s1 = inlined_call_operand.hbm [shape: bf16[3,3,128,128], index: 1, kind: input, shape index: {}]
  %s2 = inlined_call_operand.hbm [shape: bf16[2,16,16,128], index: 2, kind: output, shape index: {0}]
  %s3 = inlined_call_operand.hbm [shape: f32[2,2,128], index: 3, kind: output, shape index: {1}]
  %4 = xla_tuple %s2, %s3
  %s5 = sld [smem:[#allocation0]]
  $region57: #{tpu_custom_call.1} parent=0
    _
  %s7 = ssub.s32 1, %s5
  %s8 = scalar_select 0, %s7, %s5
  $region1: #{tpu_custom_call.1} parent=0
    #allocation3 [shape = 'u8[131072]{0}', space=vmem, size = 0x20000, scoped, tag = 'input window, operand 0']
    #allocation4 [shape = 's32[2]{0}', space=sflag, size = 0x8, scoped, tag = 'scoped memory for tpu_custom_call.1']
    #allocation5 [shape = 's32[2]{0}', space=sflag, size = 0x8, scoped, tag = 'scoped memory for tpu_custom_call.1']
    #allocation6 [shape = 'u8[294912]{0}', space=vmem, size = 0x48000, scoped, tag = 'input window, operand 1, single buffered']
    #allocation7 [shape = 's32[1]{0}', space=sflag, size = 0x4, scoped, tag = 'scoped memory for tpu_custom_call.1']
    #allocation8 [shape = 'u8[131072]{0}', space=vmem, size = 0x20000, scoped, tag = 'output window, operand 0']
    #allocation9 [shape = 'u8[2048]{0}', space=vmem, size = 0x800, scoped, tag = 'output window, operand 1']
    #allocation10 [shape = 's32[2]{0}', space=sflag, size = 0x8, scoped, tag = 'scoped memory for tpu_custom_call.1']
    %9 = vsyncpa [#allocation4], 0
    %s10 = scalar_lea.sflag [#allocation4], 1
    %11 = vsyncpa %s10, 0
    %12 = vsyncpa [#allocation7], 0
    %13 = vsyncpa [#allocation5], 0
    %s14 = scalar_lea.sflag [#allocation5], 1
    %15 = vsyncpa %s14, 0
    %16 = vsyncpa [#allocation10], 0
    %s17 = scalar_lea.sflag [#allocation10], 1
    %18 = vsyncpa %s17, 0
    loop: start=0, step=1, limit=4
    $region2: #{tpu_custom_call.1} parent=1 // loop_pre_header
      _
    $region3: #{tpu_custom_call.1} parent=1 // loop_header
      %s20 = sphi 0, %s24
      %p21 = scmp.ge.s32.totalorder %s20, 4
      %s30 = sphi 0, %s32
      %s33 = sphi 0, %s30
      %s34 = sphi 0, %s33
      %s50 = sphi 0, %s34
      %s54 = sphi 0, %s54
      %s56 = sphi 0, %s54
      %s57 = sphi 0, %s56
      %s71 = sphi 0, %s57
      %s77 = sphi 0, %s79
      %s80 = sphi 0, %s77
      %s81 = sphi 0, %s80
      %s97 = sphi 0, %s81
      %s103 = sphi 0, %s105
      %s106 = sphi 0, %s103
      %s107 = sphi 0, %s106
      %s123 = sphi 0, %s107
    $region4: #{tpu_custom_call.1} parent=1 // loop_header_branch
      %23 = sbr.rel (%p21) target = $region8
    $region5: #{tpu_custom_call.1} parent=1 // loop_body
      %s25 = ssub.s32 %s20, 1
      %s26 = ssub.s32 %s20, 2
      %s27 = sadd.s32 %s20, 1
      %s28 = ssub.s32 %s20, %s27
      %p29 = scmp.eq.s32.totalorder %s28, 0
      %s31 = sadd.s32 %s30, 1
      %s32 = scalar_select %p29, %s30, %s31
      %p35 = pneg %p29
      %p36 = scmp.eq.s32.totalorder %s20, 1
      %p37 = por %p35, %p36
      %p38 = scmp.ne.s32.totalorder %s30, %s33
      %p39 = scmp.eq.s32.totalorder %s20, 0
      %p40 = por %p38, %p39
      %p41 = scmp.ne.s32.totalorder %s30, %s33
      %p42 = scmp.eq.s32.totalorder %s25, 1
      %p43 = por %p41, %p42
      %p44 = scmp.ne.s32.totalorder %s33, %s34
      %p45 = scmp.eq.s32.totalorder %s25, 0
      %p46 = por %p44, %p45
      %p47 = scmp.ne.s32.totalorder %s33, %s34
      %p48 = scmp.eq.s32.totalorder %s26, 1
      %p49 = por %p47, %p48
      %p51 = scmp.ne.s32.totalorder %s34, %s50
      %p52 = scmp.eq.s32.totalorder %s26, 0
      %p53 = por %p51, %p52
      %s55 = sadd.s32 %s54, 1
      %p58 = scmp.eq.s32.totalorder %s20, 1
      %p59 = scmp.ne.s32.totalorder %s54, %s56
      %p60 = scmp.eq.s32.totalorder %s20, 0
      %p61 = por %p59, %p60
      %p62 = scmp.ne.s32.totalorder %s54, %s56
      %p63 = scmp.eq.s32.totalorder %s25, 1
      %p64 = por %p62, %p63
      %p65 = scmp.ne.s32.totalorder %s56, %s57
      %p66 = scmp.eq.s32.totalorder %s25, 0
      %p67 = por %p65, %p66
      %p68 = scmp.ne.s32.totalorder %s56, %s57
      %p69 = scmp.eq.s32.totalorder %s26, 1
      %p70 = por %p68, %p69
      %p72 = scmp.ne.s32.totalorder %s57, %s71
      %p73 = scmp.eq.s32.totalorder %s26, 0
      %p74 = por %p72, %p73
      %s75 = ssub.s32 %s20, %s27
      %p76 = scmp.eq.s32.totalorder %s75, 0
      %s78 = sadd.s32 %s77, 1
      %s79 = scalar_select %p76, %s77, %s78
      %p82 = pneg %p76
      %p83 = scmp.eq.s32.totalorder %s20, 1
      %p84 = por %p82, %p83
      %p85 = scmp.ne.s32.totalorder %s77, %s80
      %p86 = scmp.eq.s32.totalorder %s20, 0
      %p87 = por %p85, %p86
      %p88 = scmp.ne.s32.totalorder %s77, %s80
      %p89 = scmp.eq.s32.totalorder %s25, 1
      %p90 = por %p88, %p89
      %p91 = scmp.ne.s32.totalorder %s80, %s81
      %p92 = scmp.eq.s32.totalorder %s25, 0
      %p93 = por %p91, %p92
      %p94 = scmp.ne.s32.totalorder %s80, %s81
      %p95 = scmp.eq.s32.totalorder %s26, 1
      %p96 = por %p94, %p95
      %p98 = scmp.ne.s32.totalorder %s81, %s97
      %p99 = scmp.eq.s32.totalorder %s26, 0
      %p100 = por %p98, %p99
      %s101 = ssub.s32 %s20, %s27
      %p102 = scmp.eq.s32.totalorder %s101, 0
      %s104 = sadd.s32 %s103, 1
      %s105 = scalar_select %p102, %s103, %s104
      %p108 = pneg %p102
      %p109 = scmp.eq.s32.totalorder %s20, 1
      %p110 = por %p108, %p109
      %p111 = scmp.ne.s32.totalorder %s103, %s106
      %p112 = scmp.eq.s32.totalorder %s20, 0
      %p113 = por %p111, %p112
      %p114 = scmp.ne.s32.totalorder %s103, %s106
      %p115 = scmp.eq.s32.totalorder %s25, 1
      %p116 = por %p114, %p115
      %p117 = scmp.ne.s32.totalorder %s106, %s107
      %p118 = scmp.eq.s32.totalorder %s25, 0
      %p119 = por %p117, %p118
      %p120 = scmp.ne.s32.totalorder %s106, %s107
      %p121 = scmp.eq.s32.totalorder %s26, 1
      %p122 = por %p120, %p121
      %p124 = scmp.ne.s32.totalorder %s107, %s123
      %p125 = scmp.eq.s32.totalorder %s26, 0
      %p126 = por %p124, %p125
      %p127 = scmp.le.s32.totalorder 1, %s20
      %p128 = scmp.lt.s32.totalorder %s20, 3
      %p129 = pnand %p127, %p128
      %p130 = pneg %p129
      // Predicated region
      $region9: #{tpu_custom_call.1} parent=5 // pred_check
        _
      $region10: #{tpu_custom_call.1} parent=5 // pred_check_branch
        %132 = sbr.rel (%p129) target = $region12
      $region11: #{tpu_custom_call.1} parent=5 // pred_region
        %s133 = ssub.s32 %s20, 1
        // Predicated region
        $region13: #{tpu_custom_call.1} parent=11 // pred_check
          %p134 = pneg %p67
        $region14: #{tpu_custom_call.1} parent=11 // pred_check_branch
          %136 = sbr.rel (%p134) target = $region16
        $region15: #{tpu_custom_call.1} parent=11 // pred_region
          %s138 = ssub.s32 9216, 9216
          %139 = vsyncadd [#allocation7], %s138
          %s140 = sshll.u32 [#allocation6], 4
          %s141 = int_to_ptr.vmem [resolvable:$true] %s140
          %146 = dma.hbm_to_vmem [thread:$0]  %s1, 9216, %s141, [#allocation7], 64, 64, 4
        $region16: #{tpu_custom_call.1} parent=11 // pred_fallthru
          _
      $region12: #{tpu_custom_call.1} parent=5 // pred_fallthru
        _
      %p147 = scmp.lt.s32.totalorder %s20, 2
      // Predicated region
      $region17: #{tpu_custom_call.1} parent=5 // pred_check
        %p148 = pneg %p147
      $region18: #{tpu_custom_call.1} parent=5 // pred_check_branch
        %150 = sbr.rel (%p148) target = $region20
      $region19: #{tpu_custom_call.1} parent=5 // pred_region
        // Predicated region
        $region21: #{tpu_custom_call.1} parent=19 // pred_check
          %p151 = pneg %p40
        $region22: #{tpu_custom_call.1} parent=19 // pred_check_branch
          %153 = sbr.rel (%p151) target = $region24
        $region23: #{tpu_custom_call.1} parent=19 // pred_region
          %s154 = sand.u32 %s30, 1
          %s155 = scalar_lea.sflag [#allocation4], %s154
          %s156 = sand.u32 %s30, 1
          %s157 = smul.addr %s156, 128
          %s158 = scalar_lea.vmem [#allocation3], %s157
          %s160 = ssub.s32 2048, 2048
          %161 = vsyncadd %s155, %s160
          %s162 = smul.addr %s20, 32
          %s163 = smul.addr %s162, 64
          %s164 = scalar_lea.hbm %s0, %s163
          %s165 = sshll.u32 %s158, 4
          %s166 = int_to_ptr.vmem [resolvable:$true] %s165
          %171 = dma.hbm_to_vmem [thread:$0]  %s164, 2048, %s166, %s155, 64, 64, 4
        $region24: #{tpu_custom_call.1} parent=19 // pred_fallthru
          _
      $region20: #{tpu_custom_call.1} parent=5 // pred_fallthru
        _
      %p172 = scmp.le.s32.totalorder 1, %s20
      %p173 = scmp.lt.s32.totalorder %s20, 3
      %p174 = pnand %p172, %p173
      %p175 = pneg %p174
      // Predicated region
      $region25: #{tpu_custom_call.1} parent=5 // pred_check
        _
      $region26: #{tpu_custom_call.1} parent=5 // pred_check_branch
        %177 = sbr.rel (%p174) target = $region28
      $region27: #{tpu_custom_call.1} parent=5 // pred_region
        %s178 = ssub.s32 %s20, 1
        %s179 = sand.u32 %s33, 1
        %s180 = scalar_lea.sflag [#allocation4], %s179
        %s181 = sand.u32 %s33, 1
        %s182 = smul.addr %s181, 128
        %s183 = scalar_lea.vmem [#allocation3], %s182
        // Predicated region
        $region29: #{tpu_custom_call.1} parent=27 // pred_check
          %p184 = pneg %p46
        $region30: #{tpu_custom_call.1} parent=27 // pred_check_branch
          %186 = sbr.rel (%p184) target = $region32
        $region31: #{tpu_custom_call.1} parent=27 // pred_region
          %187 = dma.done %s180, 2048
        $region32: #{tpu_custom_call.1} parent=27 // pred_fallthru
          _
        // Predicated region
        $region33: #{tpu_custom_call.1} parent=27 // pred_check
          %p188 = pneg %p67
        $region34: #{tpu_custom_call.1} parent=27 // pred_check_branch
          %190 = sbr.rel (%p188) target = $region36
        $region35: #{tpu_custom_call.1} parent=27 // pred_region
          %191 = dma.done [#allocation7], 9216
        $region36: #{tpu_custom_call.1} parent=27 // pred_fallthru
          _
        %s192 = sand.u32 %s33, 1
        %s193 = scalar_lea.sflag [#allocation4], %s192
        %s194 = sand.u32 %s33, 1
        %s195 = smul.addr %s194, 128
        %s196 = scalar_lea.vmem [#allocation3], %s195
        %p197 = pneg %p46
        %p198 = pneg %p43
        %p199 = pneg %p67
        %p200 = pneg %p64
        %p201 = pneg %p93
        %p202 = pneg %p90
        %s203 = sand.u32 %s80, 1
        %s204 = scalar_lea.sflag [#allocation5], %s203
        %s205 = sand.u32 %s80, 1
        %s206 = smul.addr %s205, 128
        %s207 = scalar_lea.vmem [#allocation8], %s206
        %p208 = pneg %p119
        %p209 = pneg %p116
        %s210 = sand.u32 %s106, 1
        %s211 = scalar_lea.sflag [#allocation10], %s210
        %s212 = sand.u32 %s106, 1
        %s213 = smul.addr %s212, 2
        %s214 = scalar_lea.vmem [#allocation9], %s213
        %v216 = vld [vmem:[%s183] sm:$0xf]
        %v217 = vld [vmem:[%s183 + $0x4] sm:$0xf]
        %v218 = vld [vmem:[%s183 + $0x8] sm:$0xf]
        %v219 = vld [vmem:[%s183 + $0xc] sm:$0xf]
        %v220 = vld [vmem:[%s183 + $0x10] sm:$0xf]
        %v221 = vld [vmem:[%s183 + $0x14] sm:$0xf]
        %v222 = vld [vmem:[%s183 + $0x18] sm:$0xf]
        %v223 = vld [vmem:[%s183 + $0x1c] sm:$0xf]
        %v224 = vld [vmem:[%s183 + $0x20] sm:$0xf]
        %v225 = vld [vmem:[%s183 + $0x24] sm:$0xf]
        %v226 = vld [vmem:[%s183 + $0x28] sm:$0xf]
        %v227 = vld [vmem:[%s183 + $0x2c] sm:$0xf]
        %v228 = vld [vmem:[%s183 + $0x30] sm:$0xf]
        %v229 = vld [vmem:[%s183 + $0x34] sm:$0xf]
        %v230 = vld [vmem:[%s183 + $0x38] sm:$0xf]
        %v231 = vld [vmem:[%s183 + $0x3c] sm:$0xf]
        %v232 = vld [vmem:[%s183 + $0x40] sm:$0xf]
        %v233 = vld [vmem:[%s183 + $0x44] sm:$0xf]
        %v234 = vld [vmem:[%s183 + $0x48] sm:$0xf]
        %v235 = vld [vmem:[%s183 + $0x4c] sm:$0xf]
        %v236 = vld [vmem:[%s183 + $0x50] sm:$0xf]
        %v237 = vld [vmem:[%s183 + $0x54] sm:$0xf]
        %v238 = vld [vmem:[%s183 + $0x58] sm:$0xf]
        %v239 = vld [vmem:[%s183 + $0x5c] sm:$0xf]
        %v240 = vld [vmem:[%s183 + $0x60] sm:$0xf]
        %v241 = vld [vmem:[%s183 + $0x64] sm:$0xf]
        %v242 = vld [vmem:[%s183 + $0x68] sm:$0xf]
        %v243 = vld [vmem:[%s183 + $0x6c] sm:$0xf]
        %v244 = vld [vmem:[%s183 + $0x70] sm:$0xf]
        %v245 = vld [vmem:[%s183 + $0x74] sm:$0xf]
        %v246 = vld [vmem:[%s183 + $0x78] sm:$0xf]
        %v247 = vld [vmem:[%s183 + $0x7c] sm:$0xf]
        %v248 = vunpack.c.l.bf16 %v216
        %v249 = vunpack.c.l.bf16 %v217
        %v250 = vunpack.c.l.bf16 %v218
        %v251 = vunpack.c.l.bf16 %v219
        %v252 = vunpack.c.l.bf16 %v220
        %v253 = vunpack.c.l.bf16 %v221
        %v254 = vunpack.c.l.bf16 %v222
        %v255 = vunpack.c.l.bf16 %v223
        %v256 = vunpack.c.l.bf16 %v224
        %v257 = vunpack.c.l.bf16 %v225
        %v258 = vunpack.c.l.bf16 %v226
        %v259 = vunpack.c.l.bf16 %v227
        %v260 = vunpack.c.l.bf16 %v228
        %v261 = vunpack.c.l.bf16 %v229
        %v262 = vunpack.c.l.bf16 %v230
        %v263 = vunpack.c.l.bf16 %v231
        %v264 = vunpack.c.l.bf16 %v232
        %v265 = vunpack.c.l.bf16 %v233
        %v266 = vunpack.c.l.bf16 %v234
        %v267 = vunpack.c.l.bf16 %v235
        %v268 = vunpack.c.l.bf16 %v236
        %v269 = vunpack.c.l.bf16 %v237
        %v270 = vunpack.c.l.bf16 %v238
        %v271 = vunpack.c.l.bf16 %v239
        %v272 = vunpack.c.l.bf16 %v240
        %v273 = vunpack.c.l.bf16 %v241
        %v274 = vunpack.c.l.bf16 %v242
        %v275 = vunpack.c.l.bf16 %v243
        %v276 = vunpack.c.l.bf16 %v244
        %v277 = vunpack.c.l.bf16 %v245
        %v278 = vunpack.c.l.bf16 %v246
        %v279 = vunpack.c.l.bf16 %v247
        %s280 = scalar_lea.vmem [#allocation2], 24
        %281 = vst [vmem:[%s280 + $0x1] sm:$0xff] %v248
        %282 = vst [vmem:[%s280 + $0x9] sm:$0xff] %v249
        %283 = vst [vmem:[%s280 + $0x19] sm:$0xff] %v250
        %284 = vst [vmem:[%s280 + $0x21] sm:$0xff] %v251
        %285 = vst [vmem:[%s280 + $0x31] sm:$0xff] %v252
        %286 = vst [vmem:[%s280 + $0x39] sm:$0xff] %v253
        %287 = vst [vmem:[%s280 + $0x49] sm:$0xff] %v254
        %288 = vst [vmem:[%s280 + $0x51] sm:$0xff] %v255
        %289 = vst [vmem:[%s280 + $0x61] sm:$0xff] %v256
        %290 = vst [vmem:[%s280 + $0x69] sm:$0xff] %v257
        %291 = vst [vmem:[%s280 + $0x79] sm:$0xff] %v258
        %292 = vst [vmem:[%s280 + $0x81] sm:$0xff] %v259
        %293 = vst [vmem:[%s280 + $0x91] sm:$0xff] %v260
        %294 = vst [vmem:[%s280 + $0x99] sm:$0xff] %v261
        %295 = vst [vmem:[%s280 + $0xa9] sm:$0xff] %v262
        %296 = vst [vmem:[%s280 + $0xb1] sm:$0xff] %v263
        %297 = vst [vmem:[%s280 + $0xc1] sm:$0xff] %v264
        %298 = vst [vmem:[%s280 + $0xc9] sm:$0xff] %v265
        %299 = vst [vmem:[%s280 + $0xd9] sm:$0xff] %v266
        %300 = vst [vmem:[%s280 + $0xe1] sm:$0xff] %v267
        %301 = vst [vmem:[%s280 + $0xf1] sm:$0xff] %v268
        %302 = vst [vmem:[%s280 + $0xf9] sm:$0xff] %v269
        %303 = vst [vmem:[%s280 + $0x109] sm:$0xff] %v270
        %304 = vst [vmem:[%s280 + $0x111] sm:$0xff] %v271
        %305 = vst [vmem:[%s280 + $0x121] sm:$0xff] %v272
        %306 = vst [vmem:[%s280 + $0x129] sm:$0xff] %v273
        %307 = vst [vmem:[%s280 + $0x139] sm:$0xff] %v274
        %308 = vst [vmem:[%s280 + $0x141] sm:$0xff] %v275
        %309 = vst [vmem:[%s280 + $0x151] sm:$0xff] %v276
        %310 = vst [vmem:[%s280 + $0x159] sm:$0xff] %v277
        %311 = vst [vmem:[%s280 + $0x169] sm:$0xff] %v278
        %312 = vst [vmem:[%s280 + $0x171] sm:$0xff] %v279
        %313 = vst [vmem:[#allocation2] sm:$0xff] 0.0
        %314 = vst [vmem:[#allocation2 + $0x8] sm:$0xff] 0.0
        %315 = vst [vmem:[#allocation2 + $0x10] sm:$0x3] 0.0
        %s316 = scalar_lea.vmem [#allocation2], 408
        %317 = vst [vmem:[%s316] sm:$0xff] 0.0
        %318 = vst [vmem:[%s316 + $0x8] sm:$0xff] 0.0
        %319 = vst [vmem:[%s316 + $0x10] sm:$0x3] 0.0
        %320 = vst [vmem:[%s280] sm:$0x1] 0.0
        %321 = vst [vmem:[%s280 + $0x18] sm:$0x1] 0.0
        %322 = vst [vmem:[%s280 + $0x30] sm:$0x1] 0.0
        %323 = vst [vmem:[%s280 + $0x48] sm:$0x1] 0.0
        %324 = vst [vmem:[%s280 + $0x60] sm:$0x1] 0.0
        %325 = vst [vmem:[%s280 + $0x78] sm:$0x1] 0.0
        %326 = vst [vmem:[%s280 + $0x90] sm:$0x1] 0.0
        %327 = vst [vmem:[%s280 + $0xa8] sm:$0x1] 0.0
        %328 = vst [vmem:[%s280 + $0xc0] sm:$0x1] 0.0
        %329 = vst [vmem:[%s280 + $0xd8] sm:$0x1] 0.0
        %330 = vst [vmem:[%s280 + $0xf0] sm:$0x1] 0.0
        %331 = vst [vmem:[%s280 + $0x108] sm:$0x1] 0.0
        %332 = vst [vmem:[%s280 + $0x120] sm:$0x1] 0.0
        %333 = vst [vmem:[%s280 + $0x138] sm:$0x1] 0.0
        %334 = vst [vmem:[%s280 + $0x150] sm:$0x1] 0.0
        %335 = vst [vmem:[%s280 + $0x168] sm:$0x1] 0.0
        %336 = vst [vmem:[%s280 + $0x11] sm:$0x1] 0.0
        %337 = vst [vmem:[%s280 + $0x29] sm:$0x1] 0.0
        %338 = vst [vmem:[%s280 + $0x41] sm:$0x1] 0.0
        %339 = vst [vmem:[%s280 + $0x59] sm:$0x1] 0.0
        %340 = vst [vmem:[%s280 + $0x71] sm:$0x1] 0.0
        %341 = vst [vmem:[%s280 + $0x89] sm:$0x1] 0.0
        %342 = vst [vmem:[%s280 + $0xa1] sm:$0x1] 0.0
        %343 = vst [vmem:[%s280 + $0xb9] sm:$0x1] 0.0
        %344 = vst [vmem:[%s280 + $0xd1] sm:$0x1] 0.0
        %345 = vst [vmem:[%s280 + $0xe9] sm:$0x1] 0.0
        %346 = vst [vmem:[%s280 + $0x101] sm:$0x1] 0.0
        %347 = vst [vmem:[%s280 + $0x119] sm:$0x1] 0.0
        %348 = vst [vmem:[%s280 + $0x131] sm:$0x1] 0.0
        %349 = vst [vmem:[%s280 + $0x149] sm:$0x1] 0.0
        %350 = vst [vmem:[%s280 + $0x161] sm:$0x1] 0.0
        %351 = vst [vmem:[%s280 + $0x179] sm:$0x1] 0.0
        %v352 = vld [vmem:[#allocation2] sm:$0xff]
        %v353 = vld [vmem:[#allocation2 + $0x8] sm:$0xff]
        %v354 = vld [vmem:[#allocation2 + $0x18] sm:$0xff]
        %v355 = vld [vmem:[#allocation2 + $0x20] sm:$0xff]
        %v356 = vld [vmem:[#allocation2 + $0x30] sm:$0xff]
        %v357 = vld [vmem:[#allocation2 + $0x38] sm:$0xff]
        %v358 = vld [vmem:[#allocation2 + $0x48] sm:$0xff]
        %v359 = vld [vmem:[#allocation2 + $0x50] sm:$0xff]
        %v360 = vld [vmem:[#allocation2 + $0x60] sm:$0xff]
        %v361 = vld [vmem:[#allocation2 + $0x68] sm:$0xff]
        %v362 = vld [vmem:[#allocation2 + $0x78] sm:$0xff]
        %v363 = vld [vmem:[#allocation2 + $0x80] sm:$0xff]
        %v364 = vld [vmem:[#allocation2 + $0x90] sm:$0xff]
        %v365 = vld [vmem:[#allocation2 + $0x98] sm:$0xff]
        %v366 = vld [vmem:[#allocation2 + $0xa8] sm:$0xff]
        %v367 = vld [vmem:[#allocation2 + $0xb0] sm:$0xff]
        %v368 = vld [vmem:[#allocation2 + $0xc0] sm:$0xff]
        %v369 = vld [vmem:[#allocation2 + $0xc8] sm:$0xff]
        %v370 = vld [vmem:[#allocation2 + $0xd8] sm:$0xff]
        %v371 = vld [vmem:[#allocation2 + $0xe0] sm:$0xff]
        %v372 = vld [vmem:[#allocation2 + $0xf0] sm:$0xff]
        %v373 = vld [vmem:[#allocation2 + $0xf8] sm:$0xff]
        %v374 = vld [vmem:[#allocation2 + $0x108] sm:$0xff]
        %v375 = vld [vmem:[#allocation2 + $0x110] sm:$0xff]
        %v376 = vld [vmem:[#allocation2 + $0x120] sm:$0xff]
        %v377 = vld [vmem:[#allocation2 + $0x128] sm:$0xff]
        %v378 = vld [vmem:[#allocation2 + $0x138] sm:$0xff]
        %v379 = vld [vmem:[#allocation2 + $0x140] sm:$0xff]
        %v380 = vld [vmem:[#allocation2 + $0x150] sm:$0xff]
        %v381 = vld [vmem:[#allocation2 + $0x158] sm:$0xff]
        %v382 = vld [vmem:[#allocation2 + $0x168] sm:$0xff]
        %v383 = vld [vmem:[#allocation2 + $0x170] sm:$0xff]
        %v384 = vpack.c.bf16 %v353, %v352
        %v385 = vpack.c.bf16 %v355, %v354
        %v386 = vpack.c.bf16 %v357, %v356
        %v387 = vpack.c.bf16 %v359, %v358
        %v388 = vpack.c.bf16 %v361, %v360
        %v389 = vpack.c.bf16 %v363, %v362
        %v390 = vpack.c.bf16 %v365, %v364
        %v391 = vpack.c.bf16 %v367, %v366
        %v392 = vpack.c.bf16 %v369, %v368
        %v393 = vpack.c.bf16 %v371, %v370
        %v394 = vpack.c.bf16 %v373, %v372
        %v395 = vpack.c.bf16 %v375, %v374
        %v396 = vpack.c.bf16 %v377, %v376
        %v397 = vpack.c.bf16 %v379, %v378
        %v398 = vpack.c.bf16 %v381, %v380
        %v399 = vpack.c.bf16 %v383, %v382
        %v400 = vld [vmem:[#allocation6] sm:$0xf]
        %v401 = vld [vmem:[#allocation6 + $0x4] sm:$0xf]
        %v402 = vld [vmem:[#allocation6 + $0x8] sm:$0xf]
        %v403 = vld [vmem:[#allocation6 + $0xc] sm:$0xf]
        %v404 = vld [vmem:[#allocation6 + $0x10] sm:$0xf]
        %v405 = vld [vmem:[#allocation6 + $0x14] sm:$0xf]
        %v406 = vld [vmem:[#allocation6 + $0x18] sm:$0xf]
        %v407 = vld [vmem:[#allocation6 + $0x1c] sm:$0xf]
        %v408 = vld [vmem:[#allocation6 + $0x20] sm:$0xf]
        %v409 = vld [vmem:[#allocation6 + $0x24] sm:$0xf]
        %v410 = vld [vmem:[#allocation6 + $0x28] sm:$0xf]
        %v411 = vld [vmem:[#allocation6 + $0x2c] sm:$0xf]
        %v412 = vld [vmem:[#allocation6 + $0x30] sm:$0xf]
        %v413 = vld [vmem:[#allocation6 + $0x34] sm:$0xf]
        %v414 = vld [vmem:[#allocation6 + $0x38] sm:$0xf]
        %v415 = vld [vmem:[#allocation6 + $0x3c] sm:$0xf]
        %v416 = vld [vmem:[#allocation2 + $0x1] sm:$0xff]
        %v417 = vld [vmem:[#allocation2 + $0x9] sm:$0xff]
        %v418 = vld [vmem:[#allocation2 + $0x19] sm:$0xff]
        %v419 = vld [vmem:[#allocation2 + $0x21] sm:$0xff]
        %v420 = vld [vmem:[#allocation2 + $0x31] sm:$0xff]
        %v421 = vld [vmem:[#allocation2 + $0x39] sm:$0xff]
        %v422 = vld [vmem:[#allocation2 + $0x49] sm:$0xff]
        %v423 = vld [vmem:[#allocation2 + $0x51] sm:$0xff]
        %v424 = vld [vmem:[#allocation2 + $0x61] sm:$0xff]
        %v425 = vld [vmem:[#allocation2 + $0x69] sm:$0xff]
        %v426 = vld [vmem:[#allocation2 + $0x79] sm:$0xff]
        %v427 = vld [vmem:[#allocation2 + $0x81] sm:$0xff]
        %v428 = vld [vmem:[#allocation2 + $0x91] sm:$0xff]
        %v429 = vld [vmem:[#allocation2 + $0x99] sm:$0xff]
        %v430 = vld [vmem:[#allocation2 + $0xa9] sm:$0xff]
        %v431 = vld [vmem:[#allocation2 + $0xb1] sm:$0xff]
        %v432 = vld [vmem:[#allocation2 + $0xc1] sm:$0xff]
        %v433 = vld [vmem:[#allocation2 + $0xc9] sm:$0xff]
        %v434 = vld [vmem:[#allocation2 + $0xd9] sm:$0xff]
        %v435 = vld [vmem:[#allocation2 + $0xe1] sm:$0xff]
        %v436 = vld [vmem:[#allocation2 + $0xf1] sm:$0xff]
        %v437 = vld [vmem:[#allocation2 + $0xf9] sm:$0xff]
        %v438 = vld [vmem:[#allocation2 + $0x109] sm:$0xff]
        %v439 = vld [vmem:[#allocation2 + $0x111] sm:$0xff]
        %v440 = vld [vmem:[#allocation2 + $0x121] sm:$0xff]
        %v441 = vld [vmem:[#allocation2 + $0x129] sm:$0xff]
        %v442 = vld [vmem:[#allocation2 + $0x139] sm:$0xff]
        %v443 = vld [vmem:[#allocation2 + $0x141] sm:$0xff]
        %v444 = vld [vmem:[#allocation2 + $0x151] sm:$0xff]
        %v445 = vld [vmem:[#allocation2 + $0x159] sm:$0xff]
        %v446 = vld [vmem:[#allocation2 + $0x169] sm:$0xff]
        %v447 = vld [vmem:[#allocation2 + $0x171] sm:$0xff]
        %v448 = vpack.c.bf16 %v417, %v416
        %v449 = vpack.c.bf16 %v419, %v418
        %v450 = vpack.c.bf16 %v421, %v420
        %v451 = vpack.c.bf16 %v423, %v422
        %v452 = vpack.c.bf16 %v425, %v424
        %v453 = vpack.c.bf16 %v427, %v426
        %v454 = vpack.c.bf16 %v429, %v428
        %v455 = vpack.c.bf16 %v431, %v430
        %v456 = vpack.c.bf16 %v433, %v432
        %v457 = vpack.c.bf16 %v435, %v434
        %v458 = vpack.c.bf16 %v437, %v436
        %v459 = vpack.c.bf16 %v439, %v438
        %v460 = vpack.c.bf16 %v441, %v440
        %v461 = vpack.c.bf16 %v443, %v442
        %v462 = vpack.c.bf16 %v445, %v444
        %v463 = vpack.c.bf16 %v447, %v446
        %s464 = scalar_lea.vmem [#allocation6], 64
        %v465 = vld [vmem:[%s464] sm:$0xf]
        %v466 = vld [vmem:[%s464 + $0x4] sm:$0xf]
        %v467 = vld [vmem:[%s464 + $0x8] sm:$0xf]
        %v468 = vld [vmem:[%s464 + $0xc] sm:$0xf]
        %v469 = vld [vmem:[%s464 + $0x10] sm:$0xf]
        %v470 = vld [vmem:[%s464 + $0x14] sm:$0xf]
        %v471 = vld [vmem:[%s464 + $0x18] sm:$0xf]
        %v472 = vld [vmem:[%s464 + $0x1c] sm:$0xf]
        %v473 = vld [vmem:[%s464 + $0x20] sm:$0xf]
        %v474 = vld [vmem:[%s464 + $0x24] sm:$0xf]
        %v475 = vld [vmem:[%s464 + $0x28] sm:$0xf]
        %v476 = vld [vmem:[%s464 + $0x2c] sm:$0xf]
        %v477 = vld [vmem:[%s464 + $0x30] sm:$0xf]
        %v478 = vld [vmem:[%s464 + $0x34] sm:$0xf]
        %v479 = vld [vmem:[%s464 + $0x38] sm:$0xf]
        %v480 = vld [vmem:[%s464 + $0x3c] sm:$0xf]
        %v497 = vunpack.c.l.b16 %v465
        %v498 = vunpack.c.l.b16 %v466
        %v499 = vunpack.c.l.b16 %v467
        %v500 = vunpack.c.l.b16 %v468
        %v501 = vunpack.c.l.b16 %v469
        %v502 = vunpack.c.l.b16 %v470
        %v503 = vunpack.c.l.b16 %v471
        %v504 = vunpack.c.l.b16 %v472
        %v505 = vunpack.c.l.b16 %v473
        %v506 = vunpack.c.l.b16 %v474
        %v507 = vunpack.c.l.b16 %v475
        %v508 = vunpack.c.l.b16 %v476
        %v509 = vunpack.c.l.b16 %v477
        %v510 = vunpack.c.l.b16 %v478
        %v511 = vunpack.c.l.b16 %v479
        %v512 = vunpack.c.l.b16 %v480
        %v513 = vpack.c.b16 %v498, %v497
        %v514 = vpack.c.b16 %v500, %v499
        %v515 = vpack.c.b16 %v502, %v501
        %v516 = vpack.c.b16 %v504, %v503
        %v517 = vpack.c.b16 %v506, %v505
        %v518 = vpack.c.b16 %v508, %v507
        %v519 = vpack.c.b16 %v510, %v509
        %v520 = vpack.c.b16 %v512, %v511
        %529 = vmatprep.subr.bf16.mxu0 0
        %530 = vmatpush1.bf16.msra.mxu0 %v513
        %531 = vmatprep.subr.bf16.mxu0 0
        %532 = vmatpush1.bf16.msra.mxu0 %v514
        %533 = vmatprep.subr.bf16.mxu0 0
        %534 = vmatpush1.bf16.msra.mxu0 %v515
        %535 = vmatprep.subr.bf16.mxu0 0
        %536 = vmatpush1.bf16.msra.mxu0 %v516
        %537 = vmatprep.subr.bf16.mxu0 0
        %538 = vmatpush1.bf16.msra.mxu0 %v517
        %539 = vmatprep.subr.bf16.mxu0 0
        %540 = vmatpush1.bf16.msra.mxu0 %v518
        %541 = vmatprep.subr.bf16.mxu0 0
        %542 = vmatpush1.bf16.msra.mxu0 %v519
        %543 = vmatprep.subr.bf16.mxu0 0
        %544 = vmatpush1.bf16.msra.mxu0 %v520
        %545 = vmatprep.subr.bf16.mxu0 0
        %546 = vmatpush1.bf16.msra.mxu0 0
        %547 = vmatprep.subr.bf16.mxu0 0
        %548 = vmatpush1.bf16.msra.mxu0 0
        %549 = vmatprep.subr.bf16.mxu0 0
        %550 = vmatpush1.bf16.msra.mxu0 0
        %551 = vmatprep.subr.bf16.mxu0 0
        %552 = vmatpush1.bf16.msra.mxu0 0
        %553 = vmatprep.subr.bf16.mxu0 0
        %554 = vmatpush1.bf16.msra.mxu0 0
        %555 = vmatprep.subr.bf16.mxu0 0
        %556 = vmatpush1.bf16.msra.mxu0 0
        %557 = vmatprep.subr.bf16.mxu0 0
        %558 = vmatpush1.bf16.msra.mxu0 0
        %559 = vmatprep.subr.bf16.mxu0 0
        %560 = vmatpush1.bf16.msra.mxu0 0
        %561 = vmatprep.mubr.bf16.mxu0 0
        %562 = vmatmul.mubr.bf16.gmra.mrb[0].mxu0 %v448
        %v563 = vpop.f32.mrb[0].mxu0
        %v564 = vadd.f32 0.0, %v563
        %v565 = vpop.f32.mrb[0].mxu0
        %v566 = vpop.f32.mrb[0].mxu0
        %v567 = vadd.f32 0.0, %v566
        %v568 = vpop.f32.mrb[0].mxu0
        %569 = vmatprep.mubr.bf16.mxu0 0
        %570 = vmatmul.mubr.bf16.gmra.mrb[0].mxu0 %v449
        %v571 = vpop.f32.mrb[0].mxu0
        %v572 = vadd.f32 0.0, %v571
        %v573 = vpop.f32.mrb[0].mxu0
        %v574 = vpop.f32.mrb[0].mxu0
        %v575 = vadd.f32 0.0, %v574
        %v576 = vpop.f32.mrb[0].mxu0
        %577 = vmatprep.mubr.bf16.mxu0 0
        %578 = vmatmul.mubr.bf16.gmra.mrb[0].mxu0 %v450
        %v579 = vpop.f32.mrb[0].mxu0
        %v580 = vadd.f32 0.0, %v579
        %v581 = vpop.f32.mrb[0].mxu0
        %v582 = vpop.f32.mrb[0].mxu0
        %v583 = vadd.f32 0.0, %v582
        %v584 = vpop.f32.mrb[0].mxu0
        %585 = vmatprep.mubr.bf16.mxu0 0
        %586 = vmatmul.mubr.bf16.gmra.mrb[0].mxu0 %v451
        %v587 = vpop.f32.mrb[0].mxu0
        %v588 = vadd.f32 0.0, %v587
        %v589 = vpop.f32.mrb[0].mxu0
        %v590 = vpop.f32.mrb[0].mxu0
        %v591 = vadd.f32 0.0, %v590
        %v592 = vpop.f32.mrb[0].mxu0
        %593 = vmatprep.mubr.bf16.mxu0 0
        %594 = vmatmul.mubr.bf16.gmra.mrb[0].mxu0 %v452
        %v595 = vpop.f32.mrb[0].mxu0
        %v596 = vadd.f32 0.0, %v595
        %v597 = vpop.f32.mrb[0].mxu0
        %v598 = vpop.f32.mrb[0].mxu0
        %v599 = vadd.f32 0.0, %v598
        %v600 = vpop.f32.mrb[0].mxu0
        %601 = vmatprep.mubr.bf16.mxu0 0
        %602 = vmatmul.mubr.bf16.gmra.mrb[0].mxu0 %v453
        %v603 = vpop.f32.mrb[0].mxu0
        %v604 = vadd.f32 0.0, %v603
        %v605 = vpop.f32.mrb[0].mxu0
        %v606 = vpop.f32.mrb[0].mxu0
        %v607 = vadd.f32 0.0, %v606
        %v608 = vpop.f32.mrb[0].mxu0
        %609 = vmatprep.mubr.bf16.mxu0 0
        %610 = vmatmul.mubr.bf16.gmra.mrb[0].mxu0 %v454
        %v611 = vpop.f32.mrb[0].mxu0
        %v612 = vadd.f32 0.0, %v611
        %v613 = vpop.f32.mrb[0].mxu0
        %v614 = vpop.f32.mrb[0].mxu0
        %v615 = vadd.f32 0.0, %v614
        %v616 = vpop.f32.mrb[0].mxu0
        %617 = vmatprep.mubr.bf16.mxu0 0
        %618 = vmatmul.mubr.bf16.gmra.mrb[0].mxu0 %v455
        %v619 = vpop.f32.mrb[0].mxu0
        %v620 = vadd.f32 0.0, %v619
        %v621 = vpop.f32.mrb[0].mxu0
        %v622 = vpop.f32.mrb[0].mxu0
        %v623 = vadd.f32 0.0, %v622
        %v624 = vpop.f32.mrb[0].mxu0
        %625 = vmatprep.mubr.bf16.mxu0 0
        %626 = vmatmul.mubr.bf16.gmra.mrb[0].mxu0 %v456
        %v627 = vpop.f32.mrb[0].mxu0
        %v628 = vadd.f32 0.0, %v627
        %v629 = vpop.f32.mrb[0].mxu0
        %v630 = vpop.f32.mrb[0].mxu0
        %v631 = vadd.f32 0.0, %v630
        %v632 = vpop.f32.mrb[0].mxu0
        %633 = vmatprep.mubr.bf16.mxu0 0
        %634 = vmatmul.mubr.bf16.gmra.mrb[0].mxu0 %v457
        %v635 = vpop.f32.mrb[0].mxu0
        %v636 = vadd.f32 0.0, %v635
        %v637 = vpop.f32.mrb[0].mxu0
        %v638 = vpop.f32.mrb[0].mxu0
        %v639 = vadd.f32 0.0, %v638
        %v640 = vpop.f32.mrb[0].mxu0
        %641 = vmatprep.mubr.bf16.mxu0 0
        %642 = vmatmul.mubr.bf16.gmra.mrb[0].mxu0 %v458
        %v643 = vpop.f32.mrb[0].mxu0
        %v644 = vadd.f32 0.0, %v643
        %v645 = vpop.f32.mrb[0].mxu0
        %v646 = vpop.f32.mrb[0].mxu0
        %v647 = vadd.f32 0.0, %v646
        %v648 = vpop.f32.mrb[0].mxu0
        %649 = vmatprep.mubr.bf16.mxu0 0
        %650 = vmatmul.mubr.bf16.gmra.mrb[0].mxu0 %v459
        %v651 = vpop.f32.mrb[0].mxu0
        %v652 = vadd.f32 0.0, %v651
        %v653 = vpop.f32.mrb[0].mxu0
        %v654 = vpop.f32.mrb[0].mxu0
        %v655 = vadd.f32 0.0, %v654
        %v656 = vpop.f32.mrb[0].mxu0
        %657 = vmatprep.mubr.bf16.mxu0 0
        %658 = vmatmul.mubr.bf16.gmra.mrb[0].mxu0 %v460
        %v659 = vpop.f32.mrb[0].mxu0
        %v660 = vadd.f32 0.0, %v659
        %v661 = vpop.f32.mrb[0].mxu0
        %v662 = vpop.f32.mrb[0].mxu0
        %v663 = vadd.f32 0.0, %v662
        %v664 = vpop.f32.mrb[0].mxu0
        %665 = vmatprep.mubr.bf16.mxu0 0
        %666 = vmatmul.mubr.bf16.gmra.mrb[0].mxu0 %v461
        %v667 = vpop.f32.mrb[0].mxu0
        %v668 = vadd.f32 0.0, %v667
        %v669 = vpop.f32.mrb[0].mxu0
        %v670 = vpop.f32.mrb[0].mxu0
        %v671 = vadd.f32 0.0, %v670
        %v672 = vpop.f32.mrb[0].mxu0
        %673 = vmatprep.mubr.bf16.mxu0 0
        %674 = vmatmul.mubr.bf16.gmra.mrb[0].mxu0 %v462
        %v675 = vpop.f32.mrb[0].mxu0
        %v676 = vadd.f32 0.0, %v675
        %v677 = vpop.f32.mrb[0].mxu0
        %v678 = vpop.f32.mrb[0].mxu0
        %v679 = vadd.f32 0.0, %v678
        %v680 = vpop.f32.mrb[0].mxu0
        %681 = vmatprep.mubr.bf16.mxu0 0
        %682 = vmatmul.mubr.bf16.gmra.mrb[0].mxu0 %v463
        %v683 = vpop.f32.mrb[0].mxu0
        %v684 = vadd.f32 0.0, %v683
        %v685 = vpop.f32.mrb[0].mxu0
        %v686 = vpop.f32.mrb[0].mxu0
        %v687 = vadd.f32 0.0, %v686
        %v688 = vpop.f32.mrb[0].mxu0
        %689 = vdwg.mxu0
        %v706 = vunpack.c.l.b16 %v400
        %v707 = vunpack.c.l.b16 %v401
        %v708 = vunpack.c.l.b16 %v402
        %v709 = vunpack.c.l.b16 %v403
        %v710 = vunpack.c.l.b16 %v404
        %v711 = vunpack.c.l.b16 %v405
        %v712 = vunpack.c.l.b16 %v406
        %v713 = vunpack.c.l.b16 %v407
        %v714 = vunpack.c.l.b16 %v408
        %v715 = vunpack.c.l.b16 %v409
        %v716 = vunpack.c.l.b16 %v410
        %v717 = vunpack.c.l.b16 %v411
        %v718 = vunpack.c.l.b16 %v412
        %v719 = vunpack.c.l.b16 %v413
        %v720 = vunpack.c.l.b16 %v414
        %v721 = vunpack.c.l.b16 %v415
        %v722 = vpack.c.b16 %v707, %v706
        %v723 = vpack.c.b16 %v709, %v708
        %v724 = vpack.c.b16 %v711, %v710
        %v725 = vpack.c.b16 %v713, %v712
        %v726 = vpack.c.b16 %v715, %v714
        %v727 = vpack.c.b16 %v717, %v716
        %v728 = vpack.c.b16 %v719, %v718
        %v729 = vpack.c.b16 %v721, %v720
        %738 = vmatprep.subr.bf16.mxu0 0
        %739 = vmatpush1.bf16.msra.mxu0 %v722
        %740 = vmatprep.subr.bf16.mxu0 0
        %741 = vmatpush1.bf16.msra.mxu0 %v723
        %742 = vmatprep.subr.bf16.mxu0 0
        %743 = vmatpush1.bf16.msra.mxu0 %v724
        %744 = vmatprep.subr.bf16.mxu0 0
        %745 = vmatpush1.bf16.msra.mxu0 %v725
        %746 = vmatprep.subr.bf16.mxu0 0
        %747 = vmatpush1.bf16.msra.mxu0 %v726
        %748 = vmatprep.subr.bf16.mxu0 0
        %749 = vmatpush1.bf16.msra.mxu0 %v727
        %750 = vmatprep.subr.bf16.mxu0 0
        %751 = vmatpush1.bf16.msra.mxu0 %v728
        %752 = vmatprep.subr.bf16.mxu0 0
        %753 = vmatpush1.bf16.msra.mxu0 %v729
        %754 = vmatprep.subr.bf16.mxu0 0
        %755 = vmatpush1.bf16.msra.mxu0 0
        %756 = vmatprep.subr.bf16.mxu0 0
        %757 = vmatpush1.bf16.msra.mxu0 0
        %758 = vmatprep.subr.bf16.mxu0 0
        %759 = vmatpush1.bf16.msra.mxu0 0
        %760 = vmatprep.subr.bf16.mxu0 0
        %761 = vmatpush1.bf16.msra.mxu0 0
        %762 = vmatprep.subr.bf16.mxu0 0
        %763 = vmatpush1.bf16.msra.mxu0 0
        %764 = vmatprep.subr.bf16.mxu0 0
        %765 = vmatpush1.bf16.msra.mxu0 0
        %766 = vmatprep.subr.bf16.mxu0 0
        %767 = vmatpush1.bf16.msra.mxu0 0
        %768 = vmatprep.subr.bf16.mxu0 0
        %769 = vmatpush1.bf16.msra.mxu0 0
        %770 = vmatprep.mubr.bf16.mxu0 0
        %771 = vmatmul.mubr.bf16.gmra.mrb[0].mxu0 %v384
        %v772 = vpop.f32.mrb[0].mxu0
        %v773 = vadd.f32 %v564, %v772
        %v774 = vpop.f32.mrb[0].mxu0
        %v775 = vpop.f32.mrb[0].mxu0
        %v776 = vadd.f32 %v567, %v775
        %v777 = vpop.f32.mrb[0].mxu0
        %778 = vmatprep.mubr.bf16.mxu0 0
        %779 = vmatmul.mubr.bf16.gmra.mrb[0].mxu0 %v385
        %v780 = vpop.f32.mrb[0].mxu0
        %v781 = vadd.f32 %v572, %v780
        %v782 = vpop.f32.mrb[0].mxu0
        %v783 = vpop.f32.mrb[0].mxu0
        %v784 = vadd.f32 %v575, %v783
        %v785 = vpop.f32.mrb[0].mxu0
        %786 = vmatprep.mubr.bf16.mxu0 0
        %787 = vmatmul.mubr.bf16.gmra.mrb[0].mxu0 %v386
        %v788 = vpop.f32.mrb[0].mxu0
        %v789 = vadd.f32 %v580, %v788
        %v790 = vpop.f32.mrb[0].mxu0
        %v791 = vpop.f32.mrb[0].mxu0
        %v792 = vadd.f32 %v583, %v791
        %v793 = vpop.f32.mrb[0].mxu0
        %794 = vmatprep.mubr.bf16.mxu0 0
        %795 = vmatmul.mubr.bf16.gmra.mrb[0].mxu0 %v387
        %v796 = vpop.f32.mrb[0].mxu0
        %v797 = vadd.f32 %v588, %v796
        %v798 = vpop.f32.mrb[0].mxu0
        %v799 = vpop.f32.mrb[0].mxu0
        %v800 = vadd.f32 %v591, %v799
        %v801 = vpop.f32.mrb[0].mxu0
        %802 = vmatprep.mubr.bf16.mxu0 0
        %803 = vmatmul.mubr.bf16.gmra.mrb[0].mxu0 %v388
        %v804 = vpop.f32.mrb[0].mxu0
        %v805 = vadd.f32 %v596, %v804
        %v806 = vpop.f32.mrb[0].mxu0
        %v807 = vpop.f32.mrb[0].mxu0
        %v808 = vadd.f32 %v599, %v807
        %v809 = vpop.f32.mrb[0].mxu0
        %810 = vmatprep.mubr.bf16.mxu0 0
        %811 = vmatmul.mubr.bf16.gmra.mrb[0].mxu0 %v389
        %v812 = vpop.f32.mrb[0].mxu0
        %v813 = vadd.f32 %v604, %v812
        %v814 = vpop.f32.mrb[0].mxu0
        %v815 = vpop.f32.mrb[0].mxu0
        %v816 = vadd.f32 %v607, %v815
        %v817 = vpop.f32.mrb[0].mxu0
        %818 = vmatprep.mubr.bf16.mxu0 0
        %819 = vmatmul.mubr.bf16.gmra.mrb[0].mxu0 %v390
        %v820 = vpop.f32.mrb[0].mxu0
        %v821 = vadd.f32 %v612, %v820
        %v822 = vpop.f32.mrb[0].mxu0
        %v823 = vpop.f32.mrb[0].mxu0
        %v824 = vadd.f32 %v615, %v823
        %v825 = vpop.f32.mrb[0].mxu0
        %826 = vmatprep.mubr.bf16.mxu0 0
        %827 = vmatmul.mubr.bf16.gmra.mrb[0].mxu0 %v391
        %v828 = vpop.f32.mrb[0].mxu0
        %v829 = vadd.f32 %v620, %v828
        %v830 = vpop.f32.mrb[0].mxu0
        %v831 = vpop.f32.mrb[0].mxu0
        %v832 = vadd.f32 %v623, %v831
        %v833 = vpop.f32.mrb[0].mxu0
        %834 = vmatprep.mubr.bf16.mxu0 0
        %835 = vmatmul.mubr.bf16.gmra.mrb[0].mxu0 %v392
        %v836 = vpop.f32.mrb[0].mxu0
        %v837 = vadd.f32 %v628, %v836
        %v838 = vpop.f32.mrb[0].mxu0
        %v839 = vpop.f32.mrb[0].mxu0
        %v840 = vadd.f32 %v631, %v839
        %v841 = vpop.f32.mrb[0].mxu0
        %842 = vmatprep.mubr.bf16.mxu0 0
        %843 = vmatmul.mubr.bf16.gmra.mrb[0].mxu0 %v393
        %v844 = vpop.f32.mrb[0].mxu0
        %v845 = vadd.f32 %v636, %v844
        %v846 = vpop.f32.mrb[0].mxu0
        %v847 = vpop.f32.mrb[0].mxu0
        %v848 = vadd.f32 %v639, %v847
        %v849 = vpop.f32.mrb[0].mxu0
        %850 = vmatprep.mubr.bf16.mxu0 0
        %851 = vmatmul.mubr.bf16.gmra.mrb[0].mxu0 %v394
        %v852 = vpop.f32.mrb[0].mxu0
        %v853 = vadd.f32 %v644, %v852
        %v854 = vpop.f32.mrb[0].mxu0
        %v855 = vpop.f32.mrb[0].mxu0
        %v856 = vadd.f32 %v647, %v855
        %v857 = vpop.f32.mrb[0].mxu0
        %858 = vmatprep.mubr.bf16.mxu0 0
        %859 = vmatmul.mubr.bf16.gmra.mrb[0].mxu0 %v395
        %v860 = vpop.f32.mrb[0].mxu0
        %v861 = vadd.f32 %v652, %v860
        %v862 = vpop.f32.mrb[0].mxu0
        %v863 = vpop.f32.mrb[0].mxu0
        %v864 = vadd.f32 %v655, %v863
        %v865 = vpop.f32.mrb[0].mxu0
        %866 = vmatprep.mubr.bf16.mxu0 0
        %867 = vmatmul.mubr.bf16.gmra.mrb[0].mxu0 %v396
        %v868 = vpop.f32.mrb[0].mxu0
        %v869 = vadd.f32 %v660, %v868
        %v870 = vpop.f32.mrb[0].mxu0
        %v871 = vpop.f32.mrb[0].mxu0
        %v872 = vadd.f32 %v663, %v871
        %v873 = vpop.f32.mrb[0].mxu0
        %874 = vmatprep.mubr.bf16.mxu0 0
        %875 = vmatmul.mubr.bf16.gmra.mrb[0].mxu0 %v397
        %v876 = vpop.f32.mrb[0].mxu0
        %v877 = vadd.f32 %v668, %v876
        %v878 = vpop.f32.mrb[0].mxu0
        %v879 = vpop.f32.mrb[0].mxu0
        %v880 = vadd.f32 %v671, %v879
        %v881 = vpop.f32.mrb[0].mxu0
        %882 = vmatprep.mubr.bf16.mxu0 0
        %883 = vmatmul.mubr.bf16.gmra.mrb[0].mxu0 %v398
        %v884 = vpop.f32.mrb[0].mxu0
        %v885 = vadd.f32 %v676, %v884
        %v886 = vpop.f32.mrb[0].mxu0
        %v887 = vpop.f32.mrb[0].mxu0
        %v888 = vadd.f32 %v679, %v887
        %v889 = vpop.f32.mrb[0].mxu0
        %890 = vmatprep.mubr.bf16.mxu0 0
        %891 = vmatmul.mubr.bf16.gmra.mrb[0].mxu0 %v399
        %v892 = vpop.f32.mrb[0].mxu0
        %v893 = vadd.f32 %v684, %v892
        %v894 = vpop.f32.mrb[0].mxu0
        %v895 = vpop.f32.mrb[0].mxu0
        %v896 = vadd.f32 %v687, %v895
        %v897 = vpop.f32.mrb[0].mxu0
        %898 = vdwg.mxu0
        %v899 = vld [vmem:[#allocation2 + $0x2] sm:$0xff]
        %v900 = vld [vmem:[#allocation2 + $0xa] sm:$0xff]
        %v901 = vld [vmem:[#allocation2 + $0x1a] sm:$0xff]
        %v902 = vld [vmem:[#allocation2 + $0x22] sm:$0xff]
        %v903 = vld [vmem:[#allocation2 + $0x32] sm:$0xff]
        %v904 = vld [vmem:[#allocation2 + $0x3a] sm:$0xff]
        %v905 = vld [vmem:[#allocation2 + $0x4a] sm:$0xff]
        %v906 = vld [vmem:[#allocation2 + $0x52] sm:$0xff]
        %v907 = vld [vmem:[#allocation2 + $0x62] sm:$0xff]
        %v908 = vld [vmem:[#allocation2 + $0x6a] sm:$0xff]
        %v909 = vld [vmem:[#allocation2 + $0x7a] sm:$0xff]
        %v910 = vld [vmem:[#allocation2 + $0x82] sm:$0xff]
        %v911 = vld [vmem:[#allocation2 + $0x92] sm:$0xff]
        %v912 = vld [vmem:[#allocation2 + $0x9a] sm:$0xff]
        %v913 = vld [vmem:[#allocation2 + $0xaa] sm:$0xff]
        %v914 = vld [vmem:[#allocation2 + $0xb2] sm:$0xff]
        %v915 = vld [vmem:[#allocation2 + $0xc2] sm:$0xff]
        %v916 = vld [vmem:[#allocation2 + $0xca] sm:$0xff]
        %v917 = vld [vmem:[#allocation2 + $0xda] sm:$0xff]
        %v918 = vld [vmem:[#allocation2 + $0xe2] sm:$0xff]
        %v919 = vld [vmem:[#allocation2 + $0xf2] sm:$0xff]
        %v920 = vld [vmem:[#allocation2 + $0xfa] sm:$0xff]
        %v921 = vld [vmem:[#allocation2 + $0x10a] sm:$0xff]
        %v922 = vld [vmem:[#allocation2 + $0x112] sm:$0xff]
        %v923 = vld [vmem:[#allocation2 + $0x122] sm:$0xff]
        %v924 = vld [vmem:[#allocation2 + $0x12a] sm:$0xff]
        %v925 = vld [vmem:[#allocation2 + $0x13a] sm:$0xff]
        %v926 = vld [vmem:[#allocation2 + $0x142] sm:$0xff]
        %v927 = vld [vmem:[#allocation2 + $0x152] sm:$0xff]
        %v928 = vld [vmem:[#allocation2 + $0x15a] sm:$0xff]
        %v929 = vld [vmem:[#allocation2 + $0x16a] sm:$0xff]
        %v930 = vld [vmem:[#allocation2 + $0x172] sm:$0xff]
        %v931 = vpack.c.bf16 %v900, %v899
        %v932 = vpack.c.bf16 %v902, %v901
        %v933 = vpack.c.bf16 %v904, %v903
        %v934 = vpack.c.bf16 %v906, %v905
        %v935 = vpack.c.bf16 %v908, %v907
        %v936 = vpack.c.bf16 %v910, %v909
        %v937 = vpack.c.bf16 %v912, %v911
        %v938 = vpack.c.bf16 %v914, %v913
        %v939 = vpack.c.bf16 %v916, %v915
        %v940 = vpack.c.bf16 %v918, %v917
        %v941 = vpack.c.bf16 %v920, %v919
        %v942 = vpack.c.bf16 %v922, %v921
        %v943 = vpack.c.bf16 %v924, %v923
        %v944 = vpack.c.bf16 %v926, %v925
        %v945 = vpack.c.bf16 %v928, %v927
        %v946 = vpack.c.bf16 %v930, %v929
        %s947 = scalar_lea.vmem [#allocation6], 128
        %v948 = vld [vmem:[%s947] sm:$0xf]
        %v949 = vld [vmem:[%s947 + $0x4] sm:$0xf]
        %v950 = vld [vmem:[%s947 + $0x8] sm:$0xf]
        %v951 = vld [vmem:[%s947 + $0xc] sm:$0xf]
        %v952 = vld [vmem:[%s947 + $0x10] sm:$0xf]
        %v953 = vld [vmem:[%s947 + $0x14] sm:$0xf]
        %v954 = vld [vmem:[%s947 + $0x18] sm:$0xf]
        %v955 = vld [vmem:[%s947 + $0x1c] sm:$0xf]
        %v956 = vld [vmem:[%s947 + $0x20] sm:$0xf]
        %v957 = vld [vmem:[%s947 + $0x24] sm:$0xf]
        %v958 = vld [vmem:[%s947 + $0x28] sm:$0xf]
        %v959 = vld [vmem:[%s947 + $0x2c] sm:$0xf]
        %v960 = vld [vmem:[%s947 + $0x30] sm:$0xf]
        %v961 = vld [vmem:[%s947 + $0x34] sm:$0xf]
        %v962 = vld [vmem:[%s947 + $0x38] sm:$0xf]
        %v963 = vld [vmem:[%s947 + $0x3c] sm:$0xf]
        %v980 = vunpack.c.l.b16 %v948
        %v981 = vunpack.c.l.b16 %v949
        %v982 = vunpack.c.l.b16 %v950
        %v983 = vunpack.c.l.b16 %v951
        %v984 = vunpack.c.l.b16 %v952
        %v985 = vunpack.c.l.b16 %v953
        %v986 = vunpack.c.l.b16 %v954
        %v987 = vunpack.c.l.b16 %v955
        %v988 = vunpack.c.l.b16 %v956
        %v989 = vunpack.c.l.b16 %v957
        %v990 = vunpack.c.l.b16 %v958
        %v991 = vunpack.c.l.b16 %v959
        %v992 = vunpack.c.l.b16 %v960
        %v993 = vunpack.c.l.b16 %v961
        %v994 = vunpack.c.l.b16 %v962
        %v995 = vunpack.c.l.b16 %v963
        %v996 = vpack.c.b16 %v981, %v980
        %v997 = vpack.c.b16 %v983, %v982
        %v998 = vpack.c.b16 %v985, %v984
        %v999 = vpack.c.b16 %v987, %v986
        %v1000 = vpack.c.b16 %v989, %v988
        %v1001 = vpack.c.b16 %v991, %v990
        %v1002 = vpack.c.b16 %v993, %v992
        %v1003 = vpack.c.b16 %v995, %v994
        %1012 = vmatprep.subr.bf16.mxu0 0
        %1013 = vmatpush1.bf16.msra.mxu0 %v996
        %1014 = vmatprep.subr.bf16.mxu0 0
        %1015 = vmatpush1.bf16.msra.mxu0 %v997
        %1016 = vmatprep.subr.bf16.mxu0 0
        %1017 = vmatpush1.bf16.msra.mxu0 %v998
        %1018 = vmatprep.subr.bf16.mxu0 0
        %1019 = vmatpush1.bf16.msra.mxu0 %v999
        %1020 = vmatprep.subr.bf16.mxu0 0
        %1021 = vmatpush1.bf16.msra.mxu0 %v1000
        %1022 = vmatprep.subr.bf16.mxu0 0
        %1023 = vmatpush1.bf16.msra.mxu0 %v1001
        %1024 = vmatprep.subr.bf16.mxu0 0
        %1025 = vmatpush1.bf16.msra.mxu0 %v1002
        %1026 = vmatprep.subr.bf16.mxu0 0
        %1027 = vmatpush1.bf16.msra.mxu0 %v1003
        %1028 = vmatprep.subr.bf16.mxu0 0
        %1029 = vmatpush1.bf16.msra.mxu0 0
        %1030 = vmatprep.subr.bf16.mxu0 0
        %1031 = vmatpush1.bf16.msra.mxu0 0
        %1032 = vmatprep.subr.bf16.mxu0 0
        %1033 = vmatpush1.bf16.msra.mxu0 0
        %1034 = vmatprep.subr.bf16.mxu0 0
        %1035 = vmatpush1.bf16.msra.mxu0 0
        %1036 = vmatprep.subr.bf16.mxu0 0
        %1037 = vmatpush1.bf16.msra.mxu0 0
        %1038 = vmatprep.subr.bf16.mxu0 0
        %1039 = vmatpush1.bf16.msra.mxu0 0
        %1040 = vmatprep.subr.bf16.mxu0 0
        %1041 = vmatpush1.bf16.msra.mxu0 0
        %1042 = vmatprep.subr.bf16.mxu0 0
        %1043 = vmatpush1.bf16.msra.mxu0 0
        %1044 = vmatprep.mubr.bf16.mxu0 0
        %1045 = vmatmul.mubr.bf16.gmra.mrb[0].mxu0 %v931
        %v1046 = vpop.f32.mrb[0].mxu0
        %v1047 = vadd.f32 0.0, %v1046
        %v1048 = vpop.f32.mrb[0].mxu0
        %v1049 = vpop.f32.mrb[0].mxu0
        %v1050 = vadd.f32 0.0, %v1049
        %v1051 = vpop.f32.mrb[0].mxu0
        %1052 = vmatprep.mubr.bf16.mxu0 0
        %1053 = vmatmul.mubr.bf16.gmra.mrb[0].mxu0 %v932
        %v1054 = vpop.f32.mrb[0].mxu0
        %v1055 = vadd.f32 0.0, %v1054
        %v1056 = vpop.f32.mrb[0].mxu0
        %v1057 = vpop.f32.mrb[0].mxu0
        %v1058 = vadd.f32 0.0, %v1057
        %v1059 = vpop.f32.mrb[0].mxu0
        %1060 = vmatprep.mubr.bf16.mxu0 0
        %1061 = vmatmul.mubr.bf16.gmra.mrb[0].mxu0 %v933
        %v1062 = vpop.f32.mrb[0].mxu0
        %v1063 = vadd.f32 0.0, %v1062
        %v1064 = vpop.f32.mrb[0].mxu0
        %v1065 = vpop.f32.mrb[0].mxu0
        %v1066 = vadd.f32 0.0, %v1065
        %v1067 = vpop.f32.mrb[0].mxu0
        %1068 = vmatprep.mubr.bf16.mxu0 0
        %1069 = vmatmul.mubr.bf16.gmra.mrb[0].mxu0 %v934
        %v1070 = vpop.f32.mrb[0].mxu0
        %v1071 = vadd.f32 0.0, %v1070
        %v1072 = vpop.f32.mrb[0].mxu0
        %v1073 = vpop.f32.mrb[0].mxu0
        %v1074 = vadd.f32 0.0, %v1073
        %v1075 = vpop.f32.mrb[0].mxu0
        %1076 = vmatprep.mubr.bf16.mxu0 0
        %1077 = vmatmul.mubr.bf16.gmra.mrb[0].mxu0 %v935
        %v1078 = vpop.f32.mrb[0].mxu0
        %v1079 = vadd.f32 0.0, %v1078
        %v1080 = vpop.f32.mrb[0].mxu0
        %v1081 = vpop.f32.mrb[0].mxu0
        %v1082 = vadd.f32 0.0, %v1081
        %v1083 = vpop.f32.mrb[0].mxu0
        %1084 = vmatprep.mubr.bf16.mxu0 0
        %1085 = vmatmul.mubr.bf16.gmra.mrb[0].mxu0 %v936
        %v1086 = vpop.f32.mrb[0].mxu0
        %v1087 = vadd.f32 0.0, %v1086
        %v1088 = vpop.f32.mrb[0].mxu0
        %v1089 = vpop.f32.mrb[0].mxu0
        %v1090 = vadd.f32 0.0, %v1089
        %v1091 = vpop.f32.mrb[0].mxu0
        %1092 = vmatprep.mubr.bf16.mxu0 0
        %1093 = vmatmul.mubr.bf16.gmra.mrb[0].mxu0 %v937
        %v1094 = vpop.f32.mrb[0].mxu0
        %v1095 = vadd.f32 0.0, %v1094
        %v1096 = vpop.f32.mrb[0].mxu0
        %v1097 = vpop.f32.mrb[0].mxu0
        %v1098 = vadd.f32 0.0, %v1097
        %v1099 = vpop.f32.mrb[0].mxu0
        %1100 = vmatprep.mubr.bf16.mxu0 0
        %1101 = vmatmul.mubr.bf16.gmra.mrb[0].mxu0 %v938
        %v1102 = vpop.f32.mrb[0].mxu0
        %v1103 = vadd.f32 0.0, %v1102
        %v1104 = vpop.f32.mrb[0].mxu0
        %v1105 = vpop.f32.mrb[0].mxu0
        %v1106 = vadd.f32 0.0, %v1105
        %v1107 = vpop.f32.mrb[0].mxu0
        %1108 = vmatprep.mubr.bf16.mxu0 0
        %1109 = vmatmul.mubr.bf16.gmra.mrb[0].mxu0 %v939
        %v1110 = vpop.f32.mrb[0].mxu0
        %v1111 = vadd.f32 0.0, %v1110
        %v1112 = vpop.f32.mrb[0].mxu0
        %v1113 = vpop.f32.mrb[0].mxu0
        %v1114 = vadd.f32 0.0, %v1113
        %v1115 = vpop.f32.mrb[0].mxu0
        %1116 = vmatprep.mubr.bf16.mxu0 0
        %1117 = vmatmul.mubr.bf16.gmra.mrb[0].mxu0 %v940
        %v1118 = vpop.f32.mrb[0].mxu0
        %v1119 = vadd.f32 0.0, %v1118
        %v1120 = vpop.f32.mrb[0].mxu0
        %v1121 = vpop.f32.mrb[0].mxu0
        %v1122 = vadd.f32 0.0, %v1121
        %v1123 = vpop.f32.mrb[0].mxu0
        %1124 = vmatprep.mubr.bf16.mxu0 0
        %1125 = vmatmul.mubr.bf16.gmra.mrb[0].mxu0 %v941
        %v1126 = vpop.f32.mrb[0].mxu0
        %v1127 = vadd.f32 0.0, %v1126
        %v1128 = vpop.f32.mrb[0].mxu0
        %v1129 = vpop.f32.mrb[0].mxu0
        %v1130 = vadd.f32 0.0, %v1129
        %v1131 = vpop.f32.mrb[0].mxu0
        %1132 = vmatprep.mubr.bf16.mxu0 0
        %1133 = vmatmul.mubr.bf16.gmra.mrb[0].mxu0 %v942
        %v1134 = vpop.f32.mrb[0].mxu0
        %v1135 = vadd.f32 0.0, %v1134
        %v1136 = vpop.f32.mrb[0].mxu0
        %v1137 = vpop.f32.mrb[0].mxu0
        %v1138 = vadd.f32 0.0, %v1137
        %v1139 = vpop.f32.mrb[0].mxu0
        %1140 = vmatprep.mubr.bf16.mxu0 0
        %1141 = vmatmul.mubr.bf16.gmra.mrb[0].mxu0 %v943
        %v1142 = vpop.f32.mrb[0].mxu0
        %v1143 = vadd.f32 0.0, %v1142
        %v1144 = vpop.f32.mrb[0].mxu0
        %v1145 = vpop.f32.mrb[0].mxu0
        %v1146 = vadd.f32 0.0, %v1145
        %v1147 = vpop.f32.mrb[0].mxu0
        %1148 = vmatprep.mubr.bf16.mxu0 0
        %1149 = vmatmul.mubr.bf16.gmra.mrb[0].mxu0 %v944
        %v1150 = vpop.f32.mrb[0].mxu0
        %v1151 = vadd.f32 0.0, %v1150
        %v1152 = vpop.f32.mrb[0].mxu0
        %v1153 = vpop.f32.mrb[0].mxu0
        %v1154 = vadd.f32 0.0, %v1153
        %v1155 = vpop.f32.mrb[0].mxu0
        %1156 = vmatprep.mubr.bf16.mxu0 0
        %1157 = vmatmul.mubr.bf16.gmra.mrb[0].mxu0 %v945
        %v1158 = vpop.f32.mrb[0].mxu0
        %v1159 = vadd.f32 0.0, %v1158
        %v1160 = vpop.f32.mrb[0].mxu0
        %v1161 = vpop.f32.mrb[0].mxu0
        %v1162 = vadd.f32 0.0, %v1161
        %v1163 = vpop.f32.mrb[0].mxu0
        %1164 = vmatprep.mubr.bf16.mxu0 0
        %1165 = vmatmul.mubr.bf16.gmra.mrb[0].mxu0 %v946
        %v1166 = vpop.f32.mrb[0].mxu0
        %v1167 = vadd.f32 0.0, %v1166
        %v1168 = vpop.f32.mrb[0].mxu0
        %v1169 = vpop.f32.mrb[0].mxu0
        %v1170 = vadd.f32 0.0, %v1169
        %v1171 = vpop.f32.mrb[0].mxu0
        %1172 = vdwg.mxu0
        %v1173 = vadd.f32 %v773, %v1047
        %v1174 = vadd.f32 %v776, %v1050
        %v1175 = vadd.f32 %v781, %v1055
        %v1176 = vadd.f32 %v784, %v1058
        %v1177 = vadd.f32 %v789, %v1063
        %v1178 = vadd.f32 %v792, %v1066
        %v1179 = vadd.f32 %v797, %v1071
        %v1180 = vadd.f32 %v800, %v1074
        %v1181 = vadd.f32 %v805, %v1079
        %v1182 = vadd.f32 %v808, %v1082
        %v1183 = vadd.f32 %v813, %v1087
        %v1184 = vadd.f32 %v816, %v1090
        %v1185 = vadd.f32 %v821, %v1095
        %v1186 = vadd.f32 %v824, %v1098
        %v1187 = vadd.f32 %v829, %v1103
        %v1188 = vadd.f32 %v832, %v1106
        %v1189 = vadd.f32 %v837, %v1111
        %v1190 = vadd.f32 %v840, %v1114
        %v1191 = vadd.f32 %v845, %v1119
        %v1192 = vadd.f32 %v848, %v1122
        %v1193 = vadd.f32 %v853, %v1127
        %v1194 = vadd.f32 %v856, %v1130
        %v1195 = vadd.f32 %v861, %v1135
        %v1196 = vadd.f32 %v864, %v1138
        %v1197 = vadd.f32 %v869, %v1143
        %v1198 = vadd.f32 %v872, %v1146
        %v1199 = vadd.f32 %v877, %v1151
        %v1200 = vadd.f32 %v880, %v1154
        %v1201 = vadd.f32 %v885, %v1159
        %v1202 = vadd.f32 %v888, %v1162
        %v1203 = vadd.f32 %v893, %v1167
        %v1204 = vadd.f32 %v896, %v1170
        %v1205 = vld [vmem:[%s280] sm:$0xff]
        %v1206 = vld [vmem:[%s280 + $0x8] sm:$0xff]
        %v1207 = vld [vmem:[%s280 + $0x18] sm:$0xff]
        %v1208 = vld [vmem:[%s280 + $0x20] sm:$0xff]
        %v1209 = vld [vmem:[%s280 + $0x30] sm:$0xff]
        %v1210 = vld [vmem:[%s280 + $0x38] sm:$0xff]
        %v1211 = vld [vmem:[%s280 + $0x48] sm:$0xff]
        %v1212 = vld [vmem:[%s280 + $0x50] sm:$0xff]
        %v1213 = vld [vmem:[%s280 + $0x60] sm:$0xff]
        %v1214 = vld [vmem:[%s280 + $0x68] sm:$0xff]
        %v1215 = vld [vmem:[%s280 + $0x78] sm:$0xff]
        %v1216 = vld [vmem:[%s280 + $0x80] sm:$0xff]
        %v1217 = vld [vmem:[%s280 + $0x90] sm:$0xff]
        %v1218 = vld [vmem:[%s280 + $0x98] sm:$0xff]
        %v1219 = vld [vmem:[%s280 + $0xa8] sm:$0xff]
        %v1220 = vld [vmem:[%s280 + $0xb0] sm:$0xff]
        %v1221 = vld [vmem:[%s280 + $0xc0] sm:$0xff]
        %v1222 = vld [vmem:[%s280 + $0xc8] sm:$0xff]
        %v1223 = vld [vmem:[%s280 + $0xd8] sm:$0xff]
        %v1224 = vld [vmem:[%s280 + $0xe0] sm:$0xff]
        %v1225 = vld [vmem:[%s280 + $0xf0] sm:$0xff]
        %v1226 = vld [vmem:[%s280 + $0xf8] sm:$0xff]
        %v1227 = vld [vmem:[%s280 + $0x108] sm:$0xff]
        %v1228 = vld [vmem:[%s280 + $0x110] sm:$0xff]
        %v1229 = vld [vmem:[%s280 + $0x120] sm:$0xff]
        %v1230 = vld [vmem:[%s280 + $0x128] sm:$0xff]
        %v1231 = vld [vmem:[%s280 + $0x138] sm:$0xff]
        %v1232 = vld [vmem:[%s280 + $0x140] sm:$0xff]
        %v1233 = vld [vmem:[%s280 + $0x150] sm:$0xff]
        %v1234 = vld [vmem:[%s280 + $0x158] sm:$0xff]
        %v1235 = vld [vmem:[%s280 + $0x168] sm:$0xff]
        %v1236 = vld [vmem:[%s280 + $0x170] sm:$0xff]
        %v1237 = vpack.c.bf16 %v1206, %v1205
        %v1238 = vpack.c.bf16 %v1208, %v1207
        %v1239 = vpack.c.bf16 %v1210, %v1209
        %v1240 = vpack.c.bf16 %v1212, %v1211
        %v1241 = vpack.c.bf16 %v1214, %v1213
        %v1242 = vpack.c.bf16 %v1216, %v1215
        %v1243 = vpack.c.bf16 %v1218, %v1217
        %v1244 = vpack.c.bf16 %v1220, %v1219
        %v1245 = vpack.c.bf16 %v1222, %v1221
        %v1246 = vpack.c.bf16 %v1224, %v1223
        %v1247 = vpack.c.bf16 %v1226, %v1225
        %v1248 = vpack.c.bf16 %v1228, %v1227
        %v1249 = vpack.c.bf16 %v1230, %v1229
        %v1250 = vpack.c.bf16 %v1232, %v1231
        %v1251 = vpack.c.bf16 %v1234, %v1233
        %v1252 = vpack.c.bf16 %v1236, %v1235
        %s1253 = scalar_lea.vmem [#allocation6], 192
        %v1254 = vld [vmem:[%s1253] sm:$0xf]
        %v1255 = vld [vmem:[%s1253 + $0x4] sm:$0xf]
        %v1256 = vld [vmem:[%s1253 + $0x8] sm:$0xf]
        %v1257 = vld [vmem:[%s1253 + $0xc] sm:$0xf]
        %v1258 = vld [vmem:[%s1253 + $0x10] sm:$0xf]
        %v1259 = vld [vmem:[%s1253 + $0x14] sm:$0xf]
        %v1260 = vld [vmem:[%s1253 + $0x18] sm:$0xf]
        %v1261 = vld [vmem:[%s1253 + $0x1c] sm:$0xf]
        %v1262 = vld [vmem:[%s1253 + $0x20] sm:$0xf]
        %v1263 = vld [vmem:[%s1253 + $0x24] sm:$0xf]
        %v1264 = vld [vmem:[%s1253 + $0x28] sm:$0xf]
        %v1265 = vld [vmem:[%s1253 + $0x2c] sm:$0xf]
        %v1266 = vld [vmem:[%s1253 + $0x30] sm:$0xf]
        %v1267 = vld [vmem:[%s1253 + $0x34] sm:$0xf]
        %v1268 = vld [vmem:[%s1253 + $0x38] sm:$0xf]
        %v1269 = vld [vmem:[%s1253 + $0x3c] sm:$0xf]
        %v1286 = vunpack.c.l.b16 %v1254
        %v1287 = vunpack.c.l.b16 %v1255
        %v1288 = vunpack.c.l.b16 %v1256
        %v1289 = vunpack.c.l.b16 %v1257
        %v1290 = vunpack.c.l.b16 %v1258
        %v1291 = vunpack.c.l.b16 %v1259
        %v1292 = vunpack.c.l.b16 %v1260
        %v1293 = vunpack.c.l.b16 %v1261
        %v1294 = vunpack.c.l.b16 %v1262
        %v1295 = vunpack.c.l.b16 %v1263
        %v1296 = vunpack.c.l.b16 %v1264
        %v1297 = vunpack.c.l.b16 %v1265
        %v1298 = vunpack.c.l.b16 %v1266
        %v1299 = vunpack.c.l.b16 %v1267
        %v1300 = vunpack.c.l.b16 %v1268
        %v1301 = vunpack.c.l.b16 %v1269
        %v1302 = vpack.c.b16 %v1287, %v1286
        %v1303 = vpack.c.b16 %v1289, %v1288
        %v1304 = vpack.c.b16 %v1291, %v1290
        %v1305 = vpack.c.b16 %v1293, %v1292
        %v1306 = vpack.c.b16 %v1295, %v1294
        %v1307 = vpack.c.b16 %v1297, %v1296
        %v1308 = vpack.c.b16 %v1299, %v1298
        %v1309 = vpack.c.b16 %v1301, %v1300
        %1318 = vmatprep.subr.bf16.mxu0 0
        %1319 = vmatpush1.bf16.msra.mxu0 %v1302
        %1320 = vmatprep.subr.bf16.mxu0 0
        %1321 = vmatpush1.bf16.msra.mxu0 %v1303
        %1322 = vmatprep.subr.bf16.mxu0 0
        %1323 = vmatpush1.bf16.msra.mxu0 %v1304
        %1324 = vmatprep.subr.bf16.mxu0 0
        %1325 = vmatpush1.bf16.msra.mxu0 %v1305
        %1326 = vmatprep.subr.bf16.mxu0 0
        %1327 = vmatpush1.bf16.msra.mxu0 %v1306
        %1328 = vmatprep.subr.bf16.mxu0 0
        %1329 = vmatpush1.bf16.msra.mxu0 %v1307
        %1330 = vmatprep.subr.bf16.mxu0 0
        %1331 = vmatpush1.bf16.msra.mxu0 %v1308
        %1332 = vmatprep.subr.bf16.mxu0 0
        %1333 = vmatpush1.bf16.msra.mxu0 %v1309
        %1334 = vmatprep.subr.bf16.mxu0 0
        %1335 = vmatpush1.bf16.msra.mxu0 0
        %1336 = vmatprep.subr.bf16.mxu0 0
        %1337 = vmatpush1.bf16.msra.mxu0 0
        %1338 = vmatprep.subr.bf16.mxu0 0
        %1339 = vmatpush1.bf16.msra.mxu0 0
        %1340 = vmatprep.subr.bf16.mxu0 0
        %1341 = vmatpush1.bf16.msra.mxu0 0
        %1342 = vmatprep.subr.bf16.mxu0 0
        %1343 = vmatpush1.bf16.msra.mxu0 0
        %1344 = vmatprep.subr.bf16.mxu0 0
        %1345 = vmatpush1.bf16.msra.mxu0 0
        %1346 = vmatprep.subr.bf16.mxu0 0
        %1347 = vmatpush1.bf16.msra.mxu0 0
        %1348 = vmatprep.subr.bf16.mxu0 0
        %1349 = vmatpush1.bf16.msra.mxu0 0
        %1350 = vmatprep.mubr.bf16.mxu0 0
        %1351 = vmatmul.mubr.bf16.gmra.mrb[0].mxu0 %v1237
        %v1352 = vpop.f32.mrb[0].mxu0
        %v1353 = vadd.f32 0.0, %v1352
        %v1354 = vpop.f32.mrb[0].mxu0
        %v1355 = vpop.f32.mrb[0].mxu0
        %v1356 = vadd.f32 0.0, %v1355
        %v1357 = vpop.f32.mrb[0].mxu0
        %1358 = vmatprep.mubr.bf16.mxu0 0
        %1359 = vmatmul.mubr.bf16.gmra.mrb[0].mxu0 %v1238
        %v1360 = vpop.f32.mrb[0].mxu0
        %v1361 = vadd.f32 0.0, %v1360
        %v1362 = vpop.f32.mrb[0].mxu0
        %v1363 = vpop.f32.mrb[0].mxu0
        %v1364 = vadd.f32 0.0, %v1363
        %v1365 = vpop.f32.mrb[0].mxu0
        %1366 = vmatprep.mubr.bf16.mxu0 0
        %1367 = vmatmul.mubr.bf16.gmra.mrb[0].mxu0 %v1239
        %v1368 = vpop.f32.mrb[0].mxu0
        %v1369 = vadd.f32 0.0, %v1368
        %v1370 = vpop.f32.mrb[0].mxu0
        %v1371 = vpop.f32.mrb[0].mxu0
        %v1372 = vadd.f32 0.0, %v1371
        %v1373 = vpop.f32.mrb[0].mxu0
        %1374 = vmatprep.mubr.bf16.mxu0 0
        %1375 = vmatmul.mubr.bf16.gmra.mrb[0].mxu0 %v1240
        %v1376 = vpop.f32.mrb[0].mxu0
        %v1377 = vadd.f32 0.0, %v1376
        %v1378 = vpop.f32.mrb[0].mxu0
        %v1379 = vpop.f32.mrb[0].mxu0
        %v1380 = vadd.f32 0.0, %v1379
        %v1381 = vpop.f32.mrb[0].mxu0
        %1382 = vmatprep.mubr.bf16.mxu0 0
        %1383 = vmatmul.mubr.bf16.gmra.mrb[0].mxu0 %v1241
        %v1384 = vpop.f32.mrb[0].mxu0
        %v1385 = vadd.f32 0.0, %v1384
        %v1386 = vpop.f32.mrb[0].mxu0
        %v1387 = vpop.f32.mrb[0].mxu0
        %v1388 = vadd.f32 0.0, %v1387
        %v1389 = vpop.f32.mrb[0].mxu0
        %1390 = vmatprep.mubr.bf16.mxu0 0
        %1391 = vmatmul.mubr.bf16.gmra.mrb[0].mxu0 %v1242
        %v1392 = vpop.f32.mrb[0].mxu0
        %v1393 = vadd.f32 0.0, %v1392
        %v1394 = vpop.f32.mrb[0].mxu0
        %v1395 = vpop.f32.mrb[0].mxu0
        %v1396 = vadd.f32 0.0, %v1395
        %v1397 = vpop.f32.mrb[0].mxu0
        %1398 = vmatprep.mubr.bf16.mxu0 0
        %1399 = vmatmul.mubr.bf16.gmra.mrb[0].mxu0 %v1243
        %v1400 = vpop.f32.mrb[0].mxu0
        %v1401 = vadd.f32 0.0, %v1400
        %v1402 = vpop.f32.mrb[0].mxu0
        %v1403 = vpop.f32.mrb[0].mxu0
        %v1404 = vadd.f32 0.0, %v1403
        %v1405 = vpop.f32.mrb[0].mxu0
        %1406 = vmatprep.mubr.bf16.mxu0 0
        %1407 = vmatmul.mubr.bf16.gmra.mrb[0].mxu0 %v1244
        %v1408 = vpop.f32.mrb[0].mxu0
        %v1409 = vadd.f32 0.0, %v1408
        %v1410 = vpop.f32.mrb[0].mxu0
        %v1411 = vpop.f32.mrb[0].mxu0
        %v1412 = vadd.f32 0.0, %v1411
        %v1413 = vpop.f32.mrb[0].mxu0
        %1414 = vmatprep.mubr.bf16.mxu0 0
        %1415 = vmatmul.mubr.bf16.gmra.mrb[0].mxu0 %v1245
        %v1416 = vpop.f32.mrb[0].mxu0
        %v1417 = vadd.f32 0.0, %v1416
        %v1418 = vpop.f32.mrb[0].mxu0
        %v1419 = vpop.f32.mrb[0].mxu0
        %v1420 = vadd.f32 0.0, %v1419
        %v1421 = vpop.f32.mrb[0].mxu0
        %1422 = vmatprep.mubr.bf16.mxu0 0
        %1423 = vmatmul.mubr.bf16.gmra.mrb[0].mxu0 %v1246
        %v1424 = vpop.f32.mrb[0].mxu0
        %v1425 = vadd.f32 0.0, %v1424
        %v1426 = vpop.f32.mrb[0].mxu0
        %v1427 = vpop.f32.mrb[0].mxu0
        %v1428 = vadd.f32 0.0, %v1427
        %v1429 = vpop.f32.mrb[0].mxu0
        %1430 = vmatprep.mubr.bf16.mxu0 0
        %1431 = vmatmul.mubr.bf16.gmra.mrb[0].mxu0 %v1247
        %v1432 = vpop.f32.mrb[0].mxu0
        %v1433 = vadd.f32 0.0, %v1432
        %v1434 = vpop.f32.mrb[0].mxu0
        %v1435 = vpop.f32.mrb[0].mxu0
        %v1436 = vadd.f32 0.0, %v1435
        %v1437 = vpop.f32.mrb[0].mxu0
        %1438 = vmatprep.mubr.bf16.mxu0 0
        %1439 = vmatmul.mubr.bf16.gmra.mrb[0].mxu0 %v1248
        %v1440 = vpop.f32.mrb[0].mxu0
        %v1441 = vadd.f32 0.0, %v1440
        %v1442 = vpop.f32.mrb[0].mxu0
        %v1443 = vpop.f32.mrb[0].mxu0
        %v1444 = vadd.f32 0.0, %v1443
        %v1445 = vpop.f32.mrb[0].mxu0
        %1446 = vmatprep.mubr.bf16.mxu0 0
        %1447 = vmatmul.mubr.bf16.gmra.mrb[0].mxu0 %v1249
        %v1448 = vpop.f32.mrb[0].mxu0
        %v1449 = vadd.f32 0.0, %v1448
        %v1450 = vpop.f32.mrb[0].mxu0
        %v1451 = vpop.f32.mrb[0].mxu0
        %v1452 = vadd.f32 0.0, %v1451
        %v1453 = vpop.f32.mrb[0].mxu0
        %1454 = vmatprep.mubr.bf16.mxu0 0
        %1455 = vmatmul.mubr.bf16.gmra.mrb[0].mxu0 %v1250
        %v1456 = vpop.f32.mrb[0].mxu0
        %v1457 = vadd.f32 0.0, %v1456
        %v1458 = vpop.f32.mrb[0].mxu0
        %v1459 = vpop.f32.mrb[0].mxu0
        %v1460 = vadd.f32 0.0, %v1459
        %v1461 = vpop.f32.mrb[0].mxu0
        %1462 = vmatprep.mubr.bf16.mxu0 0
        %1463 = vmatmul.mubr.bf16.gmra.mrb[0].mxu0 %v1251
        %v1464 = vpop.f32.mrb[0].mxu0
        %v1465 = vadd.f32 0.0, %v1464
        %v1466 = vpop.f32.mrb[0].mxu0
        %v1467 = vpop.f32.mrb[0].mxu0
        %v1468 = vadd.f32 0.0, %v1467
        %v1469 = vpop.f32.mrb[0].mxu0
        %1470 = vmatprep.mubr.bf16.mxu0 0
        %1471 = vmatmul.mubr.bf16.gmra.mrb[0].mxu0 %v1252
        %v1472 = vpop.f32.mrb[0].mxu0
        %v1473 = vadd.f32 0.0, %v1472
        %v1474 = vpop.f32.mrb[0].mxu0
        %v1475 = vpop.f32.mrb[0].mxu0
        %v1476 = vadd.f32 0.0, %v1475
        %v1477 = vpop.f32.mrb[0].mxu0
        %1478 = vdwg.mxu0
        %v1479 = vadd.f32 %v1173, %v1353
        %v1480 = vadd.f32 %v1174, %v1356
        %v1481 = vadd.f32 %v1175, %v1361
        %v1482 = vadd.f32 %v1176, %v1364
        %v1483 = vadd.f32 %v1177, %v1369
        %v1484 = vadd.f32 %v1178, %v1372
        %v1485 = vadd.f32 %v1179, %v1377
        %v1486 = vadd.f32 %v1180, %v1380
        %v1487 = vadd.f32 %v1181, %v1385
        %v1488 = vadd.f32 %v1182, %v1388
        %v1489 = vadd.f32 %v1183, %v1393
        %v1490 = vadd.f32 %v1184, %v1396
        %v1491 = vadd.f32 %v1185, %v1401
        %v1492 = vadd.f32 %v1186, %v1404
        %v1493 = vadd.f32 %v1187, %v1409
        %v1494 = vadd.f32 %v1188, %v1412
        %v1495 = vadd.f32 %v1189, %v1417
        %v1496 = vadd.f32 %v1190, %v1420
        %v1497 = vadd.f32 %v1191, %v1425
        %v1498 = vadd.f32 %v1192, %v1428
        %v1499 = vadd.f32 %v1193, %v1433
        %v1500 = vadd.f32 %v1194, %v1436
        %v1501 = vadd.f32 %v1195, %v1441
        %v1502 = vadd.f32 %v1196, %v1444
        %v1503 = vadd.f32 %v1197, %v1449
        %v1504 = vadd.f32 %v1198, %v1452
        %v1505 = vadd.f32 %v1199, %v1457
        %v1506 = vadd.f32 %v1200, %v1460
        %v1507 = vadd.f32 %v1201, %v1465
        %v1508 = vadd.f32 %v1202, %v1468
        %v1509 = vadd.f32 %v1203, %v1473
        %v1510 = vadd.f32 %v1204, %v1476
        %v1511 = vld [vmem:[%s280 + $0x1] sm:$0xff]
        %v1512 = vld [vmem:[%s280 + $0x9] sm:$0xff]
        %v1513 = vld [vmem:[%s280 + $0x19] sm:$0xff]
        %v1514 = vld [vmem:[%s280 + $0x21] sm:$0xff]
        %v1515 = vld [vmem:[%s280 + $0x31] sm:$0xff]
        %v1516 = vld [vmem:[%s280 + $0x39] sm:$0xff]
        %v1517 = vld [vmem:[%s280 + $0x49] sm:$0xff]
        %v1518 = vld [vmem:[%s280 + $0x51] sm:$0xff]
        %v1519 = vld [vmem:[%s280 + $0x61] sm:$0xff]
        %v1520 = vld [vmem:[%s280 + $0x69] sm:$0xff]
        %v1521 = vld [vmem:[%s280 + $0x79] sm:$0xff]
        %v1522 = vld [vmem:[%s280 + $0x81] sm:$0xff]
        %v1523 = vld [vmem:[%s280 + $0x91] sm:$0xff]
        %v1524 = vld [vmem:[%s280 + $0x99] sm:$0xff]
        %v1525 = vld [vmem:[%s280 + $0xa9] sm:$0xff]
        %v1526 = vld [vmem:[%s280 + $0xb1] sm:$0xff]
        %v1527 = vld [vmem:[%s280 + $0xc1] sm:$0xff]
        %v1528 = vld [vmem:[%s280 + $0xc9] sm:$0xff]
        %v1529 = vld [vmem:[%s280 + $0xd9] sm:$0xff]
        %v1530 = vld [vmem:[%s280 + $0xe1] sm:$0xff]
        %v1531 = vld [vmem:[%s280 + $0xf1] sm:$0xff]
        %v1532 = vld [vmem:[%s280 + $0xf9] sm:$0xff]
        %v1533 = vld [vmem:[%s280 + $0x109] sm:$0xff]
        %v1534 = vld [vmem:[%s280 + $0x111] sm:$0xff]
        %v1535 = vld [vmem:[%s280 + $0x121] sm:$0xff]
        %v1536 = vld [vmem:[%s280 + $0x129] sm:$0xff]
        %v1537 = vld [vmem:[%s280 + $0x139] sm:$0xff]
        %v1538 = vld [vmem:[%s280 + $0x141] sm:$0xff]
        %v1539 = vld [vmem:[%s280 + $0x151] sm:$0xff]
        %v1540 = vld [vmem:[%s280 + $0x159] sm:$0xff]
        %v1541 = vld [vmem:[%s280 + $0x169] sm:$0xff]
        %v1542 = vld [vmem:[%s280 + $0x171] sm:$0xff]
        %v1543 = vpack.c.bf16 %v1512, %v1511
        %v1544 = vpack.c.bf16 %v1514, %v1513
        %v1545 = vpack.c.bf16 %v1516, %v1515
        %v1546 = vpack.c.bf16 %v1518, %v1517
        %v1547 = vpack.c.bf16 %v1520, %v1519
        %v1548 = vpack.c.bf16 %v1522, %v1521
        %v1549 = vpack.c.bf16 %v1524, %v1523
        %v1550 = vpack.c.bf16 %v1526, %v1525
        %v1551 = vpack.c.bf16 %v1528, %v1527
        %v1552 = vpack.c.bf16 %v1530, %v1529
        %v1553 = vpack.c.bf16 %v1532, %v1531
        %v1554 = vpack.c.bf16 %v1534, %v1533
        %v1555 = vpack.c.bf16 %v1536, %v1535
        %v1556 = vpack.c.bf16 %v1538, %v1537
        %v1557 = vpack.c.bf16 %v1540, %v1539
        %v1558 = vpack.c.bf16 %v1542, %v1541
        %s1559 = scalar_lea.vmem [#allocation6], 256
        %v1560 = vld [vmem:[%s1559] sm:$0xf]
        %v1561 = vld [vmem:[%s1559 + $0x4] sm:$0xf]
        %v1562 = vld [vmem:[%s1559 + $0x8] sm:$0xf]
        %v1563 = vld [vmem:[%s1559 + $0xc] sm:$0xf]
        %v1564 = vld [vmem:[%s1559 + $0x10] sm:$0xf]
        %v1565 = vld [vmem:[%s1559 + $0x14] sm:$0xf]
        %v1566 = vld [vmem:[%s1559 + $0x18] sm:$0xf]
        %v1567 = vld [vmem:[%s1559 + $0x1c] sm:$0xf]
        %v1568 = vld [vmem:[%s1559 + $0x20] sm:$0xf]
        %v1569 = vld [vmem:[%s1559 + $0x24] sm:$0xf]
        %v1570 = vld [vmem:[%s1559 + $0x28] sm:$0xf]
        %v1571 = vld [vmem:[%s1559 + $0x2c] sm:$0xf]
        %v1572 = vld [vmem:[%s1559 + $0x30] sm:$0xf]
        %v1573 = vld [vmem:[%s1559 + $0x34] sm:$0xf]
        %v1574 = vld [vmem:[%s1559 + $0x38] sm:$0xf]
        %v1575 = vld [vmem:[%s1559 + $0x3c] sm:$0xf]
        %v1592 = vunpack.c.l.b16 %v1560
        %v1593 = vunpack.c.l.b16 %v1561
        %v1594 = vunpack.c.l.b16 %v1562
        %v1595 = vunpack.c.l.b16 %v1563
        %v1596 = vunpack.c.l.b16 %v1564
        %v1597 = vunpack.c.l.b16 %v1565
        %v1598 = vunpack.c.l.b16 %v1566
        %v1599 = vunpack.c.l.b16 %v1567
        %v1600 = vunpack.c.l.b16 %v1568
        %v1601 = vunpack.c.l.b16 %v1569
        %v1602 = vunpack.c.l.b16 %v1570
        %v1603 = vunpack.c.l.b16 %v1571
        %v1604 = vunpack.c.l.b16 %v1572
        %v1605 = vunpack.c.l.b16 %v1573
        %v1606 = vunpack.c.l.b16 %v1574
        %v1607 = vunpack.c.l.b16 %v1575
        %v1608 = vpack.c.b16 %v1593, %v1592
        %v1609 = vpack.c.b16 %v1595, %v1594
        %v1610 = vpack.c.b16 %v1597, %v1596
        %v1611 = vpack.c.b16 %v1599, %v1598
        %v1612 = vpack.c.b16 %v1601, %v1600
        %v1613 = vpack.c.b16 %v1603, %v1602
        %v1614 = vpack.c.b16 %v1605, %v1604
        %v1615 = vpack.c.b16 %v1607, %v1606
        %1624 = vmatprep.subr.bf16.mxu0 0
        %1625 = vmatpush1.bf16.msra.mxu0 %v1608
        %1626 = vmatprep.subr.bf16.mxu0 0
        %1627 = vmatpush1.bf16.msra.mxu0 %v1609
        %1628 = vmatprep.subr.bf16.mxu0 0
        %1629 = vmatpush1.bf16.msra.mxu0 %v1610
        %1630 = vmatprep.subr.bf16.mxu0 0
        %1631 = vmatpush1.bf16.msra.mxu0 %v1611
        %1632 = vmatprep.subr.bf16.mxu0 0
        %1633 = vmatpush1.bf16.msra.mxu0 %v1612
        %1634 = vmatprep.subr.bf16.mxu0 0
        %1635 = vmatpush1.bf16.msra.mxu0 %v1613
        %1636 = vmatprep.subr.bf16.mxu0 0
        %1637 = vmatpush1.bf16.msra.mxu0 %v1614
        %1638 = vmatprep.subr.bf16.mxu0 0
        %1639 = vmatpush1.bf16.msra.mxu0 %v1615
        %1640 = vmatprep.subr.bf16.mxu0 0
        %1641 = vmatpush1.bf16.msra.mxu0 0
        %1642 = vmatprep.subr.bf16.mxu0 0
        %1643 = vmatpush1.bf16.msra.mxu0 0
        %1644 = vmatprep.subr.bf16.mxu0 0
        %1645 = vmatpush1.bf16.msra.mxu0 0
        %1646 = vmatprep.subr.bf16.mxu0 0
        %1647 = vmatpush1.bf16.msra.mxu0 0
        %1648 = vmatprep.subr.bf16.mxu0 0
        %1649 = vmatpush1.bf16.msra.mxu0 0
        %1650 = vmatprep.subr.bf16.mxu0 0
        %1651 = vmatpush1.bf16.msra.mxu0 0
        %1652 = vmatprep.subr.bf16.mxu0 0
        %1653 = vmatpush1.bf16.msra.mxu0 0
        %1654 = vmatprep.subr.bf16.mxu0 0
        %1655 = vmatpush1.bf16.msra.mxu0 0
        %1656 = vmatprep.mubr.bf16.mxu0 0
        %1657 = vmatmul.mubr.bf16.gmra.mrb[0].mxu0 %v1543
        %v1658 = vpop.f32.mrb[0].mxu0
        %v1659 = vadd.f32 0.0, %v1658
        %v1660 = vpop.f32.mrb[0].mxu0
        %v1661 = vpop.f32.mrb[0].mxu0
        %v1662 = vadd.f32 0.0, %v1661
        %v1663 = vpop.f32.mrb[0].mxu0
        %1664 = vmatprep.mubr.bf16.mxu0 0
        %1665 = vmatmul.mubr.bf16.gmra.mrb[0].mxu0 %v1544
        %v1666 = vpop.f32.mrb[0].mxu0
        %v1667 = vadd.f32 0.0, %v1666
        %v1668 = vpop.f32.mrb[0].mxu0
        %v1669 = vpop.f32.mrb[0].mxu0
        %v1670 = vadd.f32 0.0, %v1669
        %v1671 = vpop.f32.mrb[0].mxu0
        %1672 = vmatprep.mubr.bf16.mxu0 0
        %1673 = vmatmul.mubr.bf16.gmra.mrb[0].mxu0 %v1545
        %v1674 = vpop.f32.mrb[0].mxu0
        %v1675 = vadd.f32 0.0, %v1674
        %v1676 = vpop.f32.mrb[0].mxu0
        %v1677 = vpop.f32.mrb[0].mxu0
        %v1678 = vadd.f32 0.0, %v1677
        %v1679 = vpop.f32.mrb[0].mxu0
        %1680 = vmatprep.mubr.bf16.mxu0 0
        %1681 = vmatmul.mubr.bf16.gmra.mrb[0].mxu0 %v1546
        %v1682 = vpop.f32.mrb[0].mxu0
        %v1683 = vadd.f32 0.0, %v1682
        %v1684 = vpop.f32.mrb[0].mxu0
        %v1685 = vpop.f32.mrb[0].mxu0
        %v1686 = vadd.f32 0.0, %v1685
        %v1687 = vpop.f32.mrb[0].mxu0
        %1688 = vmatprep.mubr.bf16.mxu0 0
        %1689 = vmatmul.mubr.bf16.gmra.mrb[0].mxu0 %v1547
        %v1690 = vpop.f32.mrb[0].mxu0
        %v1691 = vadd.f32 0.0, %v1690
        %v1692 = vpop.f32.mrb[0].mxu0
        %v1693 = vpop.f32.mrb[0].mxu0
        %v1694 = vadd.f32 0.0, %v1693
        %v1695 = vpop.f32.mrb[0].mxu0
        %1696 = vmatprep.mubr.bf16.mxu0 0
        %1697 = vmatmul.mubr.bf16.gmra.mrb[0].mxu0 %v1548
        %v1698 = vpop.f32.mrb[0].mxu0
        %v1699 = vadd.f32 0.0, %v1698
        %v1700 = vpop.f32.mrb[0].mxu0
        %v1701 = vpop.f32.mrb[0].mxu0
        %v1702 = vadd.f32 0.0, %v1701
        %v1703 = vpop.f32.mrb[0].mxu0
        %1704 = vmatprep.mubr.bf16.mxu0 0
        %1705 = vmatmul.mubr.bf16.gmra.mrb[0].mxu0 %v1549
        %v1706 = vpop.f32.mrb[0].mxu0
        %v1707 = vadd.f32 0.0, %v1706
        %v1708 = vpop.f32.mrb[0].mxu0
        %v1709 = vpop.f32.mrb[0].mxu0
        %v1710 = vadd.f32 0.0, %v1709
        %v1711 = vpop.f32.mrb[0].mxu0
        %1712 = vmatprep.mubr.bf16.mxu0 0
        %1713 = vmatmul.mubr.bf16.gmra.mrb[0].mxu0 %v1550
        %v1714 = vpop.f32.mrb[0].mxu0
        %v1715 = vadd.f32 0.0, %v1714
        %v1716 = vpop.f32.mrb[0].mxu0
        %v1717 = vpop.f32.mrb[0].mxu0
        %v1718 = vadd.f32 0.0, %v1717
        %v1719 = vpop.f32.mrb[0].mxu0
        %1720 = vmatprep.mubr.bf16.mxu0 0
        %1721 = vmatmul.mubr.bf16.gmra.mrb[0].mxu0 %v1551
        %v1722 = vpop.f32.mrb[0].mxu0
        %v1723 = vadd.f32 0.0, %v1722
        %v1724 = vpop.f32.mrb[0].mxu0
        %v1725 = vpop.f32.mrb[0].mxu0
        %v1726 = vadd.f32 0.0, %v1725
        %v1727 = vpop.f32.mrb[0].mxu0
        %1728 = vmatprep.mubr.bf16.mxu0 0
        %1729 = vmatmul.mubr.bf16.gmra.mrb[0].mxu0 %v1552
        %v1730 = vpop.f32.mrb[0].mxu0
        %v1731 = vadd.f32 0.0, %v1730
        %v1732 = vpop.f32.mrb[0].mxu0
        %v1733 = vpop.f32.mrb[0].mxu0
        %v1734 = vadd.f32 0.0, %v1733
        %v1735 = vpop.f32.mrb[0].mxu0
        %1736 = vmatprep.mubr.bf16.mxu0 0
        %1737 = vmatmul.mubr.bf16.gmra.mrb[0].mxu0 %v1553
        %v1738 = vpop.f32.mrb[0].mxu0
        %v1739 = vadd.f32 0.0, %v1738
        %v1740 = vpop.f32.mrb[0].mxu0
        %v1741 = vpop.f32.mrb[0].mxu0
        %v1742 = vadd.f32 0.0, %v1741
        %v1743 = vpop.f32.mrb[0].mxu0
        %1744 = vmatprep.mubr.bf16.mxu0 0
        %1745 = vmatmul.mubr.bf16.gmra.mrb[0].mxu0 %v1554
        %v1746 = vpop.f32.mrb[0].mxu0
        %v1747 = vadd.f32 0.0, %v1746
        %v1748 = vpop.f32.mrb[0].mxu0
        %v1749 = vpop.f32.mrb[0].mxu0
        %v1750 = vadd.f32 0.0, %v1749
        %v1751 = vpop.f32.mrb[0].mxu0
        %1752 = vmatprep.mubr.bf16.mxu0 0
        %1753 = vmatmul.mubr.bf16.gmra.mrb[0].mxu0 %v1555
        %v1754 = vpop.f32.mrb[0].mxu0
        %v1755 = vadd.f32 0.0, %v1754
        %v1756 = vpop.f32.mrb[0].mxu0
        %v1757 = vpop.f32.mrb[0].mxu0
        %v1758 = vadd.f32 0.0, %v1757
        %v1759 = vpop.f32.mrb[0].mxu0
        %1760 = vmatprep.mubr.bf16.mxu0 0
        %1761 = vmatmul.mubr.bf16.gmra.mrb[0].mxu0 %v1556
        %v1762 = vpop.f32.mrb[0].mxu0
        %v1763 = vadd.f32 0.0, %v1762
        %v1764 = vpop.f32.mrb[0].mxu0
        %v1765 = vpop.f32.mrb[0].mxu0
        %v1766 = vadd.f32 0.0, %v1765
        %v1767 = vpop.f32.mrb[0].mxu0
        %1768 = vmatprep.mubr.bf16.mxu0 0
        %1769 = vmatmul.mubr.bf16.gmra.mrb[0].mxu0 %v1557
        %v1770 = vpop.f32.mrb[0].mxu0
        %v1771 = vadd.f32 0.0, %v1770
        %v1772 = vpop.f32.mrb[0].mxu0
        %v1773 = vpop.f32.mrb[0].mxu0
        %v1774 = vadd.f32 0.0, %v1773
        %v1775 = vpop.f32.mrb[0].mxu0
        %1776 = vmatprep.mubr.bf16.mxu0 0
        %1777 = vmatmul.mubr.bf16.gmra.mrb[0].mxu0 %v1558
        %v1778 = vpop.f32.mrb[0].mxu0
        %v1779 = vadd.f32 0.0, %v1778
        %v1780 = vpop.f32.mrb[0].mxu0
        %v1781 = vpop.f32.mrb[0].mxu0
        %v1782 = vadd.f32 0.0, %v1781
        %v1783 = vpop.f32.mrb[0].mxu0
        %1784 = vdwg.mxu0
        %v1785 = vadd.f32 %v1479, %v1659
        %v1786 = vadd.f32 %v1480, %v1662
        %v1787 = vadd.f32 %v1481, %v1667
        %v1788 = vadd.f32 %v1482, %v1670
        %v1789 = vadd.f32 %v1483, %v1675
        %v1790 = vadd.f32 %v1484, %v1678
        %v1791 = vadd.f32 %v1485, %v1683
        %v1792 = vadd.f32 %v1486, %v1686
        %v1793 = vadd.f32 %v1487, %v1691
        %v1794 = vadd.f32 %v1488, %v1694
        %v1795 = vadd.f32 %v1489, %v1699
        %v1796 = vadd.f32 %v1490, %v1702
        %v1797 = vadd.f32 %v1491, %v1707
        %v1798 = vadd.f32 %v1492, %v1710
        %v1799 = vadd.f32 %v1493, %v1715
        %v1800 = vadd.f32 %v1494, %v1718
        %v1801 = vadd.f32 %v1495, %v1723
        %v1802 = vadd.f32 %v1496, %v1726
        %v1803 = vadd.f32 %v1497, %v1731
        %v1804 = vadd.f32 %v1498, %v1734
        %v1805 = vadd.f32 %v1499, %v1739
        %v1806 = vadd.f32 %v1500, %v1742
        %v1807 = vadd.f32 %v1501, %v1747
        %v1808 = vadd.f32 %v1502, %v1750
        %v1809 = vadd.f32 %v1503, %v1755
        %v1810 = vadd.f32 %v1504, %v1758
        %v1811 = vadd.f32 %v1505, %v1763
        %v1812 = vadd.f32 %v1506, %v1766
        %v1813 = vadd.f32 %v1507, %v1771
        %v1814 = vadd.f32 %v1508, %v1774
        %v1815 = vadd.f32 %v1509, %v1779
        %v1816 = vadd.f32 %v1510, %v1782
        %v1817 = vld [vmem:[%s280 + $0x2] sm:$0xff]
        %v1818 = vld [vmem:[%s280 + $0xa] sm:$0xff]
        %v1819 = vld [vmem:[%s280 + $0x1a] sm:$0xff]
        %v1820 = vld [vmem:[%s280 + $0x22] sm:$0xff]
        %v1821 = vld [vmem:[%s280 + $0x32] sm:$0xff]
        %v1822 = vld [vmem:[%s280 + $0x3a] sm:$0xff]
        %v1823 = vld [vmem:[%s280 + $0x4a] sm:$0xff]
        %v1824 = vld [vmem:[%s280 + $0x52] sm:$0xff]
        %v1825 = vld [vmem:[%s280 + $0x62] sm:$0xff]
        %v1826 = vld [vmem:[%s280 + $0x6a] sm:$0xff]
        %v1827 = vld [vmem:[%s280 + $0x7a] sm:$0xff]
        %v1828 = vld [vmem:[%s280 + $0x82] sm:$0xff]
        %v1829 = vld [vmem:[%s280 + $0x92] sm:$0xff]
        %v1830 = vld [vmem:[%s280 + $0x9a] sm:$0xff]
        %v1831 = vld [vmem:[%s280 + $0xaa] sm:$0xff]
        %v1832 = vld [vmem:[%s280 + $0xb2] sm:$0xff]
        %v1833 = vld [vmem:[%s280 + $0xc2] sm:$0xff]
        %v1834 = vld [vmem:[%s280 + $0xca] sm:$0xff]
        %v1835 = vld [vmem:[%s280 + $0xda] sm:$0xff]
        %v1836 = vld [vmem:[%s280 + $0xe2] sm:$0xff]
        %v1837 = vld [vmem:[%s280 + $0xf2] sm:$0xff]
        %v1838 = vld [vmem:[%s280 + $0xfa] sm:$0xff]
        %v1839 = vld [vmem:[%s280 + $0x10a] sm:$0xff]
        %v1840 = vld [vmem:[%s280 + $0x112] sm:$0xff]
        %v1841 = vld [vmem:[%s280 + $0x122] sm:$0xff]
        %v1842 = vld [vmem:[%s280 + $0x12a] sm:$0xff]
        %v1843 = vld [vmem:[%s280 + $0x13a] sm:$0xff]
        %v1844 = vld [vmem:[%s280 + $0x142] sm:$0xff]
        %v1845 = vld [vmem:[%s280 + $0x152] sm:$0xff]
        %v1846 = vld [vmem:[%s280 + $0x15a] sm:$0xff]
        %v1847 = vld [vmem:[%s280 + $0x16a] sm:$0xff]
        %v1848 = vld [vmem:[%s280 + $0x172] sm:$0xff]
        %v1849 = vpack.c.bf16 %v1818, %v1817
        %v1850 = vpack.c.bf16 %v1820, %v1819
        %v1851 = vpack.c.bf16 %v1822, %v1821
        %v1852 = vpack.c.bf16 %v1824, %v1823
        %v1853 = vpack.c.bf16 %v1826, %v1825
        %v1854 = vpack.c.bf16 %v1828, %v1827
        %v1855 = vpack.c.bf16 %v1830, %v1829
        %v1856 = vpack.c.bf16 %v1832, %v1831
        %v1857 = vpack.c.bf16 %v1834, %v1833
        %v1858 = vpack.c.bf16 %v1836, %v1835
        %v1859 = vpack.c.bf16 %v1838, %v1837
        %v1860 = vpack.c.bf16 %v1840, %v1839
        %v1861 = vpack.c.bf16 %v1842, %v1841
        %v1862 = vpack.c.bf16 %v1844, %v1843
        %v1863 = vpack.c.bf16 %v1846, %v1845
        %v1864 = vpack.c.bf16 %v1848, %v1847
        %s1865 = scalar_lea.vmem [#allocation6], 320
        %v1866 = vld [vmem:[%s1865] sm:$0xf]
        %v1867 = vld [vmem:[%s1865 + $0x4] sm:$0xf]
        %v1868 = vld [vmem:[%s1865 + $0x8] sm:$0xf]
        %v1869 = vld [vmem:[%s1865 + $0xc] sm:$0xf]
        %v1870 = vld [vmem:[%s1865 + $0x10] sm:$0xf]
        %v1871 = vld [vmem:[%s1865 + $0x14] sm:$0xf]
        %v1872 = vld [vmem:[%s1865 + $0x18] sm:$0xf]
        %v1873 = vld [vmem:[%s1865 + $0x1c] sm:$0xf]
        %v1874 = vld [vmem:[%s1865 + $0x20] sm:$0xf]
        %v1875 = vld [vmem:[%s1865 + $0x24] sm:$0xf]
        %v1876 = vld [vmem:[%s1865 + $0x28] sm:$0xf]
        %v1877 = vld [vmem:[%s1865 + $0x2c] sm:$0xf]
        %v1878 = vld [vmem:[%s1865 + $0x30] sm:$0xf]
        %v1879 = vld [vmem:[%s1865 + $0x34] sm:$0xf]
        %v1880 = vld [vmem:[%s1865 + $0x38] sm:$0xf]
        %v1881 = vld [vmem:[%s1865 + $0x3c] sm:$0xf]
        %v1898 = vunpack.c.l.b16 %v1866
        %v1899 = vunpack.c.l.b16 %v1867
        %v1900 = vunpack.c.l.b16 %v1868
        %v1901 = vunpack.c.l.b16 %v1869
        %v1902 = vunpack.c.l.b16 %v1870
        %v1903 = vunpack.c.l.b16 %v1871
        %v1904 = vunpack.c.l.b16 %v1872
        %v1905 = vunpack.c.l.b16 %v1873
        %v1906 = vunpack.c.l.b16 %v1874
        %v1907 = vunpack.c.l.b16 %v1875
        %v1908 = vunpack.c.l.b16 %v1876
        %v1909 = vunpack.c.l.b16 %v1877
        %v1910 = vunpack.c.l.b16 %v1878
        %v1911 = vunpack.c.l.b16 %v1879
        %v1912 = vunpack.c.l.b16 %v1880
        %v1913 = vunpack.c.l.b16 %v1881
        %v1914 = vpack.c.b16 %v1899, %v1898
        %v1915 = vpack.c.b16 %v1901, %v1900
        %v1916 = vpack.c.b16 %v1903, %v1902
        %v1917 = vpack.c.b16 %v1905, %v1904
        %v1918 = vpack.c.b16 %v1907, %v1906
        %v1919 = vpack.c.b16 %v1909, %v1908
        %v1920 = vpack.c.b16 %v1911, %v1910
        %v1921 = vpack.c.b16 %v1913, %v1912
        %1930 = vmatprep.subr.bf16.mxu0 0
        %1931 = vmatpush1.bf16.msra.mxu0 %v1914
        %1932 = vmatprep.subr.bf16.mxu0 0
        %1933 = vmatpush1.bf16.msra.mxu0 %v1915
        %1934 = vmatprep.subr.bf16.mxu0 0
        %1935 = vmatpush1.bf16.msra.mxu0 %v1916
        %1936 = vmatprep.subr.bf16.mxu0 0
        %1937 = vmatpush1.bf16.msra.mxu0 %v1917
        %1938 = vmatprep.subr.bf16.mxu0 0
        %1939 = vmatpush1.bf16.msra.mxu0 %v1918
        %1940 = vmatprep.subr.bf16.mxu0 0
        %1941 = vmatpush1.bf16.msra.mxu0 %v1919
        %1942 = vmatprep.subr.bf16.mxu0 0
        %1943 = vmatpush1.bf16.msra.mxu0 %v1920
        %1944 = vmatprep.subr.bf16.mxu0 0
        %1945 = vmatpush1.bf16.msra.mxu0 %v1921
        %1946 = vmatprep.subr.bf16.mxu0 0
        %1947 = vmatpush1.bf16.msra.mxu0 0
        %1948 = vmatprep.subr.bf16.mxu0 0
        %1949 = vmatpush1.bf16.msra.mxu0 0
        %1950 = vmatprep.subr.bf16.mxu0 0
        %1951 = vmatpush1.bf16.msra.mxu0 0
        %1952 = vmatprep.subr.bf16.mxu0 0
        %1953 = vmatpush1.bf16.msra.mxu0 0
        %1954 = vmatprep.subr.bf16.mxu0 0
        %1955 = vmatpush1.bf16.msra.mxu0 0
        %1956 = vmatprep.subr.bf16.mxu0 0
        %1957 = vmatpush1.bf16.msra.mxu0 0
        %1958 = vmatprep.subr.bf16.mxu0 0
        %1959 = vmatpush1.bf16.msra.mxu0 0
        %1960 = vmatprep.subr.bf16.mxu0 0
        %1961 = vmatpush1.bf16.msra.mxu0 0
        %1962 = vmatprep.mubr.bf16.mxu0 0
        %1963 = vmatmul.mubr.bf16.gmra.mrb[0].mxu0 %v1849
        %v1964 = vpop.f32.mrb[0].mxu0
        %v1965 = vadd.f32 0.0, %v1964
        %v1966 = vpop.f32.mrb[0].mxu0
        %v1967 = vpop.f32.mrb[0].mxu0
        %v1968 = vadd.f32 0.0, %v1967
        %v1969 = vpop.f32.mrb[0].mxu0
        %1970 = vmatprep.mubr.bf16.mxu0 0
        %1971 = vmatmul.mubr.bf16.gmra.mrb[0].mxu0 %v1850
        %v1972 = vpop.f32.mrb[0].mxu0
        %v1973 = vadd.f32 0.0, %v1972
        %v1974 = vpop.f32.mrb[0].mxu0
        %v1975 = vpop.f32.mrb[0].mxu0
        %v1976 = vadd.f32 0.0, %v1975
        %v1977 = vpop.f32.mrb[0].mxu0
        %1978 = vmatprep.mubr.bf16.mxu0 0
        %1979 = vmatmul.mubr.bf16.gmra.mrb[0].mxu0 %v1851
        %v1980 = vpop.f32.mrb[0].mxu0
        %v1981 = vadd.f32 0.0, %v1980
        %v1982 = vpop.f32.mrb[0].mxu0
        %v1983 = vpop.f32.mrb[0].mxu0
        %v1984 = vadd.f32 0.0, %v1983
        %v1985 = vpop.f32.mrb[0].mxu0
        %1986 = vmatprep.mubr.bf16.mxu0 0
        %1987 = vmatmul.mubr.bf16.gmra.mrb[0].mxu0 %v1852
        %v1988 = vpop.f32.mrb[0].mxu0
        %v1989 = vadd.f32 0.0, %v1988
        %v1990 = vpop.f32.mrb[0].mxu0
        %v1991 = vpop.f32.mrb[0].mxu0
        %v1992 = vadd.f32 0.0, %v1991
        %v1993 = vpop.f32.mrb[0].mxu0
        %1994 = vmatprep.mubr.bf16.mxu0 0
        %1995 = vmatmul.mubr.bf16.gmra.mrb[0].mxu0 %v1853
        %v1996 = vpop.f32.mrb[0].mxu0
        %v1997 = vadd.f32 0.0, %v1996
        %v1998 = vpop.f32.mrb[0].mxu0
        %v1999 = vpop.f32.mrb[0].mxu0
        %v2000 = vadd.f32 0.0, %v1999
        %v2001 = vpop.f32.mrb[0].mxu0
        %2002 = vmatprep.mubr.bf16.mxu0 0
        %2003 = vmatmul.mubr.bf16.gmra.mrb[0].mxu0 %v1854
        %v2004 = vpop.f32.mrb[0].mxu0
        %v2005 = vadd.f32 0.0, %v2004
        %v2006 = vpop.f32.mrb[0].mxu0
        %v2007 = vpop.f32.mrb[0].mxu0
        %v2008 = vadd.f32 0.0, %v2007
        %v2009 = vpop.f32.mrb[0].mxu0
        %2010 = vmatprep.mubr.bf16.mxu0 0
        %2011 = vmatmul.mubr.bf16.gmra.mrb[0].mxu0 %v1855
        %v2012 = vpop.f32.mrb[0].mxu0
        %v2013 = vadd.f32 0.0, %v2012
        %v2014 = vpop.f32.mrb[0].mxu0
        %v2015 = vpop.f32.mrb[0].mxu0
        %v2016 = vadd.f32 0.0, %v2015
        %v2017 = vpop.f32.mrb[0].mxu0
        %2018 = vmatprep.mubr.bf16.mxu0 0
        %2019 = vmatmul.mubr.bf16.gmra.mrb[0].mxu0 %v1856
        %v2020 = vpop.f32.mrb[0].mxu0
        %v2021 = vadd.f32 0.0, %v2020
        %v2022 = vpop.f32.mrb[0].mxu0
        %v2023 = vpop.f32.mrb[0].mxu0
        %v2024 = vadd.f32 0.0, %v2023
        %v2025 = vpop.f32.mrb[0].mxu0
        %2026 = vmatprep.mubr.bf16.mxu0 0
        %2027 = vmatmul.mubr.bf16.gmra.mrb[0].mxu0 %v1857
        %v2028 = vpop.f32.mrb[0].mxu0
        %v2029 = vadd.f32 0.0, %v2028
        %v2030 = vpop.f32.mrb[0].mxu0
        %v2031 = vpop.f32.mrb[0].mxu0
        %v2032 = vadd.f32 0.0, %v2031
        %v2033 = vpop.f32.mrb[0].mxu0
        %2034 = vmatprep.mubr.bf16.mxu0 0
        %2035 = vmatmul.mubr.bf16.gmra.mrb[0].mxu0 %v1858
        %v2036 = vpop.f32.mrb[0].mxu0
        %v2037 = vadd.f32 0.0, %v2036
        %v2038 = vpop.f32.mrb[0].mxu0
        %v2039 = vpop.f32.mrb[0].mxu0
        %v2040 = vadd.f32 0.0, %v2039
        %v2041 = vpop.f32.mrb[0].mxu0
        %2042 = vmatprep.mubr.bf16.mxu0 0
        %2043 = vmatmul.mubr.bf16.gmra.mrb[0].mxu0 %v1859
        %v2044 = vpop.f32.mrb[0].mxu0
        %v2045 = vadd.f32 0.0, %v2044
        %v2046 = vpop.f32.mrb[0].mxu0
        %v2047 = vpop.f32.mrb[0].mxu0
        %v2048 = vadd.f32 0.0, %v2047
        %v2049 = vpop.f32.mrb[0].mxu0
        %2050 = vmatprep.mubr.bf16.mxu0 0
        %2051 = vmatmul.mubr.bf16.gmra.mrb[0].mxu0 %v1860
        %v2052 = vpop.f32.mrb[0].mxu0
        %v2053 = vadd.f32 0.0, %v2052
        %v2054 = vpop.f32.mrb[0].mxu0
        %v2055 = vpop.f32.mrb[0].mxu0
        %v2056 = vadd.f32 0.0, %v2055
        %v2057 = vpop.f32.mrb[0].mxu0
        %2058 = vmatprep.mubr.bf16.mxu0 0
        %2059 = vmatmul.mubr.bf16.gmra.mrb[0].mxu0 %v1861
        %v2060 = vpop.f32.mrb[0].mxu0
        %v2061 = vadd.f32 0.0, %v2060
        %v2062 = vpop.f32.mrb[0].mxu0
        %v2063 = vpop.f32.mrb[0].mxu0
        %v2064 = vadd.f32 0.0, %v2063
        %v2065 = vpop.f32.mrb[0].mxu0
        %2066 = vmatprep.mubr.bf16.mxu0 0
        %2067 = vmatmul.mubr.bf16.gmra.mrb[0].mxu0 %v1862
        %v2068 = vpop.f32.mrb[0].mxu0
        %v2069 = vadd.f32 0.0, %v2068
        %v2070 = vpop.f32.mrb[0].mxu0
        %v2071 = vpop.f32.mrb[0].mxu0
        %v2072 = vadd.f32 0.0, %v2071
        %v2073 = vpop.f32.mrb[0].mxu0
        %2074 = vmatprep.mubr.bf16.mxu0 0
        %2075 = vmatmul.mubr.bf16.gmra.mrb[0].mxu0 %v1863
        %v2076 = vpop.f32.mrb[0].mxu0
        %v2077 = vadd.f32 0.0, %v2076
        %v2078 = vpop.f32.mrb[0].mxu0
        %v2079 = vpop.f32.mrb[0].mxu0
        %v2080 = vadd.f32 0.0, %v2079
        %v2081 = vpop.f32.mrb[0].mxu0
        %2082 = vmatprep.mubr.bf16.mxu0 0
        %2083 = vmatmul.mubr.bf16.gmra.mrb[0].mxu0 %v1864
        %v2084 = vpop.f32.mrb[0].mxu0
        %v2085 = vadd.f32 0.0, %v2084
        %v2086 = vpop.f32.mrb[0].mxu0
        %v2087 = vpop.f32.mrb[0].mxu0
        %v2088 = vadd.f32 0.0, %v2087
        %v2089 = vpop.f32.mrb[0].mxu0
        %2090 = vdwg.mxu0
        %v2091 = vadd.f32 %v1785, %v1965
        %v2092 = vadd.f32 %v1786, %v1968
        %v2093 = vadd.f32 %v1787, %v1973
        %v2094 = vadd.f32 %v1788, %v1976
        %v2095 = vadd.f32 %v1789, %v1981
        %v2096 = vadd.f32 %v1790, %v1984
        %v2097 = vadd.f32 %v1791, %v1989
        %v2098 = vadd.f32 %v1792, %v1992
        %v2099 = vadd.f32 %v1793, %v1997
        %v2100 = vadd.f32 %v1794, %v2000
        %v2101 = vadd.f32 %v1795, %v2005
        %v2102 = vadd.f32 %v1796, %v2008
        %v2103 = vadd.f32 %v1797, %v2013
        %v2104 = vadd.f32 %v1798, %v2016
        %v2105 = vadd.f32 %v1799, %v2021
        %v2106 = vadd.f32 %v1800, %v2024
        %v2107 = vadd.f32 %v1801, %v2029
        %v2108 = vadd.f32 %v1802, %v2032
        %v2109 = vadd.f32 %v1803, %v2037
        %v2110 = vadd.f32 %v1804, %v2040
        %v2111 = vadd.f32 %v1805, %v2045
        %v2112 = vadd.f32 %v1806, %v2048
        %v2113 = vadd.f32 %v1807, %v2053
        %v2114 = vadd.f32 %v1808, %v2056
        %v2115 = vadd.f32 %v1809, %v2061
        %v2116 = vadd.f32 %v1810, %v2064
        %v2117 = vadd.f32 %v1811, %v2069
        %v2118 = vadd.f32 %v1812, %v2072
        %v2119 = vadd.f32 %v1813, %v2077
        %v2120 = vadd.f32 %v1814, %v2080
        %v2121 = vadd.f32 %v1815, %v2085
        %v2122 = vadd.f32 %v1816, %v2088
        %s2123 = scalar_lea.vmem [#allocation2], 48
        %v2124 = vld [vmem:[%s2123] sm:$0xff]
        %v2125 = vld [vmem:[%s2123 + $0x8] sm:$0xff]
        %v2126 = vld [vmem:[%s2123 + $0x18] sm:$0xff]
        %v2127 = vld [vmem:[%s2123 + $0x20] sm:$0xff]
        %v2128 = vld [vmem:[%s2123 + $0x30] sm:$0xff]
        %v2129 = vld [vmem:[%s2123 + $0x38] sm:$0xff]
        %v2130 = vld [vmem:[%s2123 + $0x48] sm:$0xff]
        %v2131 = vld [vmem:[%s2123 + $0x50] sm:$0xff]
        %v2132 = vld [vmem:[%s2123 + $0x60] sm:$0xff]
        %v2133 = vld [vmem:[%s2123 + $0x68] sm:$0xff]
        %v2134 = vld [vmem:[%s2123 + $0x78] sm:$0xff]
        %v2135 = vld [vmem:[%s2123 + $0x80] sm:$0xff]
        %v2136 = vld [vmem:[%s2123 + $0x90] sm:$0xff]
        %v2137 = vld [vmem:[%s2123 + $0x98] sm:$0xff]
        %v2138 = vld [vmem:[%s2123 + $0xa8] sm:$0xff]
        %v2139 = vld [vmem:[%s2123 + $0xb0] sm:$0xff]
        %v2140 = vld [vmem:[%s2123 + $0xc0] sm:$0xff]
        %v2141 = vld [vmem:[%s2123 + $0xc8] sm:$0xff]
        %v2142 = vld [vmem:[%s2123 + $0xd8] sm:$0xff]
        %v2143 = vld [vmem:[%s2123 + $0xe0] sm:$0xff]
        %v2144 = vld [vmem:[%s2123 + $0xf0] sm:$0xff]
        %v2145 = vld [vmem:[%s2123 + $0xf8] sm:$0xff]
        %v2146 = vld [vmem:[%s2123 + $0x108] sm:$0xff]
        %v2147 = vld [vmem:[%s2123 + $0x110] sm:$0xff]
        %v2148 = vld [vmem:[%s2123 + $0x120] sm:$0xff]
        %v2149 = vld [vmem:[%s2123 + $0x128] sm:$0xff]
        %v2150 = vld [vmem:[%s2123 + $0x138] sm:$0xff]
        %v2151 = vld [vmem:[%s2123 + $0x140] sm:$0xff]
        %v2152 = vld [vmem:[%s2123 + $0x150] sm:$0xff]
        %v2153 = vld [vmem:[%s2123 + $0x158] sm:$0xff]
        %v2154 = vld [vmem:[%s2123 + $0x168] sm:$0xff]
        %v2155 = vld [vmem:[%s2123 + $0x170] sm:$0xff]
        %v2156 = vpack.c.bf16 %v2125, %v2124
        %v2157 = vpack.c.bf16 %v2127, %v2126
        %v2158 = vpack.c.bf16 %v2129, %v2128
        %v2159 = vpack.c.bf16 %v2131, %v2130
        %v2160 = vpack.c.bf16 %v2133, %v2132
        %v2161 = vpack.c.bf16 %v2135, %v2134
        %v2162 = vpack.c.bf16 %v2137, %v2136
        %v2163 = vpack.c.bf16 %v2139, %v2138
        %v2164 = vpack.c.bf16 %v2141, %v2140
        %v2165 = vpack.c.bf16 %v2143, %v2142
        %v2166 = vpack.c.bf16 %v2145, %v2144
        %v2167 = vpack.c.bf16 %v2147, %v2146
        %v2168 = vpack.c.bf16 %v2149, %v2148
        %v2169 = vpack.c.bf16 %v2151, %v2150
        %v2170 = vpack.c.bf16 %v2153, %v2152
        %v2171 = vpack.c.bf16 %v2155, %v2154
        %s2172 = scalar_lea.vmem [#allocation6], 384
        %v2173 = vld [vmem:[%s2172] sm:$0xf]
        %v2174 = vld [vmem:[%s2172 + $0x4] sm:$0xf]
        %v2175 = vld [vmem:[%s2172 + $0x8] sm:$0xf]
        %v2176 = vld [vmem:[%s2172 + $0xc] sm:$0xf]
        %v2177 = vld [vmem:[%s2172 + $0x10] sm:$0xf]
        %v2178 = vld [vmem:[%s2172 + $0x14] sm:$0xf]
        %v2179 = vld [vmem:[%s2172 + $0x18] sm:$0xf]
        %v2180 = vld [vmem:[%s2172 + $0x1c] sm:$0xf]
        %v2181 = vld [vmem:[%s2172 + $0x20] sm:$0xf]
        %v2182 = vld [vmem:[%s2172 + $0x24] sm:$0xf]
        %v2183 = vld [vmem:[%s2172 + $0x28] sm:$0xf]
        %v2184 = vld [vmem:[%s2172 + $0x2c] sm:$0xf]
        %v2185 = vld [vmem:[%s2172 + $0x30] sm:$0xf]
        %v2186 = vld [vmem:[%s2172 + $0x34] sm:$0xf]
        %v2187 = vld [vmem:[%s2172 + $0x38] sm:$0xf]
        %v2188 = vld [vmem:[%s2172 + $0x3c] sm:$0xf]
        %v2205 = vunpack.c.l.b16 %v2173
        %v2206 = vunpack.c.l.b16 %v2174
        %v2207 = vunpack.c.l.b16 %v2175
        %v2208 = vunpack.c.l.b16 %v2176
        %v2209 = vunpack.c.l.b16 %v2177
        %v2210 = vunpack.c.l.b16 %v2178
        %v2211 = vunpack.c.l.b16 %v2179
        %v2212 = vunpack.c.l.b16 %v2180
        %v2213 = vunpack.c.l.b16 %v2181
        %v2214 = vunpack.c.l.b16 %v2182
        %v2215 = vunpack.c.l.b16 %v2183
        %v2216 = vunpack.c.l.b16 %v2184
        %v2217 = vunpack.c.l.b16 %v2185
        %v2218 = vunpack.c.l.b16 %v2186
        %v2219 = vunpack.c.l.b16 %v2187
        %v2220 = vunpack.c.l.b16 %v2188
        %v2221 = vpack.c.b16 %v2206, %v2205
        %v2222 = vpack.c.b16 %v2208, %v2207
        %v2223 = vpack.c.b16 %v2210, %v2209
        %v2224 = vpack.c.b16 %v2212, %v2211
        %v2225 = vpack.c.b16 %v2214, %v2213
        %v2226 = vpack.c.b16 %v2216, %v2215
        %v2227 = vpack.c.b16 %v2218, %v2217
        %v2228 = vpack.c.b16 %v2220, %v2219
        %2237 = vmatprep.subr.bf16.mxu0 0
        %2238 = vmatpush1.bf16.msra.mxu0 %v2221
        %2239 = vmatprep.subr.bf16.mxu0 0
        %2240 = vmatpush1.bf16.msra.mxu0 %v2222
        %2241 = vmatprep.subr.bf16.mxu0 0
        %2242 = vmatpush1.bf16.msra.mxu0 %v2223
        %2243 = vmatprep.subr.bf16.mxu0 0
        %2244 = vmatpush1.bf16.msra.mxu0 %v2224
        %2245 = vmatprep.subr.bf16.mxu0 0
        %2246 = vmatpush1.bf16.msra.mxu0 %v2225
        %2247 = vmatprep.subr.bf16.mxu0 0
        %2248 = vmatpush1.bf16.msra.mxu0 %v2226
        %2249 = vmatprep.subr.bf16.mxu0 0
        %2250 = vmatpush1.bf16.msra.mxu0 %v2227
        %2251 = vmatprep.subr.bf16.mxu0 0
        %2252 = vmatpush1.bf16.msra.mxu0 %v2228
        %2253 = vmatprep.subr.bf16.mxu0 0
        %2254 = vmatpush1.bf16.msra.mxu0 0
        %2255 = vmatprep.subr.bf16.mxu0 0
        %2256 = vmatpush1.bf16.msra.mxu0 0
        %2257 = vmatprep.subr.bf16.mxu0 0
        %2258 = vmatpush1.bf16.msra.mxu0 0
        %2259 = vmatprep.subr.bf16.mxu0 0
        %2260 = vmatpush1.bf16.msra.mxu0 0
        %2261 = vmatprep.subr.bf16.mxu0 0
        %2262 = vmatpush1.bf16.msra.mxu0 0
        %2263 = vmatprep.subr.bf16.mxu0 0
        %2264 = vmatpush1.bf16.msra.mxu0 0
        %2265 = vmatprep.subr.bf16.mxu0 0
        %2266 = vmatpush1.bf16.msra.mxu0 0
        %2267 = vmatprep.subr.bf16.mxu0 0
        %2268 = vmatpush1.bf16.msra.mxu0 0
        %2269 = vmatprep.mubr.bf16.mxu0 0
        %2270 = vmatmul.mubr.bf16.gmra.mrb[0].mxu0 %v2156
        %v2271 = vpop.f32.mrb[0].mxu0
        %v2272 = vadd.f32 0.0, %v2271
        %v2273 = vpop.f32.mrb[0].mxu0
        %v2274 = vpop.f32.mrb[0].mxu0
        %v2275 = vadd.f32 0.0, %v2274
        %v2276 = vpop.f32.mrb[0].mxu0
        %2277 = vmatprep.mubr.bf16.mxu0 0
        %2278 = vmatmul.mubr.bf16.gmra.mrb[0].mxu0 %v2157
        %v2279 = vpop.f32.mrb[0].mxu0
        %v2280 = vadd.f32 0.0, %v2279
        %v2281 = vpop.f32.mrb[0].mxu0
        %v2282 = vpop.f32.mrb[0].mxu0
        %v2283 = vadd.f32 0.0, %v2282
        %v2284 = vpop.f32.mrb[0].mxu0
        %2285 = vmatprep.mubr.bf16.mxu0 0
        %2286 = vmatmul.mubr.bf16.gmra.mrb[0].mxu0 %v2158
        %v2287 = vpop.f32.mrb[0].mxu0
        %v2288 = vadd.f32 0.0, %v2287
        %v2289 = vpop.f32.mrb[0].mxu0
        %v2290 = vpop.f32.mrb[0].mxu0
        %v2291 = vadd.f32 0.0, %v2290
        %v2292 = vpop.f32.mrb[0].mxu0
        %2293 = vmatprep.mubr.bf16.mxu0 0
        %2294 = vmatmul.mubr.bf16.gmra.mrb[0].mxu0 %v2159
        %v2295 = vpop.f32.mrb[0].mxu0
        %v2296 = vadd.f32 0.0, %v2295
        %v2297 = vpop.f32.mrb[0].mxu0
        %v2298 = vpop.f32.mrb[0].mxu0
        %v2299 = vadd.f32 0.0, %v2298
        %v2300 = vpop.f32.mrb[0].mxu0
        %2301 = vmatprep.mubr.bf16.mxu0 0
        %2302 = vmatmul.mubr.bf16.gmra.mrb[0].mxu0 %v2160
        %v2303 = vpop.f32.mrb[0].mxu0
        %v2304 = vadd.f32 0.0, %v2303
        %v2305 = vpop.f32.mrb[0].mxu0
        %v2306 = vpop.f32.mrb[0].mxu0
        %v2307 = vadd.f32 0.0, %v2306
        %v2308 = vpop.f32.mrb[0].mxu0
        %2309 = vmatprep.mubr.bf16.mxu0 0
        %2310 = vmatmul.mubr.bf16.gmra.mrb[0].mxu0 %v2161
        %v2311 = vpop.f32.mrb[0].mxu0
        %v2312 = vadd.f32 0.0, %v2311
        %v2313 = vpop.f32.mrb[0].mxu0
        %v2314 = vpop.f32.mrb[0].mxu0
        %v2315 = vadd.f32 0.0, %v2314
        %v2316 = vpop.f32.mrb[0].mxu0
        %2317 = vmatprep.mubr.bf16.mxu0 0
        %2318 = vmatmul.mubr.bf16.gmra.mrb[0].mxu0 %v2162
        %v2319 = vpop.f32.mrb[0].mxu0
        %v2320 = vadd.f32 0.0, %v2319
        %v2321 = vpop.f32.mrb[0].mxu0
        %v2322 = vpop.f32.mrb[0].mxu0
        %v2323 = vadd.f32 0.0, %v2322
        %v2324 = vpop.f32.mrb[0].mxu0
        %2325 = vmatprep.mubr.bf16.mxu0 0
        %2326 = vmatmul.mubr.bf16.gmra.mrb[0].mxu0 %v2163
        %v2327 = vpop.f32.mrb[0].mxu0
        %v2328 = vadd.f32 0.0, %v2327
        %v2329 = vpop.f32.mrb[0].mxu0
        %v2330 = vpop.f32.mrb[0].mxu0
        %v2331 = vadd.f32 0.0, %v2330
        %v2332 = vpop.f32.mrb[0].mxu0
        %2333 = vmatprep.mubr.bf16.mxu0 0
        %2334 = vmatmul.mubr.bf16.gmra.mrb[0].mxu0 %v2164
        %v2335 = vpop.f32.mrb[0].mxu0
        %v2336 = vadd.f32 0.0, %v2335
        %v2337 = vpop.f32.mrb[0].mxu0
        %v2338 = vpop.f32.mrb[0].mxu0
        %v2339 = vadd.f32 0.0, %v2338
        %v2340 = vpop.f32.mrb[0].mxu0
        %2341 = vmatprep.mubr.bf16.mxu0 0
        %2342 = vmatmul.mubr.bf16.gmra.mrb[0].mxu0 %v2165
        %v2343 = vpop.f32.mrb[0].mxu0
        %v2344 = vadd.f32 0.0, %v2343
        %v2345 = vpop.f32.mrb[0].mxu0
        %v2346 = vpop.f32.mrb[0].mxu0
        %v2347 = vadd.f32 0.0, %v2346
        %v2348 = vpop.f32.mrb[0].mxu0
        %2349 = vmatprep.mubr.bf16.mxu0 0
        %2350 = vmatmul.mubr.bf16.gmra.mrb[0].mxu0 %v2166
        %v2351 = vpop.f32.mrb[0].mxu0
        %v2352 = vadd.f32 0.0, %v2351
        %v2353 = vpop.f32.mrb[0].mxu0
        %v2354 = vpop.f32.mrb[0].mxu0
        %v2355 = vadd.f32 0.0, %v2354
        %v2356 = vpop.f32.mrb[0].mxu0
        %2357 = vmatprep.mubr.bf16.mxu0 0
        %2358 = vmatmul.mubr.bf16.gmra.mrb[0].mxu0 %v2167
        %v2359 = vpop.f32.mrb[0].mxu0
        %v2360 = vadd.f32 0.0, %v2359
        %v2361 = vpop.f32.mrb[0].mxu0
        %v2362 = vpop.f32.mrb[0].mxu0
        %v2363 = vadd.f32 0.0, %v2362
        %v2364 = vpop.f32.mrb[0].mxu0
        %2365 = vmatprep.mubr.bf16.mxu0 0
        %2366 = vmatmul.mubr.bf16.gmra.mrb[0].mxu0 %v2168
        %v2367 = vpop.f32.mrb[0].mxu0
        %v2368 = vadd.f32 0.0, %v2367
        %v2369 = vpop.f32.mrb[0].mxu0
        %v2370 = vpop.f32.mrb[0].mxu0
        %v2371 = vadd.f32 0.0, %v2370
        %v2372 = vpop.f32.mrb[0].mxu0
        %2373 = vmatprep.mubr.bf16.mxu0 0
        %2374 = vmatmul.mubr.bf16.gmra.mrb[0].mxu0 %v2169
        %v2375 = vpop.f32.mrb[0].mxu0
        %v2376 = vadd.f32 0.0, %v2375
        %v2377 = vpop.f32.mrb[0].mxu0
        %v2378 = vpop.f32.mrb[0].mxu0
        %v2379 = vadd.f32 0.0, %v2378
        %v2380 = vpop.f32.mrb[0].mxu0
        %2381 = vmatprep.mubr.bf16.mxu0 0
        %2382 = vmatmul.mubr.bf16.gmra.mrb[0].mxu0 %v2170
        %v2383 = vpop.f32.mrb[0].mxu0
        %v2384 = vadd.f32 0.0, %v2383
        %v2385 = vpop.f32.mrb[0].mxu0
        %v2386 = vpop.f32.mrb[0].mxu0
        %v2387 = vadd.f32 0.0, %v2386
        %v2388 = vpop.f32.mrb[0].mxu0
        %2389 = vmatprep.mubr.bf16.mxu0 0
        %2390 = vmatmul.mubr.bf16.gmra.mrb[0].mxu0 %v2171
        %v2391 = vpop.f32.mrb[0].mxu0
        %v2392 = vadd.f32 0.0, %v2391
        %v2393 = vpop.f32.mrb[0].mxu0
        %v2394 = vpop.f32.mrb[0].mxu0
        %v2395 = vadd.f32 0.0, %v2394
        %v2396 = vpop.f32.mrb[0].mxu0
        %2397 = vdwg.mxu0
        %v2398 = vadd.f32 %v2091, %v2272
        %v2399 = vadd.f32 %v2092, %v2275
        %v2400 = vadd.f32 %v2093, %v2280
        %v2401 = vadd.f32 %v2094, %v2283
        %v2402 = vadd.f32 %v2095, %v2288
        %v2403 = vadd.f32 %v2096, %v2291
        %v2404 = vadd.f32 %v2097, %v2296
        %v2405 = vadd.f32 %v2098, %v2299
        %v2406 = vadd.f32 %v2099, %v2304
        %v2407 = vadd.f32 %v2100, %v2307
        %v2408 = vadd.f32 %v2101, %v2312
        %v2409 = vadd.f32 %v2102, %v2315
        %v2410 = vadd.f32 %v2103, %v2320
        %v2411 = vadd.f32 %v2104, %v2323
        %v2412 = vadd.f32 %v2105, %v2328
        %v2413 = vadd.f32 %v2106, %v2331
        %v2414 = vadd.f32 %v2107, %v2336
        %v2415 = vadd.f32 %v2108, %v2339
        %v2416 = vadd.f32 %v2109, %v2344
        %v2417 = vadd.f32 %v2110, %v2347
        %v2418 = vadd.f32 %v2111, %v2352
        %v2419 = vadd.f32 %v2112, %v2355
        %v2420 = vadd.f32 %v2113, %v2360
        %v2421 = vadd.f32 %v2114, %v2363
        %v2422 = vadd.f32 %v2115, %v2368
        %v2423 = vadd.f32 %v2116, %v2371
        %v2424 = vadd.f32 %v2117, %v2376
        %v2425 = vadd.f32 %v2118, %v2379
        %v2426 = vadd.f32 %v2119, %v2384
        %v2427 = vadd.f32 %v2120, %v2387
        %v2428 = vadd.f32 %v2121, %v2392
        %v2429 = vadd.f32 %v2122, %v2395
        %v2430 = vld [vmem:[%s2123 + $0x1] sm:$0xff]
        %v2431 = vld [vmem:[%s2123 + $0x9] sm:$0xff]
        %v2432 = vld [vmem:[%s2123 + $0x19] sm:$0xff]
        %v2433 = vld [vmem:[%s2123 + $0x21] sm:$0xff]
        %v2434 = vld [vmem:[%s2123 + $0x31] sm:$0xff]
        %v2435 = vld [vmem:[%s2123 + $0x39] sm:$0xff]
        %v2436 = vld [vmem:[%s2123 + $0x49] sm:$0xff]
        %v2437 = vld [vmem:[%s2123 + $0x51] sm:$0xff]
        %v2438 = vld [vmem:[%s2123 + $0x61] sm:$0xff]
        %v2439 = vld [vmem:[%s2123 + $0x69] sm:$0xff]
        %v2440 = vld [vmem:[%s2123 + $0x79] sm:$0xff]
        %v2441 = vld [vmem:[%s2123 + $0x81] sm:$0xff]
        %v2442 = vld [vmem:[%s2123 + $0x91] sm:$0xff]
        %v2443 = vld [vmem:[%s2123 + $0x99] sm:$0xff]
        %v2444 = vld [vmem:[%s2123 + $0xa9] sm:$0xff]
        %v2445 = vld [vmem:[%s2123 + $0xb1] sm:$0xff]
        %v2446 = vld [vmem:[%s2123 + $0xc1] sm:$0xff]
        %v2447 = vld [vmem:[%s2123 + $0xc9] sm:$0xff]
        %v2448 = vld [vmem:[%s2123 + $0xd9] sm:$0xff]
        %v2449 = vld [vmem:[%s2123 + $0xe1] sm:$0xff]
        %v2450 = vld [vmem:[%s2123 + $0xf1] sm:$0xff]
        %v2451 = vld [vmem:[%s2123 + $0xf9] sm:$0xff]
        %v2452 = vld [vmem:[%s2123 + $0x109] sm:$0xff]
        %v2453 = vld [vmem:[%s2123 + $0x111] sm:$0xff]
        %v2454 = vld [vmem:[%s2123 + $0x121] sm:$0xff]
        %v2455 = vld [vmem:[%s2123 + $0x129] sm:$0xff]
        %v2456 = vld [vmem:[%s2123 + $0x139] sm:$0xff]
        %v2457 = vld [vmem:[%s2123 + $0x141] sm:$0xff]
        %v2458 = vld [vmem:[%s2123 + $0x151] sm:$0xff]
        %v2459 = vld [vmem:[%s2123 + $0x159] sm:$0xff]
        %v2460 = vld [vmem:[%s2123 + $0x169] sm:$0xff]
        %v2461 = vld [vmem:[%s2123 + $0x171] sm:$0xff]
        %v2462 = vpack.c.bf16 %v2431, %v2430
        %v2463 = vpack.c.bf16 %v2433, %v2432
        %v2464 = vpack.c.bf16 %v2435, %v2434
        %v2465 = vpack.c.bf16 %v2437, %v2436
        %v2466 = vpack.c.bf16 %v2439, %v2438
        %v2467 = vpack.c.bf16 %v2441, %v2440
        %v2468 = vpack.c.bf16 %v2443, %v2442
        %v2469 = vpack.c.bf16 %v2445, %v2444
        %v2470 = vpack.c.bf16 %v2447, %v2446
        %v2471 = vpack.c.bf16 %v2449, %v2448
        %v2472 = vpack.c.bf16 %v2451, %v2450
        %v2473 = vpack.c.bf16 %v2453, %v2452
        %v2474 = vpack.c.bf16 %v2455, %v2454
        %v2475 = vpack.c.bf16 %v2457, %v2456
        %v2476 = vpack.c.bf16 %v2459, %v2458
        %v2477 = vpack.c.bf16 %v2461, %v2460
        %s2478 = scalar_lea.vmem [#allocation6], 448
        %v2479 = vld [vmem:[%s2478] sm:$0xf]
        %v2480 = vld [vmem:[%s2478 + $0x4] sm:$0xf]
        %v2481 = vld [vmem:[%s2478 + $0x8] sm:$0xf]
        %v2482 = vld [vmem:[%s2478 + $0xc] sm:$0xf]
        %v2483 = vld [vmem:[%s2478 + $0x10] sm:$0xf]
        %v2484 = vld [vmem:[%s2478 + $0x14] sm:$0xf]
        %v2485 = vld [vmem:[%s2478 + $0x18] sm:$0xf]
        %v2486 = vld [vmem:[%s2478 + $0x1c] sm:$0xf]
        %v2487 = vld [vmem:[%s2478 + $0x20] sm:$0xf]
        %v2488 = vld [vmem:[%s2478 + $0x24] sm:$0xf]
        %v2489 = vld [vmem:[%s2478 + $0x28] sm:$0xf]
        %v2490 = vld [vmem:[%s2478 + $0x2c] sm:$0xf]
        %v2491 = vld [vmem:[%s2478 + $0x30] sm:$0xf]
        %v2492 = vld [vmem:[%s2478 + $0x34] sm:$0xf]
        %v2493 = vld [vmem:[%s2478 + $0x38] sm:$0xf]
        %v2494 = vld [vmem:[%s2478 + $0x3c] sm:$0xf]
        %v2511 = vunpack.c.l.b16 %v2479
        %v2512 = vunpack.c.l.b16 %v2480
        %v2513 = vunpack.c.l.b16 %v2481
        %v2514 = vunpack.c.l.b16 %v2482
        %v2515 = vunpack.c.l.b16 %v2483
        %v2516 = vunpack.c.l.b16 %v2484
        %v2517 = vunpack.c.l.b16 %v2485
        %v2518 = vunpack.c.l.b16 %v2486
        %v2519 = vunpack.c.l.b16 %v2487
        %v2520 = vunpack.c.l.b16 %v2488
        %v2521 = vunpack.c.l.b16 %v2489
        %v2522 = vunpack.c.l.b16 %v2490
        %v2523 = vunpack.c.l.b16 %v2491
        %v2524 = vunpack.c.l.b16 %v2492
        %v2525 = vunpack.c.l.b16 %v2493
        %v2526 = vunpack.c.l.b16 %v2494
        %v2527 = vpack.c.b16 %v2512, %v2511
        %v2528 = vpack.c.b16 %v2514, %v2513
        %v2529 = vpack.c.b16 %v2516, %v2515
        %v2530 = vpack.c.b16 %v2518, %v2517
        %v2531 = vpack.c.b16 %v2520, %v2519
        %v2532 = vpack.c.b16 %v2522, %v2521
        %v2533 = vpack.c.b16 %v2524, %v2523
        %v2534 = vpack.c.b16 %v2526, %v2525
        %2543 = vmatprep.subr.bf16.mxu0 0
        %2544 = vmatpush1.bf16.msra.mxu0 %v2527
        %2545 = vmatprep.subr.bf16.mxu0 0
        %2546 = vmatpush1.bf16.msra.mxu0 %v2528
        %2547 = vmatprep.subr.bf16.mxu0 0
        %2548 = vmatpush1.bf16.msra.mxu0 %v2529
        %2549 = vmatprep.subr.bf16.mxu0 0
        %2550 = vmatpush1.bf16.msra.mxu0 %v2530
        %2551 = vmatprep.subr.bf16.mxu0 0
        %2552 = vmatpush1.bf16.msra.mxu0 %v2531
        %2553 = vmatprep.subr.bf16.mxu0 0
        %2554 = vmatpush1.bf16.msra.mxu0 %v2532
        %2555 = vmatprep.subr.bf16.mxu0 0
        %2556 = vmatpush1.bf16.msra.mxu0 %v2533
        %2557 = vmatprep.subr.bf16.mxu0 0
        %2558 = vmatpush1.bf16.msra.mxu0 %v2534
        %2559 = vmatprep.subr.bf16.mxu0 0
        %2560 = vmatpush1.bf16.msra.mxu0 0
        %2561 = vmatprep.subr.bf16.mxu0 0
        %2562 = vmatpush1.bf16.msra.mxu0 0
        %2563 = vmatprep.subr.bf16.mxu0 0
        %2564 = vmatpush1.bf16.msra.mxu0 0
        %2565 = vmatprep.subr.bf16.mxu0 0
        %2566 = vmatpush1.bf16.msra.mxu0 0
        %2567 = vmatprep.subr.bf16.mxu0 0
        %2568 = vmatpush1.bf16.msra.mxu0 0
        %2569 = vmatprep.subr.bf16.mxu0 0
        %2570 = vmatpush1.bf16.msra.mxu0 0
        %2571 = vmatprep.subr.bf16.mxu0 0
        %2572 = vmatpush1.bf16.msra.mxu0 0
        %2573 = vmatprep.subr.bf16.mxu0 0
        %2574 = vmatpush1.bf16.msra.mxu0 0
        %2575 = vmatprep.mubr.bf16.mxu0 0
        %2576 = vmatmul.mubr.bf16.gmra.mrb[0].mxu0 %v2462
        %v2577 = vpop.f32.mrb[0].mxu0
        %v2578 = vadd.f32 0.0, %v2577
        %v2579 = vpop.f32.mrb[0].mxu0
        %v2580 = vpop.f32.mrb[0].mxu0
        %v2581 = vadd.f32 0.0, %v2580
        %v2582 = vpop.f32.mrb[0].mxu0
        %2583 = vmatprep.mubr.bf16.mxu0 0
        %2584 = vmatmul.mubr.bf16.gmra.mrb[0].mxu0 %v2463
        %v2585 = vpop.f32.mrb[0].mxu0
        %v2586 = vadd.f32 0.0, %v2585
        %v2587 = vpop.f32.mrb[0].mxu0
        %v2588 = vpop.f32.mrb[0].mxu0
        %v2589 = vadd.f32 0.0, %v2588
        %v2590 = vpop.f32.mrb[0].mxu0
        %2591 = vmatprep.mubr.bf16.mxu0 0
        %2592 = vmatmul.mubr.bf16.gmra.mrb[0].mxu0 %v2464
        %v2593 = vpop.f32.mrb[0].mxu0
        %v2594 = vadd.f32 0.0, %v2593
        %v2595 = vpop.f32.mrb[0].mxu0
        %v2596 = vpop.f32.mrb[0].mxu0
        %v2597 = vadd.f32 0.0, %v2596
        %v2598 = vpop.f32.mrb[0].mxu0
        %2599 = vmatprep.mubr.bf16.mxu0 0
        %2600 = vmatmul.mubr.bf16.gmra.mrb[0].mxu0 %v2465
        %v2601 = vpop.f32.mrb[0].mxu0
        %v2602 = vadd.f32 0.0, %v2601
        %v2603 = vpop.f32.mrb[0].mxu0
        %v2604 = vpop.f32.mrb[0].mxu0
        %v2605 = vadd.f32 0.0, %v2604
        %v2606 = vpop.f32.mrb[0].mxu0
        %2607 = vmatprep.mubr.bf16.mxu0 0
        %2608 = vmatmul.mubr.bf16.gmra.mrb[0].mxu0 %v2466
        %v2609 = vpop.f32.mrb[0].mxu0
        %v2610 = vadd.f32 0.0, %v2609
        %v2611 = vpop.f32.mrb[0].mxu0
        %v2612 = vpop.f32.mrb[0].mxu0
        %v2613 = vadd.f32 0.0, %v2612
        %v2614 = vpop.f32.mrb[0].mxu0
        %2615 = vmatprep.mubr.bf16.mxu0 0
        %2616 = vmatmul.mubr.bf16.gmra.mrb[0].mxu0 %v2467
        %v2617 = vpop.f32.mrb[0].mxu0
        %v2618 = vadd.f32 0.0, %v2617
        %v2619 = vpop.f32.mrb[0].mxu0
        %v2620 = vpop.f32.mrb[0].mxu0
        %v2621 = vadd.f32 0.0, %v2620
        %v2622 = vpop.f32.mrb[0].mxu0
        %2623 = vmatprep.mubr.bf16.mxu0 0
        %2624 = vmatmul.mubr.bf16.gmra.mrb[0].mxu0 %v2468
        %v2625 = vpop.f32.mrb[0].mxu0
        %v2626 = vadd.f32 0.0, %v2625
        %v2627 = vpop.f32.mrb[0].mxu0
        %v2628 = vpop.f32.mrb[0].mxu0
        %v2629 = vadd.f32 0.0, %v2628
        %v2630 = vpop.f32.mrb[0].mxu0
        %2631 = vmatprep.mubr.bf16.mxu0 0
        %2632 = vmatmul.mubr.bf16.gmra.mrb[0].mxu0 %v2469
        %v2633 = vpop.f32.mrb[0].mxu0
        %v2634 = vadd.f32 0.0, %v2633
        %v2635 = vpop.f32.mrb[0].mxu0
        %v2636 = vpop.f32.mrb[0].mxu0
        %v2637 = vadd.f32 0.0, %v2636
        %v2638 = vpop.f32.mrb[0].mxu0
        %2639 = vmatprep.mubr.bf16.mxu0 0
        %2640 = vmatmul.mubr.bf16.gmra.mrb[0].mxu0 %v2470
        %v2641 = vpop.f32.mrb[0].mxu0
        %v2642 = vadd.f32 0.0, %v2641
        %v2643 = vpop.f32.mrb[0].mxu0
        %v2644 = vpop.f32.mrb[0].mxu0
        %v2645 = vadd.f32 0.0, %v2644
        %v2646 = vpop.f32.mrb[0].mxu0
        %2647 = vmatprep.mubr.bf16.mxu0 0
        %2648 = vmatmul.mubr.bf16.gmra.mrb[0].mxu0 %v2471
        %v2649 = vpop.f32.mrb[0].mxu0
        %v2650 = vadd.f32 0.0, %v2649
        %v2651 = vpop.f32.mrb[0].mxu0
        %v2652 = vpop.f32.mrb[0].mxu0
        %v2653 = vadd.f32 0.0, %v2652
        %v2654 = vpop.f32.mrb[0].mxu0
        %2655 = vmatprep.mubr.bf16.mxu0 0
        %2656 = vmatmul.mubr.bf16.gmra.mrb[0].mxu0 %v2472
        %v2657 = vpop.f32.mrb[0].mxu0
        %v2658 = vadd.f32 0.0, %v2657
        %v2659 = vpop.f32.mrb[0].mxu0
        %v2660 = vpop.f32.mrb[0].mxu0
        %v2661 = vadd.f32 0.0, %v2660
        %v2662 = vpop.f32.mrb[0].mxu0
        %2663 = vmatprep.mubr.bf16.mxu0 0
        %2664 = vmatmul.mubr.bf16.gmra.mrb[0].mxu0 %v2473
        %v2665 = vpop.f32.mrb[0].mxu0
        %v2666 = vadd.f32 0.0, %v2665
        %v2667 = vpop.f32.mrb[0].mxu0
        %v2668 = vpop.f32.mrb[0].mxu0
        %v2669 = vadd.f32 0.0, %v2668
        %v2670 = vpop.f32.mrb[0].mxu0
        %2671 = vmatprep.mubr.bf16.mxu0 0
        %2672 = vmatmul.mubr.bf16.gmra.mrb[0].mxu0 %v2474
        %v2673 = vpop.f32.mrb[0].mxu0
        %v2674 = vadd.f32 0.0, %v2673
        %v2675 = vpop.f32.mrb[0].mxu0
        %v2676 = vpop.f32.mrb[0].mxu0
        %v2677 = vadd.f32 0.0, %v2676
        %v2678 = vpop.f32.mrb[0].mxu0
        %2679 = vmatprep.mubr.bf16.mxu0 0
        %2680 = vmatmul.mubr.bf16.gmra.mrb[0].mxu0 %v2475
        %v2681 = vpop.f32.mrb[0].mxu0
        %v2682 = vadd.f32 0.0, %v2681
        %v2683 = vpop.f32.mrb[0].mxu0
        %v2684 = vpop.f32.mrb[0].mxu0
        %v2685 = vadd.f32 0.0, %v2684
        %v2686 = vpop.f32.mrb[0].mxu0
        %2687 = vmatprep.mubr.bf16.mxu0 0
        %2688 = vmatmul.mubr.bf16.gmra.mrb[0].mxu0 %v2476
        %v2689 = vpop.f32.mrb[0].mxu0
        %v2690 = vadd.f32 0.0, %v2689
        %v2691 = vpop.f32.mrb[0].mxu0
        %v2692 = vpop.f32.mrb[0].mxu0
        %v2693 = vadd.f32 0.0, %v2692
        %v2694 = vpop.f32.mrb[0].mxu0
        %2695 = vmatprep.mubr.bf16.mxu0 0
        %2696 = vmatmul.mubr.bf16.gmra.mrb[0].mxu0 %v2477
        %v2697 = vpop.f32.mrb[0].mxu0
        %v2698 = vadd.f32 0.0, %v2697
        %v2699 = vpop.f32.mrb[0].mxu0
        %v2700 = vpop.f32.mrb[0].mxu0
        %v2701 = vadd.f32 0.0, %v2700
        %v2702 = vpop.f32.mrb[0].mxu0
        %2703 = vdwg.mxu0
        %v2704 = vadd.f32 %v2398, %v2578
        %v2705 = vadd.f32 %v2399, %v2581
        %v2706 = vadd.f32 %v2400, %v2586
        %v2707 = vadd.f32 %v2401, %v2589
        %v2708 = vadd.f32 %v2402, %v2594
        %v2709 = vadd.f32 %v2403, %v2597
        %v2710 = vadd.f32 %v2404, %v2602
        %v2711 = vadd.f32 %v2405, %v2605
        %v2712 = vadd.f32 %v2406, %v2610
        %v2713 = vadd.f32 %v2407, %v2613
        %v2714 = vadd.f32 %v2408, %v2618
        %v2715 = vadd.f32 %v2409, %v2621
        %v2716 = vadd.f32 %v2410, %v2626
        %v2717 = vadd.f32 %v2411, %v2629
        %v2718 = vadd.f32 %v2412, %v2634
        %v2719 = vadd.f32 %v2413, %v2637
        %v2720 = vadd.f32 %v2414, %v2642
        %v2721 = vadd.f32 %v2415, %v2645
        %v2722 = vadd.f32 %v2416, %v2650
        %v2723 = vadd.f32 %v2417, %v2653
        %v2724 = vadd.f32 %v2418, %v2658
        %v2725 = vadd.f32 %v2419, %v2661
        %v2726 = vadd.f32 %v2420, %v2666
        %v2727 = vadd.f32 %v2421, %v2669
        %v2728 = vadd.f32 %v2422, %v2674
        %v2729 = vadd.f32 %v2423, %v2677
        %v2730 = vadd.f32 %v2424, %v2682
        %v2731 = vadd.f32 %v2425, %v2685
        %v2732 = vadd.f32 %v2426, %v2690
        %v2733 = vadd.f32 %v2427, %v2693
        %v2734 = vadd.f32 %v2428, %v2698
        %v2735 = vadd.f32 %v2429, %v2701
        %v2736 = vld [vmem:[%s2123 + $0x2] sm:$0xff]
        %v2737 = vld [vmem:[%s2123 + $0xa] sm:$0xff]
        %v2738 = vld [vmem:[%s2123 + $0x1a] sm:$0xff]
        %v2739 = vld [vmem:[%s2123 + $0x22] sm:$0xff]
        %v2740 = vld [vmem:[%s2123 + $0x32] sm:$0xff]
        %v2741 = vld [vmem:[%s2123 + $0x3a] sm:$0xff]
        %v2742 = vld [vmem:[%s2123 + $0x4a] sm:$0xff]
        %v2743 = vld [vmem:[%s2123 + $0x52] sm:$0xff]
        %v2744 = vld [vmem:[%s2123 + $0x62] sm:$0xff]
        %v2745 = vld [vmem:[%s2123 + $0x6a] sm:$0xff]
        %v2746 = vld [vmem:[%s2123 + $0x7a] sm:$0xff]
        %v2747 = vld [vmem:[%s2123 + $0x82] sm:$0xff]
        %v2748 = vld [vmem:[%s2123 + $0x92] sm:$0xff]
        %v2749 = vld [vmem:[%s2123 + $0x9a] sm:$0xff]
        %v2750 = vld [vmem:[%s2123 + $0xaa] sm:$0xff]
        %v2751 = vld [vmem:[%s2123 + $0xb2] sm:$0xff]
        %v2752 = vld [vmem:[%s2123 + $0xc2] sm:$0xff]
        %v2753 = vld [vmem:[%s2123 + $0xca] sm:$0xff]
        %v2754 = vld [vmem:[%s2123 + $0xda] sm:$0xff]
        %v2755 = vld [vmem:[%s2123 + $0xe2] sm:$0xff]
        %v2756 = vld [vmem:[%s2123 + $0xf2] sm:$0xff]
        %v2757 = vld [vmem:[%s2123 + $0xfa] sm:$0xff]
        %v2758 = vld [vmem:[%s2123 + $0x10a] sm:$0xff]
        %v2759 = vld [vmem:[%s2123 + $0x112] sm:$0xff]
        %v2760 = vld [vmem:[%s2123 + $0x122] sm:$0xff]
        %v2761 = vld [vmem:[%s2123 + $0x12a] sm:$0xff]
        %v2762 = vld [vmem:[%s2123 + $0x13a] sm:$0xff]
        %v2763 = vld [vmem:[%s2123 + $0x142] sm:$0xff]
        %v2764 = vld [vmem:[%s2123 + $0x152] sm:$0xff]
        %v2765 = vld [vmem:[%s2123 + $0x15a] sm:$0xff]
        %v2766 = vld [vmem:[%s2123 + $0x16a] sm:$0xff]
        %v2767 = vld [vmem:[%s2123 + $0x172] sm:$0xff]
        %v2768 = vpack.c.bf16 %v2737, %v2736
        %v2769 = vpack.c.bf16 %v2739, %v2738
        %v2770 = vpack.c.bf16 %v2741, %v2740
        %v2771 = vpack.c.bf16 %v2743, %v2742
        %v2772 = vpack.c.bf16 %v2745, %v2744
        %v2773 = vpack.c.bf16 %v2747, %v2746
        %v2774 = vpack.c.bf16 %v2749, %v2748
        %v2775 = vpack.c.bf16 %v2751, %v2750
        %v2776 = vpack.c.bf16 %v2753, %v2752
        %v2777 = vpack.c.bf16 %v2755, %v2754
        %v2778 = vpack.c.bf16 %v2757, %v2756
        %v2779 = vpack.c.bf16 %v2759, %v2758
        %v2780 = vpack.c.bf16 %v2761, %v2760
        %v2781 = vpack.c.bf16 %v2763, %v2762
        %v2782 = vpack.c.bf16 %v2765, %v2764
        %v2783 = vpack.c.bf16 %v2767, %v2766
        %s2784 = scalar_lea.vmem [#allocation6], 512
        %v2785 = vld [vmem:[%s2784] sm:$0xf]
        %v2786 = vld [vmem:[%s2784 + $0x4] sm:$0xf]
        %v2787 = vld [vmem:[%s2784 + $0x8] sm:$0xf]
        %v2788 = vld [vmem:[%s2784 + $0xc] sm:$0xf]
        %v2789 = vld [vmem:[%s2784 + $0x10] sm:$0xf]
        %v2790 = vld [vmem:[%s2784 + $0x14] sm:$0xf]
        %v2791 = vld [vmem:[%s2784 + $0x18] sm:$0xf]
        %v2792 = vld [vmem:[%s2784 + $0x1c] sm:$0xf]
        %v2793 = vld [vmem:[%s2784 + $0x20] sm:$0xf]
        %v2794 = vld [vmem:[%s2784 + $0x24] sm:$0xf]
        %v2795 = vld [vmem:[%s2784 + $0x28] sm:$0xf]
        %v2796 = vld [vmem:[%s2784 + $0x2c] sm:$0xf]
        %v2797 = vld [vmem:[%s2784 + $0x30] sm:$0xf]
        %v2798 = vld [vmem:[%s2784 + $0x34] sm:$0xf]
        %v2799 = vld [vmem:[%s2784 + $0x38] sm:$0xf]
        %v2800 = vld [vmem:[%s2784 + $0x3c] sm:$0xf]
        %v2817 = vunpack.c.l.b16 %v2785
        %v2818 = vunpack.c.l.b16 %v2786
        %v2819 = vunpack.c.l.b16 %v2787
        %v2820 = vunpack.c.l.b16 %v2788
        %v2821 = vunpack.c.l.b16 %v2789
        %v2822 = vunpack.c.l.b16 %v2790
        %v2823 = vunpack.c.l.b16 %v2791
        %v2824 = vunpack.c.l.b16 %v2792
        %v2825 = vunpack.c.l.b16 %v2793
        %v2826 = vunpack.c.l.b16 %v2794
        %v2827 = vunpack.c.l.b16 %v2795
        %v2828 = vunpack.c.l.b16 %v2796
        %v2829 = vunpack.c.l.b16 %v2797
        %v2830 = vunpack.c.l.b16 %v2798
        %v2831 = vunpack.c.l.b16 %v2799
        %v2832 = vunpack.c.l.b16 %v2800
        %v2833 = vpack.c.b16 %v2818, %v2817
        %v2834 = vpack.c.b16 %v2820, %v2819
        %v2835 = vpack.c.b16 %v2822, %v2821
        %v2836 = vpack.c.b16 %v2824, %v2823
        %v2837 = vpack.c.b16 %v2826, %v2825
        %v2838 = vpack.c.b16 %v2828, %v2827
        %v2839 = vpack.c.b16 %v2830, %v2829
        %v2840 = vpack.c.b16 %v2832, %v2831
        %2849 = vmatprep.subr.bf16.mxu0 0
        %2850 = vmatpush1.bf16.msra.mxu0 %v2833
        %2851 = vmatprep.subr.bf16.mxu0 0
        %2852 = vmatpush1.bf16.msra.mxu0 %v2834
        %2853 = vmatprep.subr.bf16.mxu0 0
        %2854 = vmatpush1.bf16.msra.mxu0 %v2835
        %2855 = vmatprep.subr.bf16.mxu0 0
        %2856 = vmatpush1.bf16.msra.mxu0 %v2836
        %2857 = vmatprep.subr.bf16.mxu0 0
        %2858 = vmatpush1.bf16.msra.mxu0 %v2837
        %2859 = vmatprep.subr.bf16.mxu0 0
        %2860 = vmatpush1.bf16.msra.mxu0 %v2838
        %2861 = vmatprep.subr.bf16.mxu0 0
        %2862 = vmatpush1.bf16.msra.mxu0 %v2839
        %2863 = vmatprep.subr.bf16.mxu0 0
        %2864 = vmatpush1.bf16.msra.mxu0 %v2840
        %2865 = vmatprep.subr.bf16.mxu0 0
        %2866 = vmatpush1.bf16.msra.mxu0 0
        %2867 = vmatprep.subr.bf16.mxu0 0
        %2868 = vmatpush1.bf16.msra.mxu0 0
        %2869 = vmatprep.subr.bf16.mxu0 0
        %2870 = vmatpush1.bf16.msra.mxu0 0
        %2871 = vmatprep.subr.bf16.mxu0 0
        %2872 = vmatpush1.bf16.msra.mxu0 0
        %2873 = vmatprep.subr.bf16.mxu0 0
        %2874 = vmatpush1.bf16.msra.mxu0 0
        %2875 = vmatprep.subr.bf16.mxu0 0
        %2876 = vmatpush1.bf16.msra.mxu0 0
        %2877 = vmatprep.subr.bf16.mxu0 0
        %2878 = vmatpush1.bf16.msra.mxu0 0
        %2879 = vmatprep.subr.bf16.mxu0 0
        %2880 = vmatpush1.bf16.msra.mxu0 0
        %2881 = vmatprep.mubr.bf16.mxu0 0
        %2882 = vmatmul.mubr.bf16.gmra.mrb[0].mxu0 %v2768
        %v2883 = vpop.f32.mrb[0].mxu0
        %v2884 = vadd.f32 0.0, %v2883
        %v2885 = vpop.f32.mrb[0].mxu0
        %v2886 = vpop.f32.mrb[0].mxu0
        %v2887 = vadd.f32 0.0, %v2886
        %v2888 = vpop.f32.mrb[0].mxu0
        %2889 = vmatprep.mubr.bf16.mxu0 0
        %2890 = vmatmul.mubr.bf16.gmra.mrb[0].mxu0 %v2769
        %v2891 = vpop.f32.mrb[0].mxu0
        %v2892 = vadd.f32 0.0, %v2891
        %v2893 = vpop.f32.mrb[0].mxu0
        %v2894 = vpop.f32.mrb[0].mxu0
        %v2895 = vadd.f32 0.0, %v2894
        %v2896 = vpop.f32.mrb[0].mxu0
        %2897 = vmatprep.mubr.bf16.mxu0 0
        %2898 = vmatmul.mubr.bf16.gmra.mrb[0].mxu0 %v2770
        %v2899 = vpop.f32.mrb[0].mxu0
        %v2900 = vadd.f32 0.0, %v2899
        %v2901 = vpop.f32.mrb[0].mxu0
        %v2902 = vpop.f32.mrb[0].mxu0
        %v2903 = vadd.f32 0.0, %v2902
        %v2904 = vpop.f32.mrb[0].mxu0
        %2905 = vmatprep.mubr.bf16.mxu0 0
        %2906 = vmatmul.mubr.bf16.gmra.mrb[0].mxu0 %v2771
        %v2907 = vpop.f32.mrb[0].mxu0
        %v2908 = vadd.f32 0.0, %v2907
        %v2909 = vpop.f32.mrb[0].mxu0
        %v2910 = vpop.f32.mrb[0].mxu0
        %v2911 = vadd.f32 0.0, %v2910
        %v2912 = vpop.f32.mrb[0].mxu0
        %2913 = vmatprep.mubr.bf16.mxu0 0
        %2914 = vmatmul.mubr.bf16.gmra.mrb[0].mxu0 %v2772
        %v2915 = vpop.f32.mrb[0].mxu0
        %v2916 = vadd.f32 0.0, %v2915
        %v2917 = vpop.f32.mrb[0].mxu0
        %v2918 = vpop.f32.mrb[0].mxu0
        %v2919 = vadd.f32 0.0, %v2918
        %v2920 = vpop.f32.mrb[0].mxu0
        %2921 = vmatprep.mubr.bf16.mxu0 0
        %2922 = vmatmul.mubr.bf16.gmra.mrb[0].mxu0 %v2773
        %v2923 = vpop.f32.mrb[0].mxu0
        %v2924 = vadd.f32 0.0, %v2923
        %v2925 = vpop.f32.mrb[0].mxu0
        %v2926 = vpop.f32.mrb[0].mxu0
        %v2927 = vadd.f32 0.0, %v2926
        %v2928 = vpop.f32.mrb[0].mxu0
        %2929 = vmatprep.mubr.bf16.mxu0 0
        %2930 = vmatmul.mubr.bf16.gmra.mrb[0].mxu0 %v2774
        %v2931 = vpop.f32.mrb[0].mxu0
        %v2932 = vadd.f32 0.0, %v2931
        %v2933 = vpop.f32.mrb[0].mxu0
        %v2934 = vpop.f32.mrb[0].mxu0
        %v2935 = vadd.f32 0.0, %v2934
        %v2936 = vpop.f32.mrb[0].mxu0
        %2937 = vmatprep.mubr.bf16.mxu0 0
        %2938 = vmatmul.mubr.bf16.gmra.mrb[0].mxu0 %v2775
        %v2939 = vpop.f32.mrb[0].mxu0
        %v2940 = vadd.f32 0.0, %v2939
        %v2941 = vpop.f32.mrb[0].mxu0
        %v2942 = vpop.f32.mrb[0].mxu0
        %v2943 = vadd.f32 0.0, %v2942
        %v2944 = vpop.f32.mrb[0].mxu0
        %2945 = vmatprep.mubr.bf16.mxu0 0
        %2946 = vmatmul.mubr.bf16.gmra.mrb[0].mxu0 %v2776
        %v2947 = vpop.f32.mrb[0].mxu0
        %v2948 = vadd.f32 0.0, %v2947
        %v2949 = vpop.f32.mrb[0].mxu0
        %v2950 = vpop.f32.mrb[0].mxu0
        %v2951 = vadd.f32 0.0, %v2950
        %v2952 = vpop.f32.mrb[0].mxu0
        %2953 = vmatprep.mubr.bf16.mxu0 0
        %2954 = vmatmul.mubr.bf16.gmra.mrb[0].mxu0 %v2777
        %v2955 = vpop.f32.mrb[0].mxu0
        %v2956 = vadd.f32 0.0, %v2955
        %v2957 = vpop.f32.mrb[0].mxu0
        %v2958 = vpop.f32.mrb[0].mxu0
        %v2959 = vadd.f32 0.0, %v2958
        %v2960 = vpop.f32.mrb[0].mxu0
        %2961 = vmatprep.mubr.bf16.mxu0 0
        %2962 = vmatmul.mubr.bf16.gmra.mrb[0].mxu0 %v2778
        %v2963 = vpop.f32.mrb[0].mxu0
        %v2964 = vadd.f32 0.0, %v2963
        %v2965 = vpop.f32.mrb[0].mxu0
        %v2966 = vpop.f32.mrb[0].mxu0
        %v2967 = vadd.f32 0.0, %v2966
        %v2968 = vpop.f32.mrb[0].mxu0
        %2969 = vmatprep.mubr.bf16.mxu0 0
        %2970 = vmatmul.mubr.bf16.gmra.mrb[0].mxu0 %v2779
        %v2971 = vpop.f32.mrb[0].mxu0
        %v2972 = vadd.f32 0.0, %v2971
        %v2973 = vpop.f32.mrb[0].mxu0
        %v2974 = vpop.f32.mrb[0].mxu0
        %v2975 = vadd.f32 0.0, %v2974
        %v2976 = vpop.f32.mrb[0].mxu0
        %2977 = vmatprep.mubr.bf16.mxu0 0
        %2978 = vmatmul.mubr.bf16.gmra.mrb[0].mxu0 %v2780
        %v2979 = vpop.f32.mrb[0].mxu0
        %v2980 = vadd.f32 0.0, %v2979
        %v2981 = vpop.f32.mrb[0].mxu0
        %v2982 = vpop.f32.mrb[0].mxu0
        %v2983 = vadd.f32 0.0, %v2982
        %v2984 = vpop.f32.mrb[0].mxu0
        %2985 = vmatprep.mubr.bf16.mxu0 0
        %2986 = vmatmul.mubr.bf16.gmra.mrb[0].mxu0 %v2781
        %v2987 = vpop.f32.mrb[0].mxu0
        %v2988 = vadd.f32 0.0, %v2987
        %v2989 = vpop.f32.mrb[0].mxu0
        %v2990 = vpop.f32.mrb[0].mxu0
        %v2991 = vadd.f32 0.0, %v2990
        %v2992 = vpop.f32.mrb[0].mxu0
        %2993 = vmatprep.mubr.bf16.mxu0 0
        %2994 = vmatmul.mubr.bf16.gmra.mrb[0].mxu0 %v2782
        %v2995 = vpop.f32.mrb[0].mxu0
        %v2996 = vadd.f32 0.0, %v2995
        %v2997 = vpop.f32.mrb[0].mxu0
        %v2998 = vpop.f32.mrb[0].mxu0
        %v2999 = vadd.f32 0.0, %v2998
        %v3000 = vpop.f32.mrb[0].mxu0
        %3001 = vmatprep.mubr.bf16.mxu0 0
        %3002 = vmatmul.mubr.bf16.gmra.mrb[0].mxu0 %v2783
        %v3003 = vpop.f32.mrb[0].mxu0
        %v3004 = vadd.f32 0.0, %v3003
        %v3005 = vpop.f32.mrb[0].mxu0
        %v3006 = vpop.f32.mrb[0].mxu0
        %v3007 = vadd.f32 0.0, %v3006
        %v3008 = vpop.f32.mrb[0].mxu0
        %3009 = vdwg.mxu0
        %v3010 = vadd.f32 %v2704, %v2884
        %v3011 = vadd.f32 %v2705, %v2887
        %v3012 = vadd.f32 %v2706, %v2892
        %v3013 = vadd.f32 %v2707, %v2895
        %v3014 = vadd.f32 %v2708, %v2900
        %v3015 = vadd.f32 %v2709, %v2903
        %v3016 = vadd.f32 %v2710, %v2908
        %v3017 = vadd.f32 %v2711, %v2911
        %v3018 = vadd.f32 %v2712, %v2916
        %v3019 = vadd.f32 %v2713, %v2919
        %v3020 = vadd.f32 %v2714, %v2924
        %v3021 = vadd.f32 %v2715, %v2927
        %v3022 = vadd.f32 %v2716, %v2932
        %v3023 = vadd.f32 %v2717, %v2935
        %v3024 = vadd.f32 %v2718, %v2940
        %v3025 = vadd.f32 %v2719, %v2943
        %v3026 = vadd.f32 %v2720, %v2948
        %v3027 = vadd.f32 %v2721, %v2951
        %v3028 = vadd.f32 %v2722, %v2956
        %v3029 = vadd.f32 %v2723, %v2959
        %v3030 = vadd.f32 %v2724, %v2964
        %v3031 = vadd.f32 %v2725, %v2967
        %v3032 = vadd.f32 %v2726, %v2972
        %v3033 = vadd.f32 %v2727, %v2975
        %v3034 = vadd.f32 %v2728, %v2980
        %v3035 = vadd.f32 %v2729, %v2983
        %v3036 = vadd.f32 %v2730, %v2988
        %v3037 = vadd.f32 %v2731, %v2991
        %v3038 = vadd.f32 %v2732, %v2996
        %v3039 = vadd.f32 %v2733, %v2999
        %v3040 = vadd.f32 %v2734, %v3004
        %v3041 = vadd.f32 %v2735, %v3007
        %v3042 = vpack.c.bf16 %v3011, %v3010
        %v3043 = vpack.c.bf16 %v3013, %v3012
        %v3044 = vpack.c.bf16 %v3015, %v3014
        %v3045 = vpack.c.bf16 %v3017, %v3016
        %v3046 = vpack.c.bf16 %v3019, %v3018
        %v3047 = vpack.c.bf16 %v3021, %v3020
        %v3048 = vpack.c.bf16 %v3023, %v3022
        %v3049 = vpack.c.bf16 %v3025, %v3024
        %v3050 = vpack.c.bf16 %v3027, %v3026
        %v3051 = vpack.c.bf16 %v3029, %v3028
        %v3052 = vpack.c.bf16 %v3031, %v3030
        %v3053 = vpack.c.bf16 %v3033, %v3032
        %v3054 = vpack.c.bf16 %v3035, %v3034
        %v3055 = vpack.c.bf16 %v3037, %v3036
        %v3056 = vpack.c.bf16 %v3039, %v3038
        %v3057 = vpack.c.bf16 %v3041, %v3040
        %v3074 = vunpack.c.l.b16 %v3042
        %v3075 = vunpack.c.h.b16 %v3042
        %v3076 = vunpack.c.l.b16 %v3043
        %v3077 = vunpack.c.h.b16 %v3043
        %v3078 = vunpack.c.l.b16 %v3044
        %v3079 = vunpack.c.h.b16 %v3044
        %v3080 = vunpack.c.l.b16 %v3045
        %v3081 = vunpack.c.h.b16 %v3045
        %v3082 = vunpack.c.l.b16 %v3046
        %v3083 = vunpack.c.h.b16 %v3046
        %v3084 = vunpack.c.l.b16 %v3047
        %v3085 = vunpack.c.h.b16 %v3047
        %v3086 = vunpack.c.l.b16 %v3048
        %v3087 = vunpack.c.h.b16 %v3048
        %v3088 = vunpack.c.l.b16 %v3049
        %v3089 = vunpack.c.h.b16 %v3049
        %v3090 = vunpack.c.l.b16 %v3050
        %v3091 = vunpack.c.h.b16 %v3050
        %v3092 = vunpack.c.l.b16 %v3051
        %v3093 = vunpack.c.h.b16 %v3051
        %v3094 = vunpack.c.l.b16 %v3052
        %v3095 = vunpack.c.h.b16 %v3052
        %v3096 = vunpack.c.l.b16 %v3053
        %v3097 = vunpack.c.h.b16 %v3053
        %v3098 = vunpack.c.l.b16 %v3054
        %v3099 = vunpack.c.h.b16 %v3054
        %v3100 = vunpack.c.l.b16 %v3055
        %v3101 = vunpack.c.h.b16 %v3055
        %v3102 = vunpack.c.l.b16 %v3056
        %v3103 = vunpack.c.h.b16 %v3056
        %v3104 = vunpack.c.l.b16 %v3057
        %v3105 = vunpack.c.h.b16 %v3057
        %v3106 = vpack.c.b16 %v3074, %v3074
        %v3107 = vpack.c.b16 %v3075, %v3075
        %v3108 = vpack.c.b16 %v3076, %v3076
        %v3109 = vpack.c.b16 %v3077, %v3077
        %v3110 = vpack.c.b16 %v3078, %v3078
        %v3111 = vpack.c.b16 %v3079, %v3079
        %v3112 = vpack.c.b16 %v3080, %v3080
        %v3113 = vpack.c.b16 %v3081, %v3081
        %v3114 = vpack.c.b16 %v3082, %v3082
        %v3115 = vpack.c.b16 %v3083, %v3083
        %v3116 = vpack.c.b16 %v3084, %v3084
        %v3117 = vpack.c.b16 %v3085, %v3085
        %v3118 = vpack.c.b16 %v3086, %v3086
        %v3119 = vpack.c.b16 %v3087, %v3087
        %v3120 = vpack.c.b16 %v3088, %v3088
        %v3121 = vpack.c.b16 %v3089, %v3089
        %v3122 = vpack.c.b16 %v3090, %v3090
        %v3123 = vpack.c.b16 %v3091, %v3091
        %v3124 = vpack.c.b16 %v3092, %v3092
        %v3125 = vpack.c.b16 %v3093, %v3093
        %v3126 = vpack.c.b16 %v3094, %v3094
        %v3127 = vpack.c.b16 %v3095, %v3095
        %v3128 = vpack.c.b16 %v3096, %v3096
        %v3129 = vpack.c.b16 %v3097, %v3097
        %v3130 = vpack.c.b16 %v3098, %v3098
        %v3131 = vpack.c.b16 %v3099, %v3099
        %v3132 = vpack.c.b16 %v3100, %v3100
        %v3133 = vpack.c.b16 %v3101, %v3101
        %v3134 = vpack.c.b16 %v3102, %v3102
        %v3135 = vpack.c.b16 %v3103, %v3103
        %v3136 = vpack.c.b16 %v3104, %v3104
        %v3137 = vpack.c.b16 %v3105, %v3105
        %3170 = vst [vmem:[%s207] sm:$0xf] %v3106
        %3171 = vst [vmem:[%s207 + $0x4] sm:$0xf] %v3107
        %3172 = vst [vmem:[%s207 + $0x8] sm:$0xf] %v3108
        %3173 = vst [vmem:[%s207 + $0xc] sm:$0xf] %v3109
        %3174 = vst [vmem:[%s207 + $0x10] sm:$0xf] %v3110
        %3175 = vst [vmem:[%s207 + $0x14] sm:$0xf] %v3111
        %3176 = vst [vmem:[%s207 + $0x18] sm:$0xf] %v3112
        %3177 = vst [vmem:[%s207 + $0x1c] sm:$0xf] %v3113
        %3178 = vst [vmem:[%s207 + $0x20] sm:$0xf] %v3114
        %3179 = vst [vmem:[%s207 + $0x24] sm:$0xf] %v3115
        %3180 = vst [vmem:[%s207 + $0x28] sm:$0xf] %v3116
        %3181 = vst [vmem:[%s207 + $0x2c] sm:$0xf] %v3117
        %3182 = vst [vmem:[%s207 + $0x30] sm:$0xf] %v3118
        %3183 = vst [vmem:[%s207 + $0x34] sm:$0xf] %v3119
        %3184 = vst [vmem:[%s207 + $0x38] sm:$0xf] %v3120
        %3185 = vst [vmem:[%s207 + $0x3c] sm:$0xf] %v3121
        %3186 = vst [vmem:[%s207 + $0x40] sm:$0xf] %v3122
        %3187 = vst [vmem:[%s207 + $0x44] sm:$0xf] %v3123
        %3188 = vst [vmem:[%s207 + $0x48] sm:$0xf] %v3124
        %3189 = vst [vmem:[%s207 + $0x4c] sm:$0xf] %v3125
        %3190 = vst [vmem:[%s207 + $0x50] sm:$0xf] %v3126
        %3191 = vst [vmem:[%s207 + $0x54] sm:$0xf] %v3127
        %3192 = vst [vmem:[%s207 + $0x58] sm:$0xf] %v3128
        %3193 = vst [vmem:[%s207 + $0x5c] sm:$0xf] %v3129
        %3194 = vst [vmem:[%s207 + $0x60] sm:$0xf] %v3130
        %3195 = vst [vmem:[%s207 + $0x64] sm:$0xf] %v3131
        %3196 = vst [vmem:[%s207 + $0x68] sm:$0xf] %v3132
        %3197 = vst [vmem:[%s207 + $0x6c] sm:$0xf] %v3133
        %3198 = vst [vmem:[%s207 + $0x70] sm:$0xf] %v3134
        %3199 = vst [vmem:[%s207 + $0x74] sm:$0xf] %v3135
        %3200 = vst [vmem:[%s207 + $0x78] sm:$0xf] %v3136
        %3201 = vst [vmem:[%s207 + $0x7c] sm:$0xf] %v3137
        %v3202 = vadd.f32 %v3010, %v3011
        %v3203 = vadd.f32 %v3202, %v3012
        %v3204 = vadd.f32 %v3203, %v3013
        %v3205 = vadd.f32 %v3204, %v3014
        %v3206 = vadd.f32 %v3205, %v3015
        %v3207 = vadd.f32 %v3206, %v3016
        %v3208 = vadd.f32 %v3207, %v3017
        %v3209 = vadd.f32 %v3208, %v3018
        %v3210 = vadd.f32 %v3209, %v3019
        %v3211 = vadd.f32 %v3210, %v3020
        %v3212 = vadd.f32 %v3211, %v3021
        %v3213 = vadd.f32 %v3212, %v3022
        %v3214 = vadd.f32 %v3213, %v3023
        %v3215 = vadd.f32 %v3214, %v3024
        %v3216 = vadd.f32 %v3215, %v3025
        %v3217 = vadd.f32 %v3216, %v3026
        %v3218 = vadd.f32 %v3217, %v3027
        %v3219 = vadd.f32 %v3218, %v3028
        %v3220 = vadd.f32 %v3219, %v3029
        %v3221 = vadd.f32 %v3220, %v3030
        %v3222 = vadd.f32 %v3221, %v3031
        %v3223 = vadd.f32 %v3222, %v3032
        %v3224 = vadd.f32 %v3223, %v3033
        %v3225 = vadd.f32 %v3224, %v3034
        %v3226 = vadd.f32 %v3225, %v3035
        %v3227 = vadd.f32 %v3226, %v3036
        %v3228 = vadd.f32 %v3227, %v3037
        %v3229 = vadd.f32 %v3228, %v3038
        %v3230 = vadd.f32 %v3229, %v3039
        %v3231 = vadd.f32 %v3230, %v3040
        %v3232 = vadd.f32 %v3231, %v3041
        %v3233 = vrot.slane %v3232, 4
        %v3234 = vadd.f32 %v3232, %v3233
        %v3235 = vrot.slane %v3234, 2
        %v3236 = vadd.f32 %v3234, %v3235
        %v3237 = vrot.slane %v3236, 1
        %v3238 = vadd.f32 %v3236, %v3237
        %3239 = vst [vmem:[%s214] sm:$0x1] %v3238
        %v3240 = vmul.f32 %v3010, %v3010
        %v3241 = vmul.f32 %v3011, %v3011
        %v3242 = vmul.f32 %v3012, %v3012
        %v3243 = vmul.f32 %v3013, %v3013
        %v3244 = vmul.f32 %v3014, %v3014
        %v3245 = vmul.f32 %v3015, %v3015
        %v3246 = vmul.f32 %v3016, %v3016
        %v3247 = vmul.f32 %v3017, %v3017
        %v3248 = vmul.f32 %v3018, %v3018
        %v3249 = vmul.f32 %v3019, %v3019
        %v3250 = vmul.f32 %v3020, %v3020
        %v3251 = vmul.f32 %v3021, %v3021
        %v3252 = vmul.f32 %v3022, %v3022
        %v3253 = vmul.f32 %v3023, %v3023
        %v3254 = vmul.f32 %v3024, %v3024
        %v3255 = vmul.f32 %v3025, %v3025
        %v3256 = vmul.f32 %v3026, %v3026
        %v3257 = vmul.f32 %v3027, %v3027
        %v3258 = vmul.f32 %v3028, %v3028
        %v3259 = vmul.f32 %v3029, %v3029
        %v3260 = vmul.f32 %v3030, %v3030
        %v3261 = vmul.f32 %v3031, %v3031
        %v3262 = vmul.f32 %v3032, %v3032
        %v3263 = vmul.f32 %v3033, %v3033
        %v3264 = vmul.f32 %v3034, %v3034
        %v3265 = vmul.f32 %v3035, %v3035
        %v3266 = vmul.f32 %v3036, %v3036
        %v3267 = vmul.f32 %v3037, %v3037
        %v3268 = vmul.f32 %v3038, %v3038
        %v3269 = vmul.f32 %v3039, %v3039
        %v3270 = vmul.f32 %v3040, %v3040
        %v3271 = vmul.f32 %v3041, %v3041
        %v3272 = vadd.f32 %v3240, %v3241
        %v3273 = vadd.f32 %v3272, %v3242
        %v3274 = vadd.f32 %v3273, %v3243
        %v3275 = vadd.f32 %v3274, %v3244
        %v3276 = vadd.f32 %v3275, %v3245
        %v3277 = vadd.f32 %v3276, %v3246
        %v3278 = vadd.f32 %v3277, %v3247
        %v3279 = vadd.f32 %v3278, %v3248
        %v3280 = vadd.f32 %v3279, %v3249
        %v3281 = vadd.f32 %v3280, %v3250
        %v3282 = vadd.f32 %v3281, %v3251
        %v3283 = vadd.f32 %v3282, %v3252
        %v3284 = vadd.f32 %v3283, %v3253
        %v3285 = vadd.f32 %v3284, %v3254
        %v3286 = vadd.f32 %v3285, %v3255
        %v3287 = vadd.f32 %v3286, %v3256
        %v3288 = vadd.f32 %v3287, %v3257
        %v3289 = vadd.f32 %v3288, %v3258
        %v3290 = vadd.f32 %v3289, %v3259
        %v3291 = vadd.f32 %v3290, %v3260
        %v3292 = vadd.f32 %v3291, %v3261
        %v3293 = vadd.f32 %v3292, %v3262
        %v3294 = vadd.f32 %v3293, %v3263
        %v3295 = vadd.f32 %v3294, %v3264
        %v3296 = vadd.f32 %v3295, %v3265
        %v3297 = vadd.f32 %v3296, %v3266
        %v3298 = vadd.f32 %v3297, %v3267
        %v3299 = vadd.f32 %v3298, %v3268
        %v3300 = vadd.f32 %v3299, %v3269
        %v3301 = vadd.f32 %v3300, %v3270
        %v3302 = vadd.f32 %v3301, %v3271
        %v3303 = vrot.slane %v3302, 4
        %v3304 = vadd.f32 %v3302, %v3303
        %v3305 = vrot.slane %v3304, 2
        %v3306 = vadd.f32 %v3304, %v3305
        %v3307 = vrot.slane %v3306, 1
        %v3308 = vadd.f32 %v3306, %v3307
        %3309 = vst [vmem:[%s214 + $0x1] sm:$0x1] %v3308
        %s3310 = sand.u32 %s80, 1
        %s3311 = scalar_lea.sflag [#allocation5], %s3310
        %s3312 = sand.u32 %s80, 1
        %s3313 = smul.addr %s3312, 128
        %s3314 = scalar_lea.vmem [#allocation8], %s3313
        %s3315 = sand.u32 %s106, 1
        %s3316 = scalar_lea.sflag [#allocation10], %s3315
        %s3317 = sand.u32 %s106, 1
        %s3318 = smul.addr %s3317, 2
        %s3319 = scalar_lea.vmem [#allocation9], %s3318
        // Predicated region
        $region37: #{tpu_custom_call.1} parent=27 // pred_check
          %p3320 = pneg %p90
        $region38: #{tpu_custom_call.1} parent=27 // pred_check_branch
          %3322 = sbr.rel (%p3320) target = $region40
        $region39: #{tpu_custom_call.1} parent=27 // pred_region
          %s3324 = ssub.s32 2048, 2048
          %3325 = vsyncadd %s3311, %s3324
          %s3326 = smul.addr %s25, 32
          %s3327 = smul.addr %s3326, 64
          %s3328 = scalar_lea.hbm %s2, %s3327
          %s3329 = sshll.u32 %s3314, 4
          %s3330 = int_to_ptr.vmem [resolvable:$true] %s3329
          %3335 = dma.vmem_to_hbm [thread:$0]  %s3330, 2048, %s3328, %s3311, 64, 64, 4
        $region40: #{tpu_custom_call.1} parent=27 // pred_fallthru
          _
        // Predicated region
        $region41: #{tpu_custom_call.1} parent=27 // pred_check
          %p3336 = pneg %p116
        $region42: #{tpu_custom_call.1} parent=27 // pred_check_branch
          %3338 = sbr.rel (%p3336) target = $region44
        $region43: #{tpu_custom_call.1} parent=27 // pred_region
          %s3340 = ssub.s32 32, 32
          %3341 = vsyncadd %s3316, %s3340
          %s3342 = smul.addr %s25, 32
          %s3343 = scalar_lea.hbm %s3, %s3342
          %s3345 = sshll.u32 %s3319, 4
          %s3346 = int_to_ptr.vmem [resolvable:$true] %s3345
          %3348 = dma.vmem_to_hbm [thread:$0]  %s3346, 32, %s3343, %s3316
        $region44: #{tpu_custom_call.1} parent=27 // pred_fallthru
          _
      $region28: #{tpu_custom_call.1} parent=5 // pred_fallthru
        _
      %p3349 = scmp.le.s32.totalorder 2, %s20
      // Predicated region
      $region45: #{tpu_custom_call.1} parent=5 // pred_check
        %p3350 = pneg %p3349
      $region46: #{tpu_custom_call.1} parent=5 // pred_check_branch
        %3352 = sbr.rel (%p3350) target = $region48
      $region47: #{tpu_custom_call.1} parent=5 // pred_region
        %s3353 = ssub.s32 %s20, 2
        // Predicated region
        $region49: #{tpu_custom_call.1} parent=47 // pred_check
          %p3354 = pneg %p96
        $region50: #{tpu_custom_call.1} parent=47 // pred_check_branch
          %3356 = sbr.rel (%p3354) target = $region52
        $region51: #{tpu_custom_call.1} parent=47 // pred_region
          %s3357 = sand.u32 %s81, 1
          %s3358 = scalar_lea.sflag [#allocation5], %s3357
          %s3359 = sand.u32 %s81, 1
          %s3360 = smul.addr %s3359, 128
          %s3361 = scalar_lea.vmem [#allocation8], %s3360
          %3362 = dma.done %s3358, 2048
        $region52: #{tpu_custom_call.1} parent=47 // pred_fallthru
          _
        // Predicated region
        $region53: #{tpu_custom_call.1} parent=47 // pred_check
          %p3363 = pneg %p122
        $region54: #{tpu_custom_call.1} parent=47 // pred_check_branch
          %3365 = sbr.rel (%p3363) target = $region56
        $region55: #{tpu_custom_call.1} parent=47 // pred_region
          %s3366 = sand.u32 %s107, 1
          %s3367 = scalar_lea.sflag [#allocation10], %s3366
          %s3368 = sand.u32 %s107, 1
          %s3369 = smul.addr %s3368, 2
          %s3370 = scalar_lea.vmem [#allocation9], %s3369
          %3371 = dma.done %s3367, 32
        $region56: #{tpu_custom_call.1} parent=47 // pred_fallthru
          _
      $region48: #{tpu_custom_call.1} parent=5 // pred_fallthru
        _
    $region6: #{tpu_custom_call.1} parent=1 // loop_footer
      %s24 = sadd.s32 1, %s20
    $region7: #{tpu_custom_call.1} parent=1 // loop_footer_branch
      %19 = sbr.rel target = $region3
    $region8: #{tpu_custom_call.1} parent=1 // loop_exit
      _
    %3372 = vsyncpa [#allocation4], 1
    %s3373 = scalar_lea.sflag [#allocation4], 1
    %3374 = vsyncpa %s3373, 1
    %3375 = vsyncpa [#allocation7], 1
    %3376 = vsyncpa [#allocation5], 1
    %s3377 = scalar_lea.sflag [#allocation5], 1
    %3378 = vsyncpa %s3377, 1
    %3379 = vsyncpa [#allocation10], 1
    %s3380 = scalar_lea.sflag [#allocation10], 1
    %3381 = vsyncpa %s3380, 1

</llo_original>
